<compile_context>
chip_gen: v5e
topology: v5e:2x2
jax: 0.10.0
libtpu: 0.0.40
codegen_flags: <defaults>
</compile_context>

<pallas_src>
import functools

import jax
import jax.numpy as jnp
from jax import lax
from jax.experimental import pallas as pl
from jax.experimental.pallas import tpu as pltpu


# ---------------------------------------------------------------------------
# Host-side weight expansion:
# PyTorch ConvTranspose2d(3,1,1) weight (Cin, Cout, 3, 3)  ->  im2col matrix
# (36*Cin, 4*Cout) of the equivalent 3x3 conv in the 2x2 space-to-depth
# domain.  s2d channel order: (parity_h*2 + parity_w)*C + c.  Emitted as bf16
# (MXU-native operand dtype); accumulation stays f32 in the kernel.
# ---------------------------------------------------------------------------
def _s2d_weight(wT):
    Cin, Cout = wT.shape[0], wT.shape[1]
    # plain-conv kernel: A[kh, kw, ci, co] = wT[ci, co, 2-kh, 2-kw]
    A = jnp.transpose(jnp.flip(wT, (2, 3)), (2, 3, 0, 1)).astype(jnp.float32)
    rows = []
    for ti in range(3):              # s2d-domain spatial taps (offset ti-1)
        for tj in range(3):
            blk = jnp.zeros((2, 2, Cin, 2, 2, Cout), jnp.float32)
            for p in range(2):       # input parity (row, col)
                for q in range(2):
                    for r in range(2):   # output parity (row, col)
                        for s in range(2):
                            kh = 2 * ti + p - r - 1
                            kw = 2 * tj + q - s - 1
                            if 0 <= kh < 3 and 0 <= kw < 3:
                                blk = blk.at[p, q, :, r, s, :].set(A[kh, kw])
            rows.append(blk.reshape(4 * Cin, 4 * Cout))
    return jnp.concatenate(rows, axis=0).astype(jnp.bfloat16)   # (36*Cin, 4*Cout)


# ---------------------------------------------------------------------------
# Halo-only zeroing of a padded activation scratch.  The interior
# (rows 1..Hp, cols lpad..lpad+Wp-1) is fully overwritten afterwards and the
# left-pad columns 0..lpad-2 are never read by the im2col slices, so only the
# genuinely-read border strips need zeros.
# ---------------------------------------------------------------------------
def _zero_halo(xp, Hp, Wp, lpad):
    N, C = xp.shape[0], xp.shape[-1]
    zrow = jnp.zeros((N, 1, Wp + 2, C), xp.dtype)
    xp[:, 0:1, lpad - 1:lpad + Wp + 1, :] = zrow                 # top halo row
    xp[:, Hp + 1:Hp + 2, lpad - 1:lpad + Wp + 1, :] = zrow       # bottom halo row
    zcol = jnp.zeros((N, Hp, 1, C), xp.dtype)
    xp[:, 1:Hp + 1, lpad - 1:lpad, :] = zcol                     # left halo col
    xp[:, 1:Hp + 1, lpad + Wp:lpad + Wp + 1, :] = zcol           # right halo col


# ---------------------------------------------------------------------------
# Fused decoder kernel: unpool + all ConvTBlocks, everything VMEM-resident.
# refs = [x, idx, (W, gamma, beta) * nblk, out, scratch_0..scratch_{n-1}]
# ---------------------------------------------------------------------------
def _decoder_kernel(*refs, nblk, lpad, eps=1e-5):
    x_ref, idx_ref = refs[0], refs[1]
    prm = refs[2:2 + 3 * nblk]
    o_ref = refs[2 + 3 * nblk]
    xps = refs[3 + 3 * nblk:]

    N, Hp, Wp, _ = x_ref.shape
    W = 2 * Wp
    M = N * Hp * Wp

    # ---- max_unpool2d(2,2): 4 parity-plane selects + one lane concat -------
    # TODO(synk): this assumes genuine max_pool2d(2,2) indices (winner inside
    #             its own 2x2 window); arbitrary scatter indices are not
    #             supported.
    x = x_ref[...]
    idx = idx_ref[...]
    ii = lax.broadcasted_iota(jnp.int32, x.shape, 1)       # pooled row
    jj = lax.broadcasted_iota(jnp.int32, x.shape, 2)       # pooled col
    base = 2 * ii * W + 2 * jj                             # flat idx of (2i,2j)
    quads = [jnp.where(idx == base + (p * W + q), x, 0.0)
             for p in (0, 1) for q in (0, 1)]
    u = jnp.concatenate(quads, axis=-1)                    # (N, Hp, Wp, 4*Cin)

    xp = xps[0]
    _zero_halo(xp, Hp, Wp, lpad)                           # halo only
    xp[:, 1:Hp + 1, lpad:lpad + Wp, :] = u                 # tile-aligned store

    # ---- ConvTBlocks: bf16 im2col matmul + folded BN(train) + ReLU ----------
    for b in range(nblk):
        w_ref, g_ref, be_ref = prm[3 * b:3 * (b + 1)]
        xp = xps[b]
        C4in = xp.shape[-1]
        C4out = w_ref.shape[-1]
        Cout = C4out // 4

        # im2col: 9 shifted windows, cast to bf16, concatenated on the lane
        # axis -> one MXU matmul with f32 accumulation (K = 36*Cin).
        # TODO(synk): confirm via bundle dump whether the slice/concat chain
        #             materializes copies on the critical path; if so switch to
        #             3 accumulated per-ti matmuls / lane-dense layout.
        patches = [
            xp[:, ti:ti + Hp, lpad - 1 + tj:lpad - 1 + tj + Wp, :]
            .reshape(M, C4in).astype(jnp.bfloat16)
            for ti in range(3) for tj in range(3)
        ]
        pmat = jnp.concatenate(patches, axis=-1)               # (M, 36*Cin) bf16
        acc = jnp.dot(pmat, w_ref[...],
                      preferred_element_type=jnp.float32)      # (M, 4*Cout) f32
        # NOTE: the ConvTranspose bias is intentionally omitted -- training-
        # mode BatchNorm subtracts the batch mean, so the bias cancels exactly.

        # BatchNorm2d, training-mode biased batch stats, single pass, folded
        # into one scale/shift applied to the big tensor.
        s1 = jnp.sum(acc, axis=0, keepdims=True)               # (1, 4*Cout)
        s2 = jnp.sum(acc * acc, axis=0, keepdims=True)

        def _group4(v):  # sum the 4 parity planes of each original channel
            return (v[:, 0:Cout] + v[:, Cout:2 * Cout]
                    + v[:, 2 * Cout:3 * Cout] + v[:, 3 * Cout:4 * Cout])

        inv_cnt = 1.0 / (4.0 * M)                              # 1 / (N*H*W)
        mean_c = _group4(s1) * inv_cnt                         # (1, Cout)
        var_c = jnp.maximum(_group4(s2) * inv_cnt - mean_c * mean_c, 0.0)
        inv_c = lax.rsqrt(var_c + eps)
        sc_c = inv_c * g_ref[...]                              # scale (1, Cout)
        sh_c = be_ref[...] - mean_c * sc_c                     # shift (1, Cout)
        sc = jnp.concatenate([sc_c] * 4, axis=-1)              # back to 4*Cout
        sh = jnp.concatenate([sh_c] * 4, axis=-1)

        y = jnp.maximum(acc * sc + sh, 0.0)                    # (M, 4*Cout)

        if b + 1 < nblk:
            nxt = xps[b + 1]
            _zero_halo(nxt, Hp, Wp, lpad)
            nxt[:, 1:Hp + 1, lpad:lpad + Wp, :] = y.reshape(N, Hp, Wp, C4out)
        else:
            # TODO(synk): for scaled-up shapes present a lane-dense output
            #             slab (last dim multiple of 128) to avoid vst.msk.
            o_ref[...] = y.astype(o_ref.dtype)


# ---------------------------------------------------------------------------
# Decoder.forward wrapper (NCHW in / NCHW out, PyTorch convention)
# ---------------------------------------------------------------------------
def decoder_forward(x_nchw, idx_nchw, dim_hw, params):
    """x_nchw: (N, Cin, Hp, Wp); idx_nchw: same shape int (PyTorch h*W+w flat
    indices from max_pool2d(2,2)); dim_hw: (H, W) == (2*Hp, 2*Wp).
    params: list of (convT_weight (Cin,Cout,3,3), convT_bias (Cout,),
                     bn_gamma (Cout,), bn_beta (Cout,)) per ConvTBlock."""
    N, Cin, Hp, Wp = x_nchw.shape
    H, W = dim_hw
    # TODO(synk): only output_size == (2*Hp, 2*Wp) and Wp % 8 == 0 supported.
    assert (H, W) == (2 * Hp, 2 * Wp)
    assert Wp % 8 == 0

    x = jnp.transpose(x_nchw, (0, 2, 3, 1)).astype(jnp.float32)
    idx = jnp.transpose(idx_nchw, (0, 2, 3, 1)).astype(jnp.int32)

    nblk = len(params)
    flat_inputs = [x, idx]
    cins = [Cin]
    couts = []
    for (wT, _bias, g, be) in params:      # ConvT bias dropped (BN absorbs it)
        co = wT.shape[1]
        couts.append(co)
        cins.append(co)
        flat_inputs += [
            _s2d_weight(wT),                         # (36*ci, 4*co) bf16
            g.astype(jnp.float32)[None, :],          # (1, co)
            be.astype(jnp.float32)[None, :],         # (1, co)
        ]

    # Padded activation scratch per block (s2d domain).  Interior starts at a
    # sublane-tile boundary (column LPAD) so interior stores are tile-aligned;
    # the live halo columns are LPAD-1 and LPAD+Wp.
    LPAD = 8
    scratch = [pltpu.VMEM((N, Hp + 2, LPAD + Wp + 1, 4 * c), jnp.float32)
               for c in cins[:-1]]

    vmem = pltpu.MemorySpace.VMEM
    M = N * Hp * Wp
    out_s2d = pl.pallas_call(
        functools.partial(_decoder_kernel, nblk=nblk, lpad=LPAD),
        out_shape=jax.ShapeDtypeStruct((M, 4 * couts[-1]), jnp.float32),
        in_specs=[pl.BlockSpec(memory_space=vmem)] * len(flat_inputs),
        out_specs=pl.BlockSpec(memory_space=vmem),
        scratch_shapes=scratch,
        compiler_params=pltpu.CompilerParams(vmem_limit_bytes=32 * 1024 * 1024),
    )(*flat_inputs)

    # depth-to-space (2x2) + NHWC->NCHW: one cheap XLA epilogue on ~8 KiB.
    out = out_s2d.reshape(N, Hp, Wp, 2, 2, couts[-1])
    out = jnp.transpose(out, (0, 5, 1, 3, 2, 4)).reshape(N, couts[-1], H, W)
    return out


# ---------------------------------------------------------------------------
# Pure-JAX reference (for the correctness check).  Uses the same precision
# policy as the kernel: conv operands rounded to bf16, accumulation and all
# BatchNorm / elementwise math in f32.  Keeps the ConvT bias (faithful to
# PyTorch) -- training-mode BN cancels it, which validates dropping it in the
# kernel.
# ---------------------------------------------------------------------------
def ref_decoder(x_nchw, idx_nchw, dim_hw, params):
    N, C, Hp, Wp = x_nchw.shape
    H, W = dim_hw
    flat = jnp.zeros((N, C, H * W), jnp.float32)
    n_i = jnp.arange(N)[:, None, None]
    c_i = jnp.arange(C)[None, :, None]
    flat = flat.at[n_i, c_i, idx_nchw.reshape(N, C, -1)].set(x_nchw.reshape(N, C, -1))
    y = flat.reshape(N, C, H, W)
    for (wT, b, g, be) in params:
        w_oihw = jnp.transpose(jnp.flip(wT, axis=(2, 3)), (1, 0, 2, 3))
        y_in = y.astype(jnp.bfloat16).astype(jnp.float32)
        w_in = w_oihw.astype(jnp.bfloat16).astype(jnp.float32)
        y = lax.conv_general_dilated(
            y_in, w_in, window_strides=(1, 1), padding="SAME",
            dimension_numbers=("NCHW", "OIHW", "NCHW"),
            precision=lax.Precision.HIGHEST)
        y = y + b[None, :, None, None]
        mean = jnp.mean(y, axis=(0, 2, 3), keepdims=True)
        var = jnp.mean((y - mean) ** 2, axis=(0, 2, 3), keepdims=True)
        y = (y - mean) * lax.rsqrt(var + 1e-5) * g[None, :, None, None] + be[None, :, None, None]
        y = jnp.maximum(y, 0.0)
    return y


if __name__ == "__main__":
    key = jax.random.PRNGKey(0)
    N, Cin, Hp, Wp = 2, 4, 8, 8        # decoder input (post-encoder, pre-unpool)
    out_channels = [8, 4]
    H, W = 2 * Hp, 2 * Wp              # enc_cache['dim']

    k1, k2, k3, kp = jax.random.split(key, 4)
    x = jax.random.normal(k1, (N, Cin, Hp, Wp), jnp.float32)
    # valid max-pool(2,2) indices: one winner per 2x2 window, flat h*W + w
    dh = jax.random.randint(k2, (N, Cin, Hp, Wp), 0, 2)
    dw = jax.random.randint(k3, (N, Cin, Hp, Wp), 0, 2)
    ph = jnp.arange(Hp)[None, None, :, None]
    pw = jnp.arange(Wp)[None, None, None, :]
    idx = ((2 * ph + dh) * W + (2 * pw + dw)).astype(jnp.int32)

    params = []
    cin = Cin
    for cout in out_channels:
        kp, kw_, kb_ = jax.random.split(kp, 3)
        wT = jax.random.normal(kw_, (cin, cout, 3, 3), jnp.float32) * 0.1
        b = jax.random.normal(kb_, (cout,), jnp.float32) * 0.1
        params.append((wT, b, jnp.ones((cout,), jnp.float32), jnp.zeros((cout,), jnp.float32)))
        cin = cout

    out = decoder_forward(x, idx, (H, W), params)
    out = jax.block_until_ready(out)

    ref = ref_decoder(x, idx, (H, W), params)
    assert out.shape == (N, out_channels[-1], H, W)
    assert bool(jnp.allclose(out, ref, rtol=1e-2, atol=1e-2)), "kernel/reference mismatch"
    print("KERNEL_OK")
</pallas_src>

<mosaic_0001>
module attributes {stable_mosaic.version = 11 : i64} {
  func.func @_decoder_kernel(%arg0: memref<2x8x8x4xf32, #tpu.memory_space<vmem>>, %arg1: memref<2x8x8x4xi32, #tpu.memory_space<vmem>>, %arg2: memref<144x32xbf16, #tpu.memory_space<vmem>>, %arg3: memref<1x8xf32, #tpu.memory_space<vmem>>, %arg4: memref<1x8xf32, #tpu.memory_space<vmem>>, %arg5: memref<288x16xbf16, #tpu.memory_space<vmem>>, %arg6: memref<1x4xf32, #tpu.memory_space<vmem>>, %arg7: memref<1x4xf32, #tpu.memory_space<vmem>>, %arg8: memref<128x16xf32, #tpu.memory_space<vmem>>, %arg9: memref<2x10x17x16xf32, #tpu.memory_space<vmem>>, %arg10: memref<2x10x17x32xf32, #tpu.memory_space<vmem>>) attributes {dimension_semantics = [], scalar_prefetch = 0 : i64, scratch_operands = 2 : i64, tpu.core_type = #tpu.core_type<tc>} {
    %c0 = arith.constant 0 : index
    %c0_0 = arith.constant 0 : index
    %c0_1 = arith.constant 0 : index
    %c0_2 = arith.constant 0 : index
    %0 = vector.load %arg0[%c0, %c0_0, %c0_1, %c0_2] : memref<2x8x8x4xf32, #tpu.memory_space<vmem>>, vector<2x8x8x4xf32>
    %c0_3 = arith.constant 0 : index
    %c0_4 = arith.constant 0 : index
    %c0_5 = arith.constant 0 : index
    %c0_6 = arith.constant 0 : index
    %1 = vector.load %arg1[%c0_3, %c0_4, %c0_5, %c0_6] : memref<2x8x8x4xi32, #tpu.memory_space<vmem>>, vector<2x8x8x4xi32>
    %2 = tpu.iota {dimensions = array<i32: 1>} : vector<2x8x8x4xi32>
    %3 = tpu.iota {dimensions = array<i32: 2>} : vector<2x8x8x4xi32>
    %c2_i32 = arith.constant 2 : i32
    %4 = vector.broadcast %c2_i32 : i32 to vector<2x8x8x4xi32>
    %5 = arith.muli %4, %2 : vector<2x8x8x4xi32>
    %c16_i32 = arith.constant 16 : i32
    %6 = vector.broadcast %c16_i32 : i32 to vector<2x8x8x4xi32>
    %7 = arith.muli %5, %6 : vector<2x8x8x4xi32>
    %c2_i32_7 = arith.constant 2 : i32
    %8 = vector.broadcast %c2_i32_7 : i32 to vector<2x8x8x4xi32>
    %9 = arith.muli %8, %3 : vector<2x8x8x4xi32>
    %10 = arith.addi %7, %9 : vector<2x8x8x4xi32>
    %c0_i32 = arith.constant 0 : i32
    %11 = vector.broadcast %c0_i32 : i32 to vector<2x8x8x4xi32>
    %12 = arith.addi %10, %11 : vector<2x8x8x4xi32>
    %13 = arith.cmpi eq, %1, %12 : vector<2x8x8x4xi32>
    %cst = arith.constant 0.000000e+00 : f32
    %14 = vector.broadcast %cst : f32 to vector<2x8x8x4xf32>
    %15 = arith.select %13, %0, %14 : vector<2x8x8x4xi1>, vector<2x8x8x4xf32>
    %c1_i32 = arith.constant 1 : i32
    %16 = vector.broadcast %c1_i32 : i32 to vector<2x8x8x4xi32>
    %17 = arith.addi %10, %16 : vector<2x8x8x4xi32>
    %18 = arith.cmpi eq, %1, %17 : vector<2x8x8x4xi32>
    %cst_8 = arith.constant 0.000000e+00 : f32
    %19 = vector.broadcast %cst_8 : f32 to vector<2x8x8x4xf32>
    %20 = arith.select %18, %0, %19 : vector<2x8x8x4xi1>, vector<2x8x8x4xf32>
    %c16_i32_9 = arith.constant 16 : i32
    %21 = vector.broadcast %c16_i32_9 : i32 to vector<2x8x8x4xi32>
    %22 = arith.addi %10, %21 : vector<2x8x8x4xi32>
    %23 = arith.cmpi eq, %1, %22 : vector<2x8x8x4xi32>
    %cst_10 = arith.constant 0.000000e+00 : f32
    %24 = vector.broadcast %cst_10 : f32 to vector<2x8x8x4xf32>
    %25 = arith.select %23, %0, %24 : vector<2x8x8x4xi1>, vector<2x8x8x4xf32>
    %c17_i32 = arith.constant 17 : i32
    %26 = vector.broadcast %c17_i32 : i32 to vector<2x8x8x4xi32>
    %27 = arith.addi %10, %26 : vector<2x8x8x4xi32>
    %28 = arith.cmpi eq, %1, %27 : vector<2x8x8x4xi32>
    %cst_11 = arith.constant 0.000000e+00 : f32
    %29 = vector.broadcast %cst_11 : f32 to vector<2x8x8x4xf32>
    %30 = arith.select %28, %0, %29 : vector<2x8x8x4xi1>, vector<2x8x8x4xf32>
    %31 = tpu.concatenate %15, %20, %25, %30 in 3 : vector<2x8x8x4xf32>, vector<2x8x8x4xf32>, vector<2x8x8x4xf32>, vector<2x8x8x4xf32> -> vector<2x8x8x16xf32>
    %cst_12 = arith.constant 0.000000e+00 : f32
    %32 = vector.broadcast %cst_12 : f32 to vector<2x1x10x16xf32>
    %c0_13 = arith.constant 0 : index
    %c0_14 = arith.constant 0 : index
    %c7 = arith.constant 7 : index
    %c0_15 = arith.constant 0 : index
    %33 = vector.load %arg9[%c0_13, %c0_14, %c7, %c0_15] : memref<2x10x17x16xf32, #tpu.memory_space<vmem>>, vector<2x1x10x16xf32>
    tpu.vector_store %arg9[%c0_13, %c0_14, %c7, %c0_15], %32 {strides = array<i32>} : memref<2x10x17x16xf32, #tpu.memory_space<vmem>>, vector<2x1x10x16xf32>,
    %c0_16 = arith.constant 0 : index
    %c9 = arith.constant 9 : index
    %c7_17 = arith.constant 7 : index
    %c0_18 = arith.constant 0 : index
    %34 = vector.load %arg9[%c0_16, %c9, %c7_17, %c0_18] : memref<2x10x17x16xf32, #tpu.memory_space<vmem>>, vector<2x1x10x16xf32>
    tpu.vector_store %arg9[%c0_16, %c9, %c7_17, %c0_18], %32 {strides = array<i32>} : memref<2x10x17x16xf32, #tpu.memory_space<vmem>>, vector<2x1x10x16xf32>,
    %cst_19 = arith.constant 0.000000e+00 : f32
    %35 = vector.broadcast %cst_19 : f32 to vector<2x8x1x16xf32>
    %c0_20 = arith.constant 0 : index
    %c1 = arith.constant 1 : index
    %c7_21 = arith.constant 7 : index
    %c0_22 = arith.constant 0 : index
    %36 = vector.load %arg9[%c0_20, %c1, %c7_21, %c0_22] : memref<2x10x17x16xf32, #tpu.memory_space<vmem>>, vector<2x8x1x16xf32>
    tpu.vector_store %arg9[%c0_20, %c1, %c7_21, %c0_22], %35 {strides = array<i32>} : memref<2x10x17x16xf32, #tpu.memory_space<vmem>>, vector<2x8x1x16xf32>,
    %c0_23 = arith.constant 0 : index
    %c1_24 = arith.constant 1 : index
    %c16 = arith.constant 16 : index
    %c0_25 = arith.constant 0 : index
    %37 = vector.load %arg9[%c0_23, %c1_24, %c16, %c0_25] : memref<2x10x17x16xf32, #tpu.memory_space<vmem>>, vector<2x8x1x16xf32>
    tpu.vector_store %arg9[%c0_23, %c1_24, %c16, %c0_25], %35 {strides = array<i32>} : memref<2x10x17x16xf32, #tpu.memory_space<vmem>>, vector<2x8x1x16xf32>,
    %c0_26 = arith.constant 0 : index
    %c1_27 = arith.constant 1 : index
    %c8 = arith.constant 8 : index
    %c0_28 = arith.constant 0 : index
    %38 = vector.load %arg9[%c0_26, %c1_27, %c8, %c0_28] : memref<2x10x17x16xf32, #tpu.memory_space<vmem>>, vector<2x8x8x16xf32>
    tpu.vector_store %arg9[%c0_26, %c1_27, %c8, %c0_28], %31 {strides = array<i32>} : memref<2x10x17x16xf32, #tpu.memory_space<vmem>>, vector<2x8x8x16xf32>,
    %c0_29 = arith.constant 0 : index
    %c0_30 = arith.constant 0 : index
    %c7_31 = arith.constant 7 : index
    %c0_32 = arith.constant 0 : index
    %39 = vector.load %arg9[%c0_29, %c0_30, %c7_31, %c0_32] : memref<2x10x17x16xf32, #tpu.memory_space<vmem>>, vector<2x8x8x16xf32>
    %40 = vector.shape_cast %39 : vector<2x8x8x16xf32> to vector<128x16xf32>
    %41 = arith.truncf %40 : vector<128x16xf32> to vector<128x16xbf16>
    %c0_33 = arith.constant 0 : index
    %c0_34 = arith.constant 0 : index
    %c8_35 = arith.constant 8 : index
    %c0_36 = arith.constant 0 : index
    %42 = vector.load %arg9[%c0_33, %c0_34, %c8_35, %c0_36] : memref<2x10x17x16xf32, #tpu.memory_space<vmem>>, vector<2x8x8x16xf32>
    %43 = vector.shape_cast %42 : vector<2x8x8x16xf32> to vector<128x16xf32>
    %44 = arith.truncf %43 : vector<128x16xf32> to vector<128x16xbf16>
    %c0_37 = arith.constant 0 : index
    %c0_38 = arith.constant 0 : index
    %c9_39 = arith.constant 9 : index
    %c0_40 = arith.constant 0 : index
    %45 = vector.load %arg9[%c0_37, %c0_38, %c9_39, %c0_40] : memref<2x10x17x16xf32, #tpu.memory_space<vmem>>, vector<2x8x8x16xf32>
    %46 = vector.shape_cast %45 : vector<2x8x8x16xf32> to vector<128x16xf32>
    %47 = arith.truncf %46 : vector<128x16xf32> to vector<128x16xbf16>
    %c0_41 = arith.constant 0 : index
    %c1_42 = arith.constant 1 : index
    %c7_43 = arith.constant 7 : index
    %c0_44 = arith.constant 0 : index
    %48 = vector.load %arg9[%c0_41, %c1_42, %c7_43, %c0_44] : memref<2x10x17x16xf32, #tpu.memory_space<vmem>>, vector<2x8x8x16xf32>
    %49 = vector.shape_cast %48 : vector<2x8x8x16xf32> to vector<128x16xf32>
    %50 = arith.truncf %49 : vector<128x16xf32> to vector<128x16xbf16>
    %c0_45 = arith.constant 0 : index
    %c1_46 = arith.constant 1 : index
    %c8_47 = arith.constant 8 : index
    %c0_48 = arith.constant 0 : index
    %51 = vector.load %arg9[%c0_45, %c1_46, %c8_47, %c0_48] : memref<2x10x17x16xf32, #tpu.memory_space<vmem>>, vector<2x8x8x16xf32>
    %52 = vector.shape_cast %51 : vector<2x8x8x16xf32> to vector<128x16xf32>
    %53 = arith.truncf %52 : vector<128x16xf32> to vector<128x16xbf16>
    %c0_49 = arith.constant 0 : index
    %c1_50 = arith.constant 1 : index
    %c9_51 = arith.constant 9 : index
    %c0_52 = arith.constant 0 : index
    %54 = vector.load %arg9[%c0_49, %c1_50, %c9_51, %c0_52] : memref<2x10x17x16xf32, #tpu.memory_space<vmem>>, vector<2x8x8x16xf32>
    %55 = vector.shape_cast %54 : vector<2x8x8x16xf32> to vector<128x16xf32>
    %56 = arith.truncf %55 : vector<128x16xf32> to vector<128x16xbf16>
    %c0_53 = arith.constant 0 : index
    %c2 = arith.constant 2 : index
    %c7_54 = arith.constant 7 : index
    %c0_55 = arith.constant 0 : index
    %57 = vector.load %arg9[%c0_53, %c2, %c7_54, %c0_55] : memref<2x10x17x16xf32, #tpu.memory_space<vmem>>, vector<2x8x8x16xf32>
    %58 = vector.shape_cast %57 : vector<2x8x8x16xf32> to vector<128x16xf32>
    %59 = arith.truncf %58 : vector<128x16xf32> to vector<128x16xbf16>
    %c0_56 = arith.constant 0 : index
    %c2_57 = arith.constant 2 : index
    %c8_58 = arith.constant 8 : index
    %c0_59 = arith.constant 0 : index
    %60 = vector.load %arg9[%c0_56, %c2_57, %c8_58, %c0_59] : memref<2x10x17x16xf32, #tpu.memory_space<vmem>>, vector<2x8x8x16xf32>
    %61 = vector.shape_cast %60 : vector<2x8x8x16xf32> to vector<128x16xf32>
    %62 = arith.truncf %61 : vector<128x16xf32> to vector<128x16xbf16>
    %c0_60 = arith.constant 0 : index
    %c2_61 = arith.constant 2 : index
    %c9_62 = arith.constant 9 : index
    %c0_63 = arith.constant 0 : index
    %63 = vector.load %arg9[%c0_60, %c2_61, %c9_62, %c0_63] : memref<2x10x17x16xf32, #tpu.memory_space<vmem>>, vector<2x8x8x16xf32>
    %64 = vector.shape_cast %63 : vector<2x8x8x16xf32> to vector<128x16xf32>
    %65 = arith.truncf %64 : vector<128x16xf32> to vector<128x16xbf16>
    %66 = tpu.concatenate %41, %44, %47, %50, %53, %56, %59, %62, %65 in 1 : vector<128x16xbf16>, vector<128x16xbf16>, vector<128x16xbf16>, vector<128x16xbf16>, vector<128x16xbf16>, vector<128x16xbf16>, vector<128x16xbf16>, vector<128x16xbf16>, vector<128x16xbf16> -> vector<128x144xbf16>
    %c0_64 = arith.constant 0 : index
    %c0_65 = arith.constant 0 : index
    %67 = vector.load %arg2[%c0_64, %c0_65] : memref<144x32xbf16, #tpu.memory_space<vmem>>, vector<144x32xbf16>
    %cst_66 = arith.constant dense<0.000000e+00> : vector<128x32xf32>
    %68 = tpu.matmul %66, %67, %cst_66 {dimension_numbers = #tpu.dot_dimension_numbers<[1], [0], [0], [1], [0, 0, 1, 1], [], []>} : vector<128x144xbf16>, vector<144x32xbf16>, vector<128x32xf32> -> vector<128x32xf32>
    %cst_67 = arith.constant dense<0.000000e+00> : vector<32xf32>
    %69 = vector.multi_reduction <add>, %68, %cst_67 [0] : vector<128x32xf32> to vector<32xf32>
    %70 = vector.shape_cast %69 : vector<32xf32> to vector<1x32xf32>
    %71 = arith.mulf %68, %68 : vector<128x32xf32>
    %cst_68 = arith.constant dense<0.000000e+00> : vector<32xf32>
    %72 = vector.multi_reduction <add>, %71, %cst_68 [0] : vector<128x32xf32> to vector<32xf32>
    %73 = vector.shape_cast %72 : vector<32xf32> to vector<1x32xf32>
    %74 = vector.extract_strided_slice %70 {offsets = [0, 0], sizes = [1, 8], strides = [1, 1]} : vector<1x32xf32> to vector<1x8xf32>
    %75 = vector.extract_strided_slice %70 {offsets = [0, 8], sizes = [1, 8], strides = [1, 1]} : vector<1x32xf32> to vector<1x8xf32>
    %76 = arith.addf %74, %75 : vector<1x8xf32>
    %77 = vector.extract_strided_slice %70 {offsets = [0, 16], sizes = [1, 8], strides = [1, 1]} : vector<1x32xf32> to vector<1x8xf32>
    %78 = arith.addf %76, %77 : vector<1x8xf32>
    %79 = vector.extract_strided_slice %70 {offsets = [0, 24], sizes = [1, 8], strides = [1, 1]} : vector<1x32xf32> to vector<1x8xf32>
    %80 = arith.addf %78, %79 : vector<1x8xf32>
    %cst_69 = arith.constant 0.001953125 : f32
    %81 = vector.broadcast %cst_69 : f32 to vector<1x8xf32>
    %82 = arith.mulf %80, %81 : vector<1x8xf32>
    %83 = vector.extract_strided_slice %73 {offsets = [0, 0], sizes = [1, 8], strides = [1, 1]} : vector<1x32xf32> to vector<1x8xf32>
    %84 = vector.extract_strided_slice %73 {offsets = [0, 8], sizes = [1, 8], strides = [1, 1]} : vector<1x32xf32> to vector<1x8xf32>
    %85 = arith.addf %83, %84 : vector<1x8xf32>
    %86 = vector.extract_strided_slice %73 {offsets = [0, 16], sizes = [1, 8], strides = [1, 1]} : vector<1x32xf32> to vector<1x8xf32>
    %87 = arith.addf %85, %86 : vector<1x8xf32>
    %88 = vector.extract_strided_slice %73 {offsets = [0, 24], sizes = [1, 8], strides = [1, 1]} : vector<1x32xf32> to vector<1x8xf32>
    %89 = arith.addf %87, %88 : vector<1x8xf32>
    %cst_70 = arith.constant 0.001953125 : f32
    %90 = vector.broadcast %cst_70 : f32 to vector<1x8xf32>
    %91 = arith.mulf %89, %90 : vector<1x8xf32>
    %92 = arith.mulf %82, %82 : vector<1x8xf32>
    %93 = arith.subf %91, %92 : vector<1x8xf32>
    %cst_71 = arith.constant 0.000000e+00 : f32
    %94 = vector.broadcast %cst_71 : f32 to vector<1x8xf32>
    %95 = arith.maximumf %93, %94 : vector<1x8xf32>
    %cst_72 = arith.constant 9.99999974E-6 : f32
    %96 = vector.broadcast %cst_72 : f32 to vector<1x8xf32>
    %97 = arith.addf %95, %96 : vector<1x8xf32>
    %98 = math.rsqrt %97 : vector<1x8xf32>
    %c0_73 = arith.constant 0 : index
    %c0_74 = arith.constant 0 : index
    %99 = vector.load %arg3[%c0_73, %c0_74] : memref<1x8xf32, #tpu.memory_space<vmem>>, vector<1x8xf32>
    %100 = arith.mulf %98, %99 : vector<1x8xf32>
    %c0_75 = arith.constant 0 : index
    %c0_76 = arith.constant 0 : index
    %101 = vector.load %arg4[%c0_75, %c0_76] : memref<1x8xf32, #tpu.memory_space<vmem>>, vector<1x8xf32>
    %102 = arith.mulf %82, %100 : vector<1x8xf32>
    %103 = arith.subf %101, %102 : vector<1x8xf32>
    %104 = tpu.concatenate %100, %100, %100, %100 in 1 : vector<1x8xf32>, vector<1x8xf32>, vector<1x8xf32>, vector<1x8xf32> -> vector<1x32xf32>
    %105 = tpu.concatenate %103, %103, %103, %103 in 1 : vector<1x8xf32>, vector<1x8xf32>, vector<1x8xf32>, vector<1x8xf32> -> vector<1x32xf32>
    %106 = vector.broadcast %104 : vector<1x32xf32> to vector<128x32xf32>
    %107 = arith.mulf %68, %106 : vector<128x32xf32>
    %108 = vector.broadcast %105 : vector<1x32xf32> to vector<128x32xf32>
    %109 = arith.addf %107, %108 : vector<128x32xf32>
    %cst_77 = arith.constant 0.000000e+00 : f32
    %110 = vector.broadcast %cst_77 : f32 to vector<128x32xf32>
    %111 = arith.maximumf %109, %110 : vector<128x32xf32>
    %cst_78 = arith.constant 0.000000e+00 : f32
    %112 = vector.broadcast %cst_78 : f32 to vector<2x1x10x32xf32>
    %c0_79 = arith.constant 0 : index
    %c0_80 = arith.constant 0 : index
    %c7_81 = arith.constant 7 : index
    %c0_82 = arith.constant 0 : index
    %113 = vector.load %arg10[%c0_79, %c0_80, %c7_81, %c0_82] : memref<2x10x17x32xf32, #tpu.memory_space<vmem>>, vector<2x1x10x32xf32>
    tpu.vector_store %arg10[%c0_79, %c0_80, %c7_81, %c0_82], %112 {strides = array<i32>} : memref<2x10x17x32xf32, #tpu.memory_space<vmem>>, vector<2x1x10x32xf32>,
    %c0_83 = arith.constant 0 : index
    %c9_84 = arith.constant 9 : index
    %c7_85 = arith.constant 7 : index
    %c0_86 = arith.constant 0 : index
    %114 = vector.load %arg10[%c0_83, %c9_84, %c7_85, %c0_86] : memref<2x10x17x32xf32, #tpu.memory_space<vmem>>, vector<2x1x10x32xf32>
    tpu.vector_store %arg10[%c0_83, %c9_84, %c7_85, %c0_86], %112 {strides = array<i32>} : memref<2x10x17x32xf32, #tpu.memory_space<vmem>>, vector<2x1x10x32xf32>,
    %cst_87 = arith.constant 0.000000e+00 : f32
    %115 = vector.broadcast %cst_87 : f32 to vector<2x8x1x32xf32>
    %c0_88 = arith.constant 0 : index
    %c1_89 = arith.constant 1 : index
    %c7_90 = arith.constant 7 : index
    %c0_91 = arith.constant 0 : index
    %116 = vector.load %arg10[%c0_88, %c1_89, %c7_90, %c0_91] : memref<2x10x17x32xf32, #tpu.memory_space<vmem>>, vector<2x8x1x32xf32>
    tpu.vector_store %arg10[%c0_88, %c1_89, %c7_90, %c0_91], %115 {strides = array<i32>} : memref<2x10x17x32xf32, #tpu.memory_space<vmem>>, vector<2x8x1x32xf32>,
    %c0_92 = arith.constant 0 : index
    %c1_93 = arith.constant 1 : index
    %c16_94 = arith.constant 16 : index
    %c0_95 = arith.constant 0 : index
    %117 = vector.load %arg10[%c0_92, %c1_93, %c16_94, %c0_95] : memref<2x10x17x32xf32, #tpu.memory_space<vmem>>, vector<2x8x1x32xf32>
    tpu.vector_store %arg10[%c0_92, %c1_93, %c16_94, %c0_95], %115 {strides = array<i32>} : memref<2x10x17x32xf32, #tpu.memory_space<vmem>>, vector<2x8x1x32xf32>,
    %118 = vector.shape_cast %111 : vector<128x32xf32> to vector<2x8x8x32xf32>
    %c0_96 = arith.constant 0 : index
    %c1_97 = arith.constant 1 : index
    %c8_98 = arith.constant 8 : index
    %c0_99 = arith.constant 0 : index
    %119 = vector.load %arg10[%c0_96, %c1_97, %c8_98, %c0_99] : memref<2x10x17x32xf32, #tpu.memory_space<vmem>>, vector<2x8x8x32xf32>
    tpu.vector_store %arg10[%c0_96, %c1_97, %c8_98, %c0_99], %118 {strides = array<i32>} : memref<2x10x17x32xf32, #tpu.memory_space<vmem>>, vector<2x8x8x32xf32>,
    %c0_100 = arith.constant 0 : index
    %c0_101 = arith.constant 0 : index
    %c7_102 = arith.constant 7 : index
    %c0_103 = arith.constant 0 : index
    %120 = vector.load %arg10[%c0_100, %c0_101, %c7_102, %c0_103] : memref<2x10x17x32xf32, #tpu.memory_space<vmem>>, vector<2x8x8x32xf32>
    %121 = vector.shape_cast %120 : vector<2x8x8x32xf32> to vector<128x32xf32>
    %122 = arith.truncf %121 : vector<128x32xf32> to vector<128x32xbf16>
    %c0_104 = arith.constant 0 : index
    %c0_105 = arith.constant 0 : index
    %c8_106 = arith.constant 8 : index
    %c0_107 = arith.constant 0 : index
    %123 = vector.load %arg10[%c0_104, %c0_105, %c8_106, %c0_107] : memref<2x10x17x32xf32, #tpu.memory_space<vmem>>, vector<2x8x8x32xf32>
    %124 = vector.shape_cast %123 : vector<2x8x8x32xf32> to vector<128x32xf32>
    %125 = arith.truncf %124 : vector<128x32xf32> to vector<128x32xbf16>
    %c0_108 = arith.constant 0 : index
    %c0_109 = arith.constant 0 : index
    %c9_110 = arith.constant 9 : index
    %c0_111 = arith.constant 0 : index
    %126 = vector.load %arg10[%c0_108, %c0_109, %c9_110, %c0_111] : memref<2x10x17x32xf32, #tpu.memory_space<vmem>>, vector<2x8x8x32xf32>
    %127 = vector.shape_cast %126 : vector<2x8x8x32xf32> to vector<128x32xf32>
    %128 = arith.truncf %127 : vector<128x32xf32> to vector<128x32xbf16>
    %c0_112 = arith.constant 0 : index
    %c1_113 = arith.constant 1 : index
    %c7_114 = arith.constant 7 : index
    %c0_115 = arith.constant 0 : index
    %129 = vector.load %arg10[%c0_112, %c1_113, %c7_114, %c0_115] : memref<2x10x17x32xf32, #tpu.memory_space<vmem>>, vector<2x8x8x32xf32>
    %130 = vector.shape_cast %129 : vector<2x8x8x32xf32> to vector<128x32xf32>
    %131 = arith.truncf %130 : vector<128x32xf32> to vector<128x32xbf16>
    %c0_116 = arith.constant 0 : index
    %c1_117 = arith.constant 1 : index
    %c8_118 = arith.constant 8 : index
    %c0_119 = arith.constant 0 : index
    %132 = vector.load %arg10[%c0_116, %c1_117, %c8_118, %c0_119] : memref<2x10x17x32xf32, #tpu.memory_space<vmem>>, vector<2x8x8x32xf32>
    %133 = vector.shape_cast %132 : vector<2x8x8x32xf32> to vector<128x32xf32>
    %134 = arith.truncf %133 : vector<128x32xf32> to vector<128x32xbf16>
    %c0_120 = arith.constant 0 : index
    %c1_121 = arith.constant 1 : index
    %c9_122 = arith.constant 9 : index
    %c0_123 = arith.constant 0 : index
    %135 = vector.load %arg10[%c0_120, %c1_121, %c9_122, %c0_123] : memref<2x10x17x32xf32, #tpu.memory_space<vmem>>, vector<2x8x8x32xf32>
    %136 = vector.shape_cast %135 : vector<2x8x8x32xf32> to vector<128x32xf32>
    %137 = arith.truncf %136 : vector<128x32xf32> to vector<128x32xbf16>
    %c0_124 = arith.constant 0 : index
    %c2_125 = arith.constant 2 : index
    %c7_126 = arith.constant 7 : index
    %c0_127 = arith.constant 0 : index
    %138 = vector.load %arg10[%c0_124, %c2_125, %c7_126, %c0_127] : memref<2x10x17x32xf32, #tpu.memory_space<vmem>>, vector<2x8x8x32xf32>
    %139 = vector.shape_cast %138 : vector<2x8x8x32xf32> to vector<128x32xf32>
    %140 = arith.truncf %139 : vector<128x32xf32> to vector<128x32xbf16>
    %c0_128 = arith.constant 0 : index
    %c2_129 = arith.constant 2 : index
    %c8_130 = arith.constant 8 : index
    %c0_131 = arith.constant 0 : index
    %141 = vector.load %arg10[%c0_128, %c2_129, %c8_130, %c0_131] : memref<2x10x17x32xf32, #tpu.memory_space<vmem>>, vector<2x8x8x32xf32>
    %142 = vector.shape_cast %141 : vector<2x8x8x32xf32> to vector<128x32xf32>
    %143 = arith.truncf %142 : vector<128x32xf32> to vector<128x32xbf16>
    %c0_132 = arith.constant 0 : index
    %c2_133 = arith.constant 2 : index
    %c9_134 = arith.constant 9 : index
    %c0_135 = arith.constant 0 : index
    %144 = vector.load %arg10[%c0_132, %c2_133, %c9_134, %c0_135] : memref<2x10x17x32xf32, #tpu.memory_space<vmem>>, vector<2x8x8x32xf32>
    %145 = vector.shape_cast %144 : vector<2x8x8x32xf32> to vector<128x32xf32>
    %146 = arith.truncf %145 : vector<128x32xf32> to vector<128x32xbf16>
    %147 = tpu.concatenate %122, %125, %128, %131, %134, %137, %140, %143, %146 in 1 : vector<128x32xbf16>, vector<128x32xbf16>, vector<128x32xbf16>, vector<128x32xbf16>, vector<128x32xbf16>, vector<128x32xbf16>, vector<128x32xbf16>, vector<128x32xbf16>, vector<128x32xbf16> -> vector<128x288xbf16>
    %c0_136 = arith.constant 0 : index
    %c0_137 = arith.constant 0 : index
    %148 = vector.load %arg5[%c0_136, %c0_137] : memref<288x16xbf16, #tpu.memory_space<vmem>>, vector<288x16xbf16>
    %cst_138 = arith.constant dense<0.000000e+00> : vector<128x16xf32>
    %149 = tpu.matmul %147, %148, %cst_138 {dimension_numbers = #tpu.dot_dimension_numbers<[1], [0], [0], [1], [0, 0, 1, 1], [], []>} : vector<128x288xbf16>, vector<288x16xbf16>, vector<128x16xf32> -> vector<128x16xf32>
    %cst_139 = arith.constant dense<0.000000e+00> : vector<16xf32>
    %150 = vector.multi_reduction <add>, %149, %cst_139 [0] : vector<128x16xf32> to vector<16xf32>
    %151 = vector.shape_cast %150 : vector<16xf32> to vector<1x16xf32>
    %152 = arith.mulf %149, %149 : vector<128x16xf32>
    %cst_140 = arith.constant dense<0.000000e+00> : vector<16xf32>
    %153 = vector.multi_reduction <add>, %152, %cst_140 [0] : vector<128x16xf32> to vector<16xf32>
    %154 = vector.shape_cast %153 : vector<16xf32> to vector<1x16xf32>
    %155 = vector.extract_strided_slice %151 {offsets = [0, 0], sizes = [1, 4], strides = [1, 1]} : vector<1x16xf32> to vector<1x4xf32>
    %156 = vector.extract_strided_slice %151 {offsets = [0, 4], sizes = [1, 4], strides = [1, 1]} : vector<1x16xf32> to vector<1x4xf32>
    %157 = arith.addf %155, %156 : vector<1x4xf32>
    %158 = vector.extract_strided_slice %151 {offsets = [0, 8], sizes = [1, 4], strides = [1, 1]} : vector<1x16xf32> to vector<1x4xf32>
    %159 = arith.addf %157, %158 : vector<1x4xf32>
    %160 = vector.extract_strided_slice %151 {offsets = [0, 12], sizes = [1, 4], strides = [1, 1]} : vector<1x16xf32> to vector<1x4xf32>
    %161 = arith.addf %159, %160 : vector<1x4xf32>
    %cst_141 = arith.constant 0.001953125 : f32
    %162 = vector.broadcast %cst_141 : f32 to vector<1x4xf32>
    %163 = arith.mulf %161, %162 : vector<1x4xf32>
    %164 = vector.extract_strided_slice %154 {offsets = [0, 0], sizes = [1, 4], strides = [1, 1]} : vector<1x16xf32> to vector<1x4xf32>
    %165 = vector.extract_strided_slice %154 {offsets = [0, 4], sizes = [1, 4], strides = [1, 1]} : vector<1x16xf32> to vector<1x4xf32>
    %166 = arith.addf %164, %165 : vector<1x4xf32>
    %167 = vector.extract_strided_slice %154 {offsets = [0, 8], sizes = [1, 4], strides = [1, 1]} : vector<1x16xf32> to vector<1x4xf32>
    %168 = arith.addf %166, %167 : vector<1x4xf32>
    %169 = vector.extract_strided_slice %154 {offsets = [0, 12], sizes = [1, 4], strides = [1, 1]} : vector<1x16xf32> to vector<1x4xf32>
    %170 = arith.addf %168, %169 : vector<1x4xf32>
    %cst_142 = arith.constant 0.001953125 : f32
    %171 = vector.broadcast %cst_142 : f32 to vector<1x4xf32>
    %172 = arith.mulf %170, %171 : vector<1x4xf32>
    %173 = arith.mulf %163, %163 : vector<1x4xf32>
    %174 = arith.subf %172, %173 : vector<1x4xf32>
    %cst_143 = arith.constant 0.000000e+00 : f32
    %175 = vector.broadcast %cst_143 : f32 to vector<1x4xf32>
    %176 = arith.maximumf %174, %175 : vector<1x4xf32>
    %cst_144 = arith.constant 9.99999974E-6 : f32
    %177 = vector.broadcast %cst_144 : f32 to vector<1x4xf32>
    %178 = arith.addf %176, %177 : vector<1x4xf32>
    %179 = math.rsqrt %178 : vector<1x4xf32>
    %c0_145 = arith.constant 0 : index
    %c0_146 = arith.constant 0 : index
    %180 = vector.load %arg6[%c0_145, %c0_146] : memref<1x4xf32, #tpu.memory_space<vmem>>, vector<1x4xf32>
    %181 = arith.mulf %179, %180 : vector<1x4xf32>
    %c0_147 = arith.constant 0 : index
    %c0_148 = arith.constant 0 : index
    %182 = vector.load %arg7[%c0_147, %c0_148] : memref<1x4xf32, #tpu.memory_space<vmem>>, vector<1x4xf32>
    %183 = arith.mulf %163, %181 : vector<1x4xf32>
    %184 = arith.subf %182, %183 : vector<1x4xf32>
    %185 = tpu.concatenate %181, %181, %181, %181 in 1 : vector<1x4xf32>, vector<1x4xf32>, vector<1x4xf32>, vector<1x4xf32> -> vector<1x16xf32>
    %186 = tpu.concatenate %184, %184, %184, %184 in 1 : vector<1x4xf32>, vector<1x4xf32>, vector<1x4xf32>, vector<1x4xf32> -> vector<1x16xf32>
    %187 = vector.broadcast %185 : vector<1x16xf32> to vector<128x16xf32>
    %188 = arith.mulf %149, %187 : vector<128x16xf32>
    %189 = vector.broadcast %186 : vector<1x16xf32> to vector<128x16xf32>
    %190 = arith.addf %188, %189 : vector<128x16xf32>
    %cst_149 = arith.constant 0.000000e+00 : f32
    %191 = vector.broadcast %cst_149 : f32 to vector<128x16xf32>
    %192 = arith.maximumf %190, %191 : vector<128x16xf32>
    %c0_150 = arith.constant 0 : index
    %c0_151 = arith.constant 0 : index
    %193 = vector.load %arg8[%c0_150, %c0_151] : memref<128x16xf32, #tpu.memory_space<vmem>>, vector<128x16xf32>
    tpu.vector_store %arg8[%c0_150, %c0_151], %192 {strides = array<i32>} : memref<128x16xf32, #tpu.memory_space<vmem>>, vector<128x16xf32>,
    return
  }
}

</mosaic_0001>

<llo_original>
// kernel: tpu_custom_call.1
$region0: #{tpu_custom_call.1}
  #allocation0 [shape = 'u32[]', space=smem, size = 0x4, offset = 0x4, fixed_abs, tag = 'smem constant byte address 0x4 - core index']
  #allocation1 [shape = 'u32[72,128]{1,0:T(1,128)}', space=vmem, size = 0x9000, scoped, tag = 'internal scratch']
  #allocation2 [shape = 'f32[2,10,17,16]{3,2,1,0:T(8,128)}', space=vmem, size = 0x3c000, scoped, tag = 'scratch operand']
  #allocation3 [shape = 'f32[2,10,17,32]{3,2,1,0:T(8,128)}', space=vmem, size = 0x3c000, scoped, tag = 'scratch operand']
  %s0 = inlined_call_operand.vmem [shape: f32[2,8,8,4], index: 0, kind: input, shape index: {}]
  %s1 = inlined_call_operand.vmem [shape: s32[2,8,8,4], index: 1, kind: input, shape index: {}]
  %s2 = inlined_call_operand.vmem [shape: bf16[144,32], index: 2, kind: input, shape index: {}]
  %s3 = inlined_call_operand.vmem [shape: f32[1,8], index: 3, kind: input, shape index: {}]
  %s4 = inlined_call_operand.vmem [shape: f32[1,8], index: 4, kind: input, shape index: {}]
  %s5 = inlined_call_operand.vmem [shape: bf16[288,16], index: 5, kind: input, shape index: {}]
  %s6 = inlined_call_operand.vmem [shape: f32[1,4], index: 6, kind: input, shape index: {}]
  %s7 = inlined_call_operand.vmem [shape: f32[1,4], index: 7, kind: input, shape index: {}]
  %s8 = inlined_call_operand.vmem [shape: f32[128,16], index: 8, kind: output, shape index: {}]
  %s9 = sld [smem:[#allocation0]]
  $region42: #{tpu_custom_call.1} parent=0
    _
  %s11 = ssub.s32 1, %s9
  %s12 = scalar_select 0, %s11, %s9
  // Predicated region
  $region2: #{tpu_custom_call.1} parent=0 // pred_check
    _
  $region3: #{tpu_custom_call.1} parent=0 // pred_check_branch
    %14 = sbr.rel (0) target = $region5
  $region4: #{tpu_custom_call.1} parent=0 // pred_region
    _
  $region5: #{tpu_custom_call.1} parent=0 // pred_fallthru
    _
  // Predicated region
  $region6: #{tpu_custom_call.1} parent=0 // pred_check
    _
  $region7: #{tpu_custom_call.1} parent=0 // pred_check_branch
    %16 = sbr.rel (0) target = $region9
  $region8: #{tpu_custom_call.1} parent=0 // pred_region
    _
  $region9: #{tpu_custom_call.1} parent=0 // pred_fallthru
    _
  // Predicated region
  $region10: #{tpu_custom_call.1} parent=0 // pred_check
    _
  $region11: #{tpu_custom_call.1} parent=0 // pred_check_branch
    %18 = sbr.rel (0) target = $region13
  $region12: #{tpu_custom_call.1} parent=0 // pred_region
    _
  $region13: #{tpu_custom_call.1} parent=0 // pred_fallthru
    _
  // Predicated region
  $region14: #{tpu_custom_call.1} parent=0 // pred_check
    _
  $region15: #{tpu_custom_call.1} parent=0 // pred_check_branch
    %20 = sbr.rel (0) target = $region17
  $region16: #{tpu_custom_call.1} parent=0 // pred_region
    _
  $region17: #{tpu_custom_call.1} parent=0 // pred_fallthru
    _
  // Predicated region
  $region18: #{tpu_custom_call.1} parent=0 // pred_check
    _
  $region19: #{tpu_custom_call.1} parent=0 // pred_check_branch
    %22 = sbr.rel (0) target = $region21
  $region20: #{tpu_custom_call.1} parent=0 // pred_region
    _
  $region21: #{tpu_custom_call.1} parent=0 // pred_fallthru
    _
  // Predicated region
  $region22: #{tpu_custom_call.1} parent=0 // pred_check
    _
  $region23: #{tpu_custom_call.1} parent=0 // pred_check_branch
    %24 = sbr.rel (0) target = $region25
  $region24: #{tpu_custom_call.1} parent=0 // pred_region
    _
  $region25: #{tpu_custom_call.1} parent=0 // pred_fallthru
    _
  // Predicated region
  $region26: #{tpu_custom_call.1} parent=0 // pred_check
    _
  $region27: #{tpu_custom_call.1} parent=0 // pred_check_branch
    %26 = sbr.rel (0) target = $region29
  $region28: #{tpu_custom_call.1} parent=0 // pred_region
    _
  $region29: #{tpu_custom_call.1} parent=0 // pred_fallthru
    _
  // Predicated region
  $region30: #{tpu_custom_call.1} parent=0 // pred_check
    _
  $region31: #{tpu_custom_call.1} parent=0 // pred_check_branch
    %28 = sbr.rel (0) target = $region33
  $region32: #{tpu_custom_call.1} parent=0 // pred_region
    _
  $region33: #{tpu_custom_call.1} parent=0 // pred_fallthru
    _
  %v30 = vld [vmem:[%s0] sm:$0xff]
  %v31 = vld [vmem:[%s0 + $0x8] sm:$0xff]
  %v32 = vld [vmem:[%s0 + $0x10] sm:$0xff]
  %v33 = vld [vmem:[%s0 + $0x18] sm:$0xff]
  %v34 = vld [vmem:[%s0 + $0x20] sm:$0xff]
  %v35 = vld [vmem:[%s0 + $0x28] sm:$0xff]
  %v36 = vld [vmem:[%s0 + $0x30] sm:$0xff]
  %v37 = vld [vmem:[%s0 + $0x38] sm:$0xff]
  %v38 = vld [vmem:[%s0 + $0x40] sm:$0xff]
  %v39 = vld [vmem:[%s0 + $0x48] sm:$0xff]
  %v40 = vld [vmem:[%s0 + $0x50] sm:$0xff]
  %v41 = vld [vmem:[%s0 + $0x58] sm:$0xff]
  %v42 = vld [vmem:[%s0 + $0x60] sm:$0xff]
  %v43 = vld [vmem:[%s0 + $0x68] sm:$0xff]
  %v44 = vld [vmem:[%s0 + $0x70] sm:$0xff]
  %v45 = vld [vmem:[%s0 + $0x78] sm:$0xff]
  %v46 = vld [vmem:[%s1] sm:$0xff]
  %v47 = vld [vmem:[%s1 + $0x8] sm:$0xff]
  %v48 = vld [vmem:[%s1 + $0x10] sm:$0xff]
  %v49 = vld [vmem:[%s1 + $0x18] sm:$0xff]
  %v50 = vld [vmem:[%s1 + $0x20] sm:$0xff]
  %v51 = vld [vmem:[%s1 + $0x28] sm:$0xff]
  %v52 = vld [vmem:[%s1 + $0x30] sm:$0xff]
  %v53 = vld [vmem:[%s1 + $0x38] sm:$0xff]
  %v54 = vld [vmem:[%s1 + $0x40] sm:$0xff]
  %v55 = vld [vmem:[%s1 + $0x48] sm:$0xff]
  %v56 = vld [vmem:[%s1 + $0x50] sm:$0xff]
  %v57 = vld [vmem:[%s1 + $0x58] sm:$0xff]
  %v58 = vld [vmem:[%s1 + $0x60] sm:$0xff]
  %v59 = vld [vmem:[%s1 + $0x68] sm:$0xff]
  %v60 = vld [vmem:[%s1 + $0x70] sm:$0xff]
  %v61 = vld [vmem:[%s1 + $0x78] sm:$0xff]
  %v62 = vlaneseq
  %v63 = vshrl.u32 %v62, 7
  %v64 = vmul.u32 %v63, 2
  %v65 = vadd.s32 %v64, 32
  %v66 = vadd.s32 %v64, 64
  %v67 = vadd.s32 %v64, 96
  %v68 = vadd.s32 %v64, 128
  %v69 = vadd.s32 %v64, 160
  %v70 = vadd.s32 %v64, 192
  %v71 = vadd.s32 %v64, 224
  %vm72 = vcmp.eq.s32.totalorder %v46, %v64
  %vm73 = vcmp.eq.s32.totalorder %v47, %v65
  %vm74 = vcmp.eq.s32.totalorder %v48, %v66
  %vm75 = vcmp.eq.s32.totalorder %v49, %v67
  %vm76 = vcmp.eq.s32.totalorder %v50, %v68
  %vm77 = vcmp.eq.s32.totalorder %v51, %v69
  %vm78 = vcmp.eq.s32.totalorder %v52, %v70
  %vm79 = vcmp.eq.s32.totalorder %v53, %v71
  %vm80 = vcmp.eq.s32.totalorder %v54, %v64
  %vm81 = vcmp.eq.s32.totalorder %v55, %v65
  %vm82 = vcmp.eq.s32.totalorder %v56, %v66
  %vm83 = vcmp.eq.s32.totalorder %v57, %v67
  %vm84 = vcmp.eq.s32.totalorder %v58, %v68
  %vm85 = vcmp.eq.s32.totalorder %v59, %v69
  %vm86 = vcmp.eq.s32.totalorder %v60, %v70
  %vm87 = vcmp.eq.s32.totalorder %v61, %v71
  %v88 = vsel %vm72, %v30, 0.0
  %v89 = vsel %vm73, %v31, 0.0
  %v90 = vsel %vm74, %v32, 0.0
  %v91 = vsel %vm75, %v33, 0.0
  %v92 = vsel %vm76, %v34, 0.0
  %v93 = vsel %vm77, %v35, 0.0
  %v94 = vsel %vm78, %v36, 0.0
  %v95 = vsel %vm79, %v37, 0.0
  %v96 = vsel %vm80, %v38, 0.0
  %v97 = vsel %vm81, %v39, 0.0
  %v98 = vsel %vm82, %v40, 0.0
  %v99 = vsel %vm83, %v41, 0.0
  %v100 = vsel %vm84, %v42, 0.0
  %v101 = vsel %vm85, %v43, 0.0
  %v102 = vsel %vm86, %v44, 0.0
  %v103 = vsel %vm87, %v45, 0.0
  %v104 = vadd.s32 %v64, 1
  %v105 = vadd.s32 %v65, 1
  %v106 = vadd.s32 %v66, 1
  %v107 = vadd.s32 %v67, 1
  %v108 = vadd.s32 %v68, 1
  %v109 = vadd.s32 %v69, 1
  %v110 = vadd.s32 %v70, 1
  %v111 = vadd.s32 %v71, 1
  %vm112 = vcmp.eq.s32.totalorder %v46, %v104
  %vm113 = vcmp.eq.s32.totalorder %v47, %v105
  %vm114 = vcmp.eq.s32.totalorder %v48, %v106
  %vm115 = vcmp.eq.s32.totalorder %v49, %v107
  %vm116 = vcmp.eq.s32.totalorder %v50, %v108
  %vm117 = vcmp.eq.s32.totalorder %v51, %v109
  %vm118 = vcmp.eq.s32.totalorder %v52, %v110
  %vm119 = vcmp.eq.s32.totalorder %v53, %v111
  %vm120 = vcmp.eq.s32.totalorder %v54, %v104
  %vm121 = vcmp.eq.s32.totalorder %v55, %v105
  %vm122 = vcmp.eq.s32.totalorder %v56, %v106
  %vm123 = vcmp.eq.s32.totalorder %v57, %v107
  %vm124 = vcmp.eq.s32.totalorder %v58, %v108
  %vm125 = vcmp.eq.s32.totalorder %v59, %v109
  %vm126 = vcmp.eq.s32.totalorder %v60, %v110
  %vm127 = vcmp.eq.s32.totalorder %v61, %v111
  %v128 = vsel %vm112, %v30, 0.0
  %v129 = vsel %vm113, %v31, 0.0
  %v130 = vsel %vm114, %v32, 0.0
  %v131 = vsel %vm115, %v33, 0.0
  %v132 = vsel %vm116, %v34, 0.0
  %v133 = vsel %vm117, %v35, 0.0
  %v134 = vsel %vm118, %v36, 0.0
  %v135 = vsel %vm119, %v37, 0.0
  %v136 = vsel %vm120, %v38, 0.0
  %v137 = vsel %vm121, %v39, 0.0
  %v138 = vsel %vm122, %v40, 0.0
  %v139 = vsel %vm123, %v41, 0.0
  %v140 = vsel %vm124, %v42, 0.0
  %v141 = vsel %vm125, %v43, 0.0
  %v142 = vsel %vm126, %v44, 0.0
  %v143 = vsel %vm127, %v45, 0.0
  %v144 = vadd.s32 %v64, 16
  %v145 = vadd.s32 %v65, 16
  %v146 = vadd.s32 %v66, 16
  %v147 = vadd.s32 %v67, 16
  %v148 = vadd.s32 %v68, 16
  %v149 = vadd.s32 %v69, 16
  %v150 = vadd.s32 %v70, 16
  %v151 = vadd.s32 %v71, 16
  %vm152 = vcmp.eq.s32.totalorder %v46, %v144
  %vm153 = vcmp.eq.s32.totalorder %v47, %v145
  %vm154 = vcmp.eq.s32.totalorder %v48, %v146
  %vm155 = vcmp.eq.s32.totalorder %v49, %v147
  %vm156 = vcmp.eq.s32.totalorder %v50, %v148
  %vm157 = vcmp.eq.s32.totalorder %v51, %v149
  %vm158 = vcmp.eq.s32.totalorder %v52, %v150
  %vm159 = vcmp.eq.s32.totalorder %v53, %v151
  %vm160 = vcmp.eq.s32.totalorder %v54, %v144
  %vm161 = vcmp.eq.s32.totalorder %v55, %v145
  %vm162 = vcmp.eq.s32.totalorder %v56, %v146
  %vm163 = vcmp.eq.s32.totalorder %v57, %v147
  %vm164 = vcmp.eq.s32.totalorder %v58, %v148
  %vm165 = vcmp.eq.s32.totalorder %v59, %v149
  %vm166 = vcmp.eq.s32.totalorder %v60, %v150
  %vm167 = vcmp.eq.s32.totalorder %v61, %v151
  %v168 = vsel %vm152, %v30, 0.0
  %v169 = vsel %vm153, %v31, 0.0
  %v170 = vsel %vm154, %v32, 0.0
  %v171 = vsel %vm155, %v33, 0.0
  %v172 = vsel %vm156, %v34, 0.0
  %v173 = vsel %vm157, %v35, 0.0
  %v174 = vsel %vm158, %v36, 0.0
  %v175 = vsel %vm159, %v37, 0.0
  %v176 = vsel %vm160, %v38, 0.0
  %v177 = vsel %vm161, %v39, 0.0
  %v178 = vsel %vm162, %v40, 0.0
  %v179 = vsel %vm163, %v41, 0.0
  %v180 = vsel %vm164, %v42, 0.0
  %v181 = vsel %vm165, %v43, 0.0
  %v182 = vsel %vm166, %v44, 0.0
  %v183 = vsel %vm167, %v45, 0.0
  %v184 = vadd.s32 %v64, 17
  %v185 = vadd.s32 %v65, 17
  %v186 = vadd.s32 %v66, 17
  %v187 = vadd.s32 %v67, 17
  %v188 = vadd.s32 %v68, 17
  %v189 = vadd.s32 %v69, 17
  %v190 = vadd.s32 %v70, 17
  %v191 = vadd.s32 %v71, 17
  %vm192 = vcmp.eq.s32.totalorder %v46, %v184
  %vm193 = vcmp.eq.s32.totalorder %v47, %v185
  %vm194 = vcmp.eq.s32.totalorder %v48, %v186
  %vm195 = vcmp.eq.s32.totalorder %v49, %v187
  %vm196 = vcmp.eq.s32.totalorder %v50, %v188
  %vm197 = vcmp.eq.s32.totalorder %v51, %v189
  %vm198 = vcmp.eq.s32.totalorder %v52, %v190
  %vm199 = vcmp.eq.s32.totalorder %v53, %v191
  %vm200 = vcmp.eq.s32.totalorder %v54, %v184
  %vm201 = vcmp.eq.s32.totalorder %v55, %v185
  %vm202 = vcmp.eq.s32.totalorder %v56, %v186
  %vm203 = vcmp.eq.s32.totalorder %v57, %v187
  %vm204 = vcmp.eq.s32.totalorder %v58, %v188
  %vm205 = vcmp.eq.s32.totalorder %v59, %v189
  %vm206 = vcmp.eq.s32.totalorder %v60, %v190
  %vm207 = vcmp.eq.s32.totalorder %v61, %v191
  %v208 = vsel %vm192, %v30, 0.0
  %v209 = vsel %vm193, %v31, 0.0
  %v210 = vsel %vm194, %v32, 0.0
  %v211 = vsel %vm195, %v33, 0.0
  %v212 = vsel %vm196, %v34, 0.0
  %v213 = vsel %vm197, %v35, 0.0
  %v214 = vsel %vm198, %v36, 0.0
  %v215 = vsel %vm199, %v37, 0.0
  %v216 = vsel %vm200, %v38, 0.0
  %v217 = vsel %vm201, %v39, 0.0
  %v218 = vsel %vm202, %v40, 0.0
  %v219 = vsel %vm203, %v41, 0.0
  %v220 = vsel %vm204, %v42, 0.0
  %v221 = vsel %vm205, %v43, 0.0
  %v222 = vsel %vm206, %v44, 0.0
  %v223 = vsel %vm207, %v45, 0.0
  %240 = vrot.lane.b32.xlu0 %v128, 4
  %v241 = vpop.permute.xlu0 %240
  %242 = vrot.lane.b32.xlu0 %v129, 4
  %v243 = vpop.permute.xlu0 %242
  %244 = vrot.lane.b32.xlu0 %v130, 4
  %v245 = vpop.permute.xlu0 %244
  %246 = vrot.lane.b32.xlu0 %v131, 4
  %v247 = vpop.permute.xlu0 %246
  %248 = vrot.lane.b32.xlu0 %v132, 4
  %v249 = vpop.permute.xlu0 %248
  %250 = vrot.lane.b32.xlu0 %v133, 4
  %v251 = vpop.permute.xlu0 %250
  %252 = vrot.lane.b32.xlu0 %v134, 4
  %v253 = vpop.permute.xlu0 %252
  %254 = vrot.lane.b32.xlu0 %v135, 4
  %v255 = vpop.permute.xlu0 %254
  %256 = vrot.lane.b32.xlu0 %v136, 4
  %v257 = vpop.permute.xlu0 %256
  %258 = vrot.lane.b32.xlu0 %v137, 4
  %v259 = vpop.permute.xlu0 %258
  %260 = vrot.lane.b32.xlu0 %v138, 4
  %v261 = vpop.permute.xlu0 %260
  %262 = vrot.lane.b32.xlu0 %v139, 4
  %v263 = vpop.permute.xlu0 %262
  %264 = vrot.lane.b32.xlu0 %v140, 4
  %v265 = vpop.permute.xlu0 %264
  %266 = vrot.lane.b32.xlu0 %v141, 4
  %v267 = vpop.permute.xlu0 %266
  %268 = vrot.lane.b32.xlu0 %v142, 4
  %v269 = vpop.permute.xlu0 %268
  %270 = vrot.lane.b32.xlu0 %v143, 4
  %v271 = vpop.permute.xlu0 %270
  %304 = vrot.lane.b32.xlu0 %v168, 8
  %v305 = vpop.permute.xlu0 %304
  %306 = vrot.lane.b32.xlu0 %v169, 8
  %v307 = vpop.permute.xlu0 %306
  %308 = vrot.lane.b32.xlu0 %v170, 8
  %v309 = vpop.permute.xlu0 %308
  %310 = vrot.lane.b32.xlu0 %v171, 8
  %v311 = vpop.permute.xlu0 %310
  %312 = vrot.lane.b32.xlu0 %v172, 8
  %v313 = vpop.permute.xlu0 %312
  %314 = vrot.lane.b32.xlu0 %v173, 8
  %v315 = vpop.permute.xlu0 %314
  %316 = vrot.lane.b32.xlu0 %v174, 8
  %v317 = vpop.permute.xlu0 %316
  %318 = vrot.lane.b32.xlu0 %v175, 8
  %v319 = vpop.permute.xlu0 %318
  %320 = vrot.lane.b32.xlu0 %v176, 8
  %v321 = vpop.permute.xlu0 %320
  %322 = vrot.lane.b32.xlu0 %v177, 8
  %v323 = vpop.permute.xlu0 %322
  %324 = vrot.lane.b32.xlu0 %v178, 8
  %v325 = vpop.permute.xlu0 %324
  %326 = vrot.lane.b32.xlu0 %v179, 8
  %v327 = vpop.permute.xlu0 %326
  %328 = vrot.lane.b32.xlu0 %v180, 8
  %v329 = vpop.permute.xlu0 %328
  %330 = vrot.lane.b32.xlu0 %v181, 8
  %v331 = vpop.permute.xlu0 %330
  %332 = vrot.lane.b32.xlu0 %v182, 8
  %v333 = vpop.permute.xlu0 %332
  %334 = vrot.lane.b32.xlu0 %v183, 8
  %v335 = vpop.permute.xlu0 %334
  %368 = vrot.lane.b32.xlu0 %v208, 12
  %v369 = vpop.permute.xlu0 %368
  %370 = vrot.lane.b32.xlu0 %v209, 12
  %v371 = vpop.permute.xlu0 %370
  %372 = vrot.lane.b32.xlu0 %v210, 12
  %v373 = vpop.permute.xlu0 %372
  %374 = vrot.lane.b32.xlu0 %v211, 12
  %v375 = vpop.permute.xlu0 %374
  %376 = vrot.lane.b32.xlu0 %v212, 12
  %v377 = vpop.permute.xlu0 %376
  %378 = vrot.lane.b32.xlu0 %v213, 12
  %v379 = vpop.permute.xlu0 %378
  %380 = vrot.lane.b32.xlu0 %v214, 12
  %v381 = vpop.permute.xlu0 %380
  %382 = vrot.lane.b32.xlu0 %v215, 12
  %v383 = vpop.permute.xlu0 %382
  %384 = vrot.lane.b32.xlu0 %v216, 12
  %v385 = vpop.permute.xlu0 %384
  %386 = vrot.lane.b32.xlu0 %v217, 12
  %v387 = vpop.permute.xlu0 %386
  %388 = vrot.lane.b32.xlu0 %v218, 12
  %v389 = vpop.permute.xlu0 %388
  %390 = vrot.lane.b32.xlu0 %v219, 12
  %v391 = vpop.permute.xlu0 %390
  %392 = vrot.lane.b32.xlu0 %v220, 12
  %v393 = vpop.permute.xlu0 %392
  %394 = vrot.lane.b32.xlu0 %v221, 12
  %v395 = vpop.permute.xlu0 %394
  %396 = vrot.lane.b32.xlu0 %v222, 12
  %v397 = vpop.permute.xlu0 %396
  %398 = vrot.lane.b32.xlu0 %v223, 12
  %v399 = vpop.permute.xlu0 %398
  %vm416 = vcmask 31744
  %v417 = vsel %vm416, %v88, %v241
  %v418 = vsel %vm416, %v89, %v243
  %v419 = vsel %vm416, %v90, %v245
  %v420 = vsel %vm416, %v91, %v247
  %v421 = vsel %vm416, %v92, %v249
  %v422 = vsel %vm416, %v93, %v251
  %v423 = vsel %vm416, %v94, %v253
  %v424 = vsel %vm416, %v95, %v255
  %v425 = vsel %vm416, %v96, %v257
  %v426 = vsel %vm416, %v97, %v259
  %v427 = vsel %vm416, %v98, %v261
  %v428 = vsel %vm416, %v99, %v263
  %v429 = vsel %vm416, %v100, %v265
  %v430 = vsel %vm416, %v101, %v267
  %v431 = vsel %vm416, %v102, %v269
  %v432 = vsel %vm416, %v103, %v271
  %vm433 = vcmask 64512
  %v434 = vsel %vm433, %v417, %v305
  %v435 = vsel %vm433, %v418, %v307
  %v436 = vsel %vm433, %v419, %v309
  %v437 = vsel %vm433, %v420, %v311
  %v438 = vsel %vm433, %v421, %v313
  %v439 = vsel %vm433, %v422, %v315
  %v440 = vsel %vm433, %v423, %v317
  %v441 = vsel %vm433, %v424, %v319
  %v442 = vsel %vm433, %v425, %v321
  %v443 = vsel %vm433, %v426, %v323
  %v444 = vsel %vm433, %v427, %v325
  %v445 = vsel %vm433, %v428, %v327
  %v446 = vsel %vm433, %v429, %v329
  %v447 = vsel %vm433, %v430, %v331
  %v448 = vsel %vm433, %v431, %v333
  %v449 = vsel %vm433, %v432, %v335
  %vm450 = vcmask 97280
  %v451 = vsel %vm450, %v434, %v369
  %v452 = vsel %vm450, %v435, %v371
  %v453 = vsel %vm450, %v436, %v373
  %v454 = vsel %vm450, %v437, %v375
  %v455 = vsel %vm450, %v438, %v377
  %v456 = vsel %vm450, %v439, %v379
  %v457 = vsel %vm450, %v440, %v381
  %v458 = vsel %vm450, %v441, %v383
  %v459 = vsel %vm450, %v442, %v385
  %v460 = vsel %vm450, %v443, %v387
  %v461 = vsel %vm450, %v444, %v389
  %v462 = vsel %vm450, %v445, %v391
  %v463 = vsel %vm450, %v446, %v393
  %v464 = vsel %vm450, %v447, %v395
  %v465 = vsel %vm450, %v448, %v397
  %v466 = vsel %vm450, %v449, %v399
  %vm467 = vcmask 130048
  %468 = vst.msk [vmem:[#allocation2 + $0x7] sm:$0xff] %vm467, 0.0
  %vm469 = vcmask 123904
  %470 = vst.msk [vmem:[#allocation2 + $0xf] sm:$0x3] %vm469, 0.0
  %471 = vst.msk [vmem:[#allocation2 + $0xf7] sm:$0xff] %vm467, 0.0
  %472 = vst.msk [vmem:[#allocation2 + $0xff] sm:$0x3] %vm469, 0.0
  %s473 = scalar_lea.vmem [#allocation2], 216
  %474 = vst.msk [vmem:[%s473 + $0x7] sm:$0xff] %vm467, 0.0
  %475 = vst.msk [vmem:[%s473 + $0xf] sm:$0x3] %vm469, 0.0
  %476 = vst.msk [vmem:[%s473 + $0xf7] sm:$0xff] %vm467, 0.0
  %477 = vst.msk [vmem:[%s473 + $0xff] sm:$0x3] %vm469, 0.0
  %s478 = scalar_lea.vmem [#allocation2], 24
  %vm479 = vcmask 122880
  %480 = vst.msk [vmem:[%s478 + $0x7] sm:$0x1] %vm479, 0.0
  %481 = vst.msk [vmem:[%s478 + $0x1f] sm:$0x1] %vm479, 0.0
  %482 = vst.msk [vmem:[%s478 + $0x37] sm:$0x1] %vm479, 0.0
  %483 = vst.msk [vmem:[%s478 + $0x4f] sm:$0x1] %vm479, 0.0
  %484 = vst.msk [vmem:[%s478 + $0x67] sm:$0x1] %vm479, 0.0
  %485 = vst.msk [vmem:[%s478 + $0x7f] sm:$0x1] %vm479, 0.0
  %486 = vst.msk [vmem:[%s478 + $0x97] sm:$0x1] %vm479, 0.0
  %487 = vst.msk [vmem:[%s478 + $0xaf] sm:$0x1] %vm479, 0.0
  %488 = vst.msk [vmem:[%s478 + $0xf7] sm:$0x1] %vm479, 0.0
  %489 = vst.msk [vmem:[%s478 + $0x10f] sm:$0x1] %vm479, 0.0
  %490 = vst.msk [vmem:[%s478 + $0x127] sm:$0x1] %vm479, 0.0
  %491 = vst.msk [vmem:[%s478 + $0x13f] sm:$0x1] %vm479, 0.0
  %492 = vst.msk [vmem:[%s478 + $0x157] sm:$0x1] %vm479, 0.0
  %493 = vst.msk [vmem:[%s478 + $0x16f] sm:$0x1] %vm479, 0.0
  %494 = vst.msk [vmem:[%s478 + $0x187] sm:$0x1] %vm479, 0.0
  %495 = vst.msk [vmem:[%s478 + $0x19f] sm:$0x1] %vm479, 0.0
  %496 = vst.msk [vmem:[%s478 + $0x10] sm:$0x1] %vm479, 0.0
  %497 = vst.msk [vmem:[%s478 + $0x28] sm:$0x1] %vm479, 0.0
  %498 = vst.msk [vmem:[%s478 + $0x40] sm:$0x1] %vm479, 0.0
  %499 = vst.msk [vmem:[%s478 + $0x58] sm:$0x1] %vm479, 0.0
  %500 = vst.msk [vmem:[%s478 + $0x70] sm:$0x1] %vm479, 0.0
  %501 = vst.msk [vmem:[%s478 + $0x88] sm:$0x1] %vm479, 0.0
  %502 = vst.msk [vmem:[%s478 + $0xa0] sm:$0x1] %vm479, 0.0
  %503 = vst.msk [vmem:[%s478 + $0xb8] sm:$0x1] %vm479, 0.0
  %504 = vst.msk [vmem:[%s478 + $0x100] sm:$0x1] %vm479, 0.0
  %505 = vst.msk [vmem:[%s478 + $0x118] sm:$0x1] %vm479, 0.0
  %506 = vst.msk [vmem:[%s478 + $0x130] sm:$0x1] %vm479, 0.0
  %507 = vst.msk [vmem:[%s478 + $0x148] sm:$0x1] %vm479, 0.0
  %508 = vst.msk [vmem:[%s478 + $0x160] sm:$0x1] %vm479, 0.0
  %509 = vst.msk [vmem:[%s478 + $0x178] sm:$0x1] %vm479, 0.0
  %510 = vst.msk [vmem:[%s478 + $0x190] sm:$0x1] %vm479, 0.0
  %511 = vst.msk [vmem:[%s478 + $0x1a8] sm:$0x1] %vm479, 0.0
  %512 = vst.msk [vmem:[%s478 + $0x8] sm:$0xff] %vm467, %v451
  %513 = vst.msk [vmem:[%s478 + $0x20] sm:$0xff] %vm467, %v452
  %514 = vst.msk [vmem:[%s478 + $0x38] sm:$0xff] %vm467, %v453
  %515 = vst.msk [vmem:[%s478 + $0x50] sm:$0xff] %vm467, %v454
  %516 = vst.msk [vmem:[%s478 + $0x68] sm:$0xff] %vm467, %v455
  %517 = vst.msk [vmem:[%s478 + $0x80] sm:$0xff] %vm467, %v456
  %518 = vst.msk [vmem:[%s478 + $0x98] sm:$0xff] %vm467, %v457
  %519 = vst.msk [vmem:[%s478 + $0xb0] sm:$0xff] %vm467, %v458
  %520 = vst.msk [vmem:[%s478 + $0xf8] sm:$0xff] %vm467, %v459
  %521 = vst.msk [vmem:[%s478 + $0x110] sm:$0xff] %vm467, %v460
  %522 = vst.msk [vmem:[%s478 + $0x128] sm:$0xff] %vm467, %v461
  %523 = vst.msk [vmem:[%s478 + $0x140] sm:$0xff] %vm467, %v462
  %524 = vst.msk [vmem:[%s478 + $0x158] sm:$0xff] %vm467, %v463
  %525 = vst.msk [vmem:[%s478 + $0x170] sm:$0xff] %vm467, %v464
  %526 = vst.msk [vmem:[%s478 + $0x188] sm:$0xff] %vm467, %v465
  %527 = vst.msk [vmem:[%s478 + $0x1a0] sm:$0xff] %vm467, %v466
  %v528 = vld [vmem:[#allocation2 + $0x7] sm:$0xff]
  %v529 = vld [vmem:[#allocation2 + $0x1f] sm:$0xff]
  %v530 = vld [vmem:[#allocation2 + $0x37] sm:$0xff]
  %v531 = vld [vmem:[#allocation2 + $0x4f] sm:$0xff]
  %v532 = vld [vmem:[#allocation2 + $0x67] sm:$0xff]
  %v533 = vld [vmem:[#allocation2 + $0x7f] sm:$0xff]
  %v534 = vld [vmem:[#allocation2 + $0x97] sm:$0xff]
  %v535 = vld [vmem:[#allocation2 + $0xaf] sm:$0xff]
  %v536 = vld [vmem:[#allocation2 + $0xf7] sm:$0xff]
  %v537 = vld [vmem:[#allocation2 + $0x10f] sm:$0xff]
  %v538 = vld [vmem:[#allocation2 + $0x127] sm:$0xff]
  %v539 = vld [vmem:[#allocation2 + $0x13f] sm:$0xff]
  %v540 = vld [vmem:[#allocation2 + $0x157] sm:$0xff]
  %v541 = vld [vmem:[#allocation2 + $0x16f] sm:$0xff]
  %v542 = vld [vmem:[#allocation2 + $0x187] sm:$0xff]
  %v543 = vld [vmem:[#allocation2 + $0x19f] sm:$0xff]
  %v544 = vpack.c.bf16 %v528, %v528
  %v545 = vpack.c.bf16 %v529, %v529
  %v546 = vpack.c.bf16 %v530, %v530
  %v547 = vpack.c.bf16 %v531, %v531
  %v548 = vpack.c.bf16 %v532, %v532
  %v549 = vpack.c.bf16 %v533, %v533
  %v550 = vpack.c.bf16 %v534, %v534
  %v551 = vpack.c.bf16 %v535, %v535
  %v552 = vpack.c.bf16 %v536, %v536
  %v553 = vpack.c.bf16 %v537, %v537
  %v554 = vpack.c.bf16 %v538, %v538
  %v555 = vpack.c.bf16 %v539, %v539
  %v556 = vpack.c.bf16 %v540, %v540
  %v557 = vpack.c.bf16 %v541, %v541
  %v558 = vpack.c.bf16 %v542, %v542
  %v559 = vpack.c.bf16 %v543, %v543
  %v560 = vld [vmem:[#allocation2 + $0x8] sm:$0xff]
  %v561 = vld [vmem:[#allocation2 + $0x20] sm:$0xff]
  %v562 = vld [vmem:[#allocation2 + $0x38] sm:$0xff]
  %v563 = vld [vmem:[#allocation2 + $0x50] sm:$0xff]
  %v564 = vld [vmem:[#allocation2 + $0x68] sm:$0xff]
  %v565 = vld [vmem:[#allocation2 + $0x80] sm:$0xff]
  %v566 = vld [vmem:[#allocation2 + $0x98] sm:$0xff]
  %v567 = vld [vmem:[#allocation2 + $0xb0] sm:$0xff]
  %v568 = vld [vmem:[#allocation2 + $0xf8] sm:$0xff]
  %v569 = vld [vmem:[#allocation2 + $0x110] sm:$0xff]
  %v570 = vld [vmem:[#allocation2 + $0x128] sm:$0xff]
  %v571 = vld [vmem:[#allocation2 + $0x140] sm:$0xff]
  %v572 = vld [vmem:[#allocation2 + $0x158] sm:$0xff]
  %v573 = vld [vmem:[#allocation2 + $0x170] sm:$0xff]
  %v574 = vld [vmem:[#allocation2 + $0x188] sm:$0xff]
  %v575 = vld [vmem:[#allocation2 + $0x1a0] sm:$0xff]
  %v576 = vpack.c.bf16 %v560, %v560
  %v577 = vpack.c.bf16 %v561, %v561
  %v578 = vpack.c.bf16 %v562, %v562
  %v579 = vpack.c.bf16 %v563, %v563
  %v580 = vpack.c.bf16 %v564, %v564
  %v581 = vpack.c.bf16 %v565, %v565
  %v582 = vpack.c.bf16 %v566, %v566
  %v583 = vpack.c.bf16 %v567, %v567
  %v584 = vpack.c.bf16 %v568, %v568
  %v585 = vpack.c.bf16 %v569, %v569
  %v586 = vpack.c.bf16 %v570, %v570
  %v587 = vpack.c.bf16 %v571, %v571
  %v588 = vpack.c.bf16 %v572, %v572
  %v589 = vpack.c.bf16 %v573, %v573
  %v590 = vpack.c.bf16 %v574, %v574
  %v591 = vpack.c.bf16 %v575, %v575
  %v592 = vld [vmem:[#allocation2 + $0x9] sm:$0xff]
  %v593 = vld [vmem:[#allocation2 + $0x21] sm:$0xff]
  %v594 = vld [vmem:[#allocation2 + $0x39] sm:$0xff]
  %v595 = vld [vmem:[#allocation2 + $0x51] sm:$0xff]
  %v596 = vld [vmem:[#allocation2 + $0x69] sm:$0xff]
  %v597 = vld [vmem:[#allocation2 + $0x81] sm:$0xff]
  %v598 = vld [vmem:[#allocation2 + $0x99] sm:$0xff]
  %v599 = vld [vmem:[#allocation2 + $0xb1] sm:$0xff]
  %v600 = vld [vmem:[#allocation2 + $0xf9] sm:$0xff]
  %v601 = vld [vmem:[#allocation2 + $0x111] sm:$0xff]
  %v602 = vld [vmem:[#allocation2 + $0x129] sm:$0xff]
  %v603 = vld [vmem:[#allocation2 + $0x141] sm:$0xff]
  %v604 = vld [vmem:[#allocation2 + $0x159] sm:$0xff]
  %v605 = vld [vmem:[#allocation2 + $0x171] sm:$0xff]
  %v606 = vld [vmem:[#allocation2 + $0x189] sm:$0xff]
  %v607 = vld [vmem:[#allocation2 + $0x1a1] sm:$0xff]
  %v608 = vpack.c.bf16 %v592, %v592
  %v609 = vpack.c.bf16 %v593, %v593
  %v610 = vpack.c.bf16 %v594, %v594
  %v611 = vpack.c.bf16 %v595, %v595
  %v612 = vpack.c.bf16 %v596, %v596
  %v613 = vpack.c.bf16 %v597, %v597
  %v614 = vpack.c.bf16 %v598, %v598
  %v615 = vpack.c.bf16 %v599, %v599
  %v616 = vpack.c.bf16 %v600, %v600
  %v617 = vpack.c.bf16 %v601, %v601
  %v618 = vpack.c.bf16 %v602, %v602
  %v619 = vpack.c.bf16 %v603, %v603
  %v620 = vpack.c.bf16 %v604, %v604
  %v621 = vpack.c.bf16 %v605, %v605
  %v622 = vpack.c.bf16 %v606, %v606
  %v623 = vpack.c.bf16 %v607, %v607
  %v624 = vld [vmem:[%s478 + $0x7] sm:$0xff]
  %v625 = vld [vmem:[%s478 + $0x1f] sm:$0xff]
  %v626 = vld [vmem:[%s478 + $0x37] sm:$0xff]
  %v627 = vld [vmem:[%s478 + $0x4f] sm:$0xff]
  %v628 = vld [vmem:[%s478 + $0x67] sm:$0xff]
  %v629 = vld [vmem:[%s478 + $0x7f] sm:$0xff]
  %v630 = vld [vmem:[%s478 + $0x97] sm:$0xff]
  %v631 = vld [vmem:[%s478 + $0xaf] sm:$0xff]
  %v632 = vld [vmem:[%s478 + $0xf7] sm:$0xff]
  %v633 = vld [vmem:[%s478 + $0x10f] sm:$0xff]
  %v634 = vld [vmem:[%s478 + $0x127] sm:$0xff]
  %v635 = vld [vmem:[%s478 + $0x13f] sm:$0xff]
  %v636 = vld [vmem:[%s478 + $0x157] sm:$0xff]
  %v637 = vld [vmem:[%s478 + $0x16f] sm:$0xff]
  %v638 = vld [vmem:[%s478 + $0x187] sm:$0xff]
  %v639 = vld [vmem:[%s478 + $0x19f] sm:$0xff]
  %v640 = vpack.c.bf16 %v624, %v624
  %v641 = vpack.c.bf16 %v625, %v625
  %v642 = vpack.c.bf16 %v626, %v626
  %v643 = vpack.c.bf16 %v627, %v627
  %v644 = vpack.c.bf16 %v628, %v628
  %v645 = vpack.c.bf16 %v629, %v629
  %v646 = vpack.c.bf16 %v630, %v630
  %v647 = vpack.c.bf16 %v631, %v631
  %v648 = vpack.c.bf16 %v632, %v632
  %v649 = vpack.c.bf16 %v633, %v633
  %v650 = vpack.c.bf16 %v634, %v634
  %v651 = vpack.c.bf16 %v635, %v635
  %v652 = vpack.c.bf16 %v636, %v636
  %v653 = vpack.c.bf16 %v637, %v637
  %v654 = vpack.c.bf16 %v638, %v638
  %v655 = vpack.c.bf16 %v639, %v639
  %v656 = vld [vmem:[%s478 + $0x8] sm:$0xff]
  %v657 = vld [vmem:[%s478 + $0x20] sm:$0xff]
  %v658 = vld [vmem:[%s478 + $0x38] sm:$0xff]
  %v659 = vld [vmem:[%s478 + $0x50] sm:$0xff]
  %v660 = vld [vmem:[%s478 + $0x68] sm:$0xff]
  %v661 = vld [vmem:[%s478 + $0x80] sm:$0xff]
  %v662 = vld [vmem:[%s478 + $0x98] sm:$0xff]
  %v663 = vld [vmem:[%s478 + $0xb0] sm:$0xff]
  %v664 = vld [vmem:[%s478 + $0xf8] sm:$0xff]
  %v665 = vld [vmem:[%s478 + $0x110] sm:$0xff]
  %v666 = vld [vmem:[%s478 + $0x128] sm:$0xff]
  %v667 = vld [vmem:[%s478 + $0x140] sm:$0xff]
  %v668 = vld [vmem:[%s478 + $0x158] sm:$0xff]
  %v669 = vld [vmem:[%s478 + $0x170] sm:$0xff]
  %v670 = vld [vmem:[%s478 + $0x188] sm:$0xff]
  %v671 = vld [vmem:[%s478 + $0x1a0] sm:$0xff]
  %v672 = vpack.c.bf16 %v656, %v656
  %v673 = vpack.c.bf16 %v657, %v657
  %v674 = vpack.c.bf16 %v658, %v658
  %v675 = vpack.c.bf16 %v659, %v659
  %v676 = vpack.c.bf16 %v660, %v660
  %v677 = vpack.c.bf16 %v661, %v661
  %v678 = vpack.c.bf16 %v662, %v662
  %v679 = vpack.c.bf16 %v663, %v663
  %v680 = vpack.c.bf16 %v664, %v664
  %v681 = vpack.c.bf16 %v665, %v665
  %v682 = vpack.c.bf16 %v666, %v666
  %v683 = vpack.c.bf16 %v667, %v667
  %v684 = vpack.c.bf16 %v668, %v668
  %v685 = vpack.c.bf16 %v669, %v669
  %v686 = vpack.c.bf16 %v670, %v670
  %v687 = vpack.c.bf16 %v671, %v671
  %v688 = vld [vmem:[%s478 + $0x9] sm:$0xff]
  %v689 = vld [vmem:[%s478 + $0x21] sm:$0xff]
  %v690 = vld [vmem:[%s478 + $0x39] sm:$0xff]
  %v691 = vld [vmem:[%s478 + $0x51] sm:$0xff]
  %v692 = vld [vmem:[%s478 + $0x69] sm:$0xff]
  %v693 = vld [vmem:[%s478 + $0x81] sm:$0xff]
  %v694 = vld [vmem:[%s478 + $0x99] sm:$0xff]
  %v695 = vld [vmem:[%s478 + $0xb1] sm:$0xff]
  %v696 = vld [vmem:[%s478 + $0xf9] sm:$0xff]
  %v697 = vld [vmem:[%s478 + $0x111] sm:$0xff]
  %v698 = vld [vmem:[%s478 + $0x129] sm:$0xff]
  %v699 = vld [vmem:[%s478 + $0x141] sm:$0xff]
  %v700 = vld [vmem:[%s478 + $0x159] sm:$0xff]
  %v701 = vld [vmem:[%s478 + $0x171] sm:$0xff]
  %v702 = vld [vmem:[%s478 + $0x189] sm:$0xff]
  %v703 = vld [vmem:[%s478 + $0x1a1] sm:$0xff]
  %v704 = vpack.c.bf16 %v688, %v688
  %v705 = vpack.c.bf16 %v689, %v689
  %v706 = vpack.c.bf16 %v690, %v690
  %v707 = vpack.c.bf16 %v691, %v691
  %v708 = vpack.c.bf16 %v692, %v692
  %v709 = vpack.c.bf16 %v693, %v693
  %v710 = vpack.c.bf16 %v694, %v694
  %v711 = vpack.c.bf16 %v695, %v695
  %v712 = vpack.c.bf16 %v696, %v696
  %v713 = vpack.c.bf16 %v697, %v697
  %v714 = vpack.c.bf16 %v698, %v698
  %v715 = vpack.c.bf16 %v699, %v699
  %v716 = vpack.c.bf16 %v700, %v700
  %v717 = vpack.c.bf16 %v701, %v701
  %v718 = vpack.c.bf16 %v702, %v702
  %v719 = vpack.c.bf16 %v703, %v703
  %s720 = scalar_lea.vmem [#allocation2], 48
  %v721 = vld [vmem:[%s720 + $0x7] sm:$0xff]
  %v722 = vld [vmem:[%s720 + $0x1f] sm:$0xff]
  %v723 = vld [vmem:[%s720 + $0x37] sm:$0xff]
  %v724 = vld [vmem:[%s720 + $0x4f] sm:$0xff]
  %v725 = vld [vmem:[%s720 + $0x67] sm:$0xff]
  %v726 = vld [vmem:[%s720 + $0x7f] sm:$0xff]
  %v727 = vld [vmem:[%s720 + $0x97] sm:$0xff]
  %v728 = vld [vmem:[%s720 + $0xaf] sm:$0xff]
  %v729 = vld [vmem:[%s720 + $0xf7] sm:$0xff]
  %v730 = vld [vmem:[%s720 + $0x10f] sm:$0xff]
  %v731 = vld [vmem:[%s720 + $0x127] sm:$0xff]
  %v732 = vld [vmem:[%s720 + $0x13f] sm:$0xff]
  %v733 = vld [vmem:[%s720 + $0x157] sm:$0xff]
  %v734 = vld [vmem:[%s720 + $0x16f] sm:$0xff]
  %v735 = vld [vmem:[%s720 + $0x187] sm:$0xff]
  %v736 = vld [vmem:[%s720 + $0x19f] sm:$0xff]
  %v737 = vpack.c.bf16 %v721, %v721
  %v738 = vpack.c.bf16 %v722, %v722
  %v739 = vpack.c.bf16 %v723, %v723
  %v740 = vpack.c.bf16 %v724, %v724
  %v741 = vpack.c.bf16 %v725, %v725
  %v742 = vpack.c.bf16 %v726, %v726
  %v743 = vpack.c.bf16 %v727, %v727
  %v744 = vpack.c.bf16 %v728, %v728
  %v745 = vpack.c.bf16 %v729, %v729
  %v746 = vpack.c.bf16 %v730, %v730
  %v747 = vpack.c.bf16 %v731, %v731
  %v748 = vpack.c.bf16 %v732, %v732
  %v749 = vpack.c.bf16 %v733, %v733
  %v750 = vpack.c.bf16 %v734, %v734
  %v751 = vpack.c.bf16 %v735, %v735
  %v752 = vpack.c.bf16 %v736, %v736
  %v753 = vld [vmem:[%s720 + $0x8] sm:$0xff]
  %v754 = vld [vmem:[%s720 + $0x20] sm:$0xff]
  %v755 = vld [vmem:[%s720 + $0x38] sm:$0xff]
  %v756 = vld [vmem:[%s720 + $0x50] sm:$0xff]
  %v757 = vld [vmem:[%s720 + $0x68] sm:$0xff]
  %v758 = vld [vmem:[%s720 + $0x80] sm:$0xff]
  %v759 = vld [vmem:[%s720 + $0x98] sm:$0xff]
  %v760 = vld [vmem:[%s720 + $0xb0] sm:$0xff]
  %v761 = vld [vmem:[%s720 + $0xf8] sm:$0xff]
  %v762 = vld [vmem:[%s720 + $0x110] sm:$0xff]
  %v763 = vld [vmem:[%s720 + $0x128] sm:$0xff]
  %v764 = vld [vmem:[%s720 + $0x140] sm:$0xff]
  %v765 = vld [vmem:[%s720 + $0x158] sm:$0xff]
  %v766 = vld [vmem:[%s720 + $0x170] sm:$0xff]
  %v767 = vld [vmem:[%s720 + $0x188] sm:$0xff]
  %v768 = vld [vmem:[%s720 + $0x1a0] sm:$0xff]
  %v769 = vpack.c.bf16 %v753, %v753
  %v770 = vpack.c.bf16 %v754, %v754
  %v771 = vpack.c.bf16 %v755, %v755
  %v772 = vpack.c.bf16 %v756, %v756
  %v773 = vpack.c.bf16 %v757, %v757
  %v774 = vpack.c.bf16 %v758, %v758
  %v775 = vpack.c.bf16 %v759, %v759
  %v776 = vpack.c.bf16 %v760, %v760
  %v777 = vpack.c.bf16 %v761, %v761
  %v778 = vpack.c.bf16 %v762, %v762
  %v779 = vpack.c.bf16 %v763, %v763
  %v780 = vpack.c.bf16 %v764, %v764
  %v781 = vpack.c.bf16 %v765, %v765
  %v782 = vpack.c.bf16 %v766, %v766
  %v783 = vpack.c.bf16 %v767, %v767
  %v784 = vpack.c.bf16 %v768, %v768
  %v785 = vld [vmem:[%s720 + $0x9] sm:$0xff]
  %v786 = vld [vmem:[%s720 + $0x21] sm:$0xff]
  %v787 = vld [vmem:[%s720 + $0x39] sm:$0xff]
  %v788 = vld [vmem:[%s720 + $0x51] sm:$0xff]
  %v789 = vld [vmem:[%s720 + $0x69] sm:$0xff]
  %v790 = vld [vmem:[%s720 + $0x81] sm:$0xff]
  %v791 = vld [vmem:[%s720 + $0x99] sm:$0xff]
  %v792 = vld [vmem:[%s720 + $0xb1] sm:$0xff]
  %v793 = vld [vmem:[%s720 + $0xf9] sm:$0xff]
  %v794 = vld [vmem:[%s720 + $0x111] sm:$0xff]
  %v795 = vld [vmem:[%s720 + $0x129] sm:$0xff]
  %v796 = vld [vmem:[%s720 + $0x141] sm:$0xff]
  %v797 = vld [vmem:[%s720 + $0x159] sm:$0xff]
  %v798 = vld [vmem:[%s720 + $0x171] sm:$0xff]
  %v799 = vld [vmem:[%s720 + $0x189] sm:$0xff]
  %v800 = vld [vmem:[%s720 + $0x1a1] sm:$0xff]
  %v801 = vpack.c.bf16 %v785, %v785
  %v802 = vpack.c.bf16 %v786, %v786
  %v803 = vpack.c.bf16 %v787, %v787
  %v804 = vpack.c.bf16 %v788, %v788
  %v805 = vpack.c.bf16 %v789, %v789
  %v806 = vpack.c.bf16 %v790, %v790
  %v807 = vpack.c.bf16 %v791, %v791
  %v808 = vpack.c.bf16 %v792, %v792
  %v809 = vpack.c.bf16 %v793, %v793
  %v810 = vpack.c.bf16 %v794, %v794
  %v811 = vpack.c.bf16 %v795, %v795
  %v812 = vpack.c.bf16 %v796, %v796
  %v813 = vpack.c.bf16 %v797, %v797
  %v814 = vpack.c.bf16 %v798, %v798
  %v815 = vpack.c.bf16 %v799, %v799
  %v816 = vpack.c.bf16 %v800, %v800
  %v833 = vunpack.c.l.b16 %v544
  %v834 = vunpack.c.l.b16 %v545
  %v835 = vunpack.c.l.b16 %v546
  %v836 = vunpack.c.l.b16 %v547
  %v837 = vunpack.c.l.b16 %v548
  %v838 = vunpack.c.l.b16 %v549
  %v839 = vunpack.c.l.b16 %v550
  %v840 = vunpack.c.l.b16 %v551
  %v841 = vunpack.c.l.b16 %v552
  %v842 = vunpack.c.l.b16 %v553
  %v843 = vunpack.c.l.b16 %v554
  %v844 = vunpack.c.l.b16 %v555
  %v845 = vunpack.c.l.b16 %v556
  %v846 = vunpack.c.l.b16 %v557
  %v847 = vunpack.c.l.b16 %v558
  %v848 = vunpack.c.l.b16 %v559
  %v849 = vpack.c.b16 %v834, %v833
  %v850 = vpack.c.b16 %v836, %v835
  %v851 = vpack.c.b16 %v838, %v837
  %v852 = vpack.c.b16 %v840, %v839
  %v853 = vpack.c.b16 %v842, %v841
  %v854 = vpack.c.b16 %v844, %v843
  %v855 = vpack.c.b16 %v846, %v845
  %v856 = vpack.c.b16 %v848, %v847
  %v873 = vunpack.c.l.b16 %v576
  %v874 = vunpack.c.l.b16 %v577
  %v875 = vunpack.c.l.b16 %v578
  %v876 = vunpack.c.l.b16 %v579
  %v877 = vunpack.c.l.b16 %v580
  %v878 = vunpack.c.l.b16 %v581
  %v879 = vunpack.c.l.b16 %v582
  %v880 = vunpack.c.l.b16 %v583
  %v881 = vunpack.c.l.b16 %v584
  %v882 = vunpack.c.l.b16 %v585
  %v883 = vunpack.c.l.b16 %v586
  %v884 = vunpack.c.l.b16 %v587
  %v885 = vunpack.c.l.b16 %v588
  %v886 = vunpack.c.l.b16 %v589
  %v887 = vunpack.c.l.b16 %v590
  %v888 = vunpack.c.l.b16 %v591
  %v889 = vpack.c.b16 %v874, %v873
  %v890 = vpack.c.b16 %v876, %v875
  %v891 = vpack.c.b16 %v878, %v877
  %v892 = vpack.c.b16 %v880, %v879
  %v893 = vpack.c.b16 %v882, %v881
  %v894 = vpack.c.b16 %v884, %v883
  %v895 = vpack.c.b16 %v886, %v885
  %v896 = vpack.c.b16 %v888, %v887
  %897 = vrot.lane.b32.xlu0 %v889, 16
  %v898 = vpop.permute.xlu0 %897
  %899 = vrot.lane.b32.xlu0 %v890, 16
  %v900 = vpop.permute.xlu0 %899
  %901 = vrot.lane.b32.xlu0 %v891, 16
  %v902 = vpop.permute.xlu0 %901
  %903 = vrot.lane.b32.xlu0 %v892, 16
  %v904 = vpop.permute.xlu0 %903
  %905 = vrot.lane.b32.xlu0 %v893, 16
  %v906 = vpop.permute.xlu0 %905
  %907 = vrot.lane.b32.xlu0 %v894, 16
  %v908 = vpop.permute.xlu0 %907
  %909 = vrot.lane.b32.xlu0 %v895, 16
  %v910 = vpop.permute.xlu0 %909
  %911 = vrot.lane.b32.xlu0 %v896, 16
  %v912 = vpop.permute.xlu0 %911
  %v929 = vunpack.c.l.b16 %v608
  %v930 = vunpack.c.l.b16 %v609
  %v931 = vunpack.c.l.b16 %v610
  %v932 = vunpack.c.l.b16 %v611
  %v933 = vunpack.c.l.b16 %v612
  %v934 = vunpack.c.l.b16 %v613
  %v935 = vunpack.c.l.b16 %v614
  %v936 = vunpack.c.l.b16 %v615
  %v937 = vunpack.c.l.b16 %v616
  %v938 = vunpack.c.l.b16 %v617
  %v939 = vunpack.c.l.b16 %v618
  %v940 = vunpack.c.l.b16 %v619
  %v941 = vunpack.c.l.b16 %v620
  %v942 = vunpack.c.l.b16 %v621
  %v943 = vunpack.c.l.b16 %v622
  %v944 = vunpack.c.l.b16 %v623
  %v945 = vpack.c.b16 %v930, %v929
  %v946 = vpack.c.b16 %v932, %v931
  %v947 = vpack.c.b16 %v934, %v933
  %v948 = vpack.c.b16 %v936, %v935
  %v949 = vpack.c.b16 %v938, %v937
  %v950 = vpack.c.b16 %v940, %v939
  %v951 = vpack.c.b16 %v942, %v941
  %v952 = vpack.c.b16 %v944, %v943
  %953 = vrot.lane.b32.xlu0 %v945, 32
  %v954 = vpop.permute.xlu0 %953
  %955 = vrot.lane.b32.xlu0 %v946, 32
  %v956 = vpop.permute.xlu0 %955
  %957 = vrot.lane.b32.xlu0 %v947, 32
  %v958 = vpop.permute.xlu0 %957
  %959 = vrot.lane.b32.xlu0 %v948, 32
  %v960 = vpop.permute.xlu0 %959
  %961 = vrot.lane.b32.xlu0 %v949, 32
  %v962 = vpop.permute.xlu0 %961
  %963 = vrot.lane.b32.xlu0 %v950, 32
  %v964 = vpop.permute.xlu0 %963
  %965 = vrot.lane.b32.xlu0 %v951, 32
  %v966 = vpop.permute.xlu0 %965
  %967 = vrot.lane.b32.xlu0 %v952, 32
  %v968 = vpop.permute.xlu0 %967
  %v985 = vunpack.c.l.b16 %v640
  %v986 = vunpack.c.l.b16 %v641
  %v987 = vunpack.c.l.b16 %v642
  %v988 = vunpack.c.l.b16 %v643
  %v989 = vunpack.c.l.b16 %v644
  %v990 = vunpack.c.l.b16 %v645
  %v991 = vunpack.c.l.b16 %v646
  %v992 = vunpack.c.l.b16 %v647
  %v993 = vunpack.c.l.b16 %v648
  %v994 = vunpack.c.l.b16 %v649
  %v995 = vunpack.c.l.b16 %v650
  %v996 = vunpack.c.l.b16 %v651
  %v997 = vunpack.c.l.b16 %v652
  %v998 = vunpack.c.l.b16 %v653
  %v999 = vunpack.c.l.b16 %v654
  %v1000 = vunpack.c.l.b16 %v655
  %v1001 = vpack.c.b16 %v986, %v985
  %v1002 = vpack.c.b16 %v988, %v987
  %v1003 = vpack.c.b16 %v990, %v989
  %v1004 = vpack.c.b16 %v992, %v991
  %v1005 = vpack.c.b16 %v994, %v993
  %v1006 = vpack.c.b16 %v996, %v995
  %v1007 = vpack.c.b16 %v998, %v997
  %v1008 = vpack.c.b16 %v1000, %v999
  %1009 = vrot.lane.b32.xlu0 %v1001, 48
  %v1010 = vpop.permute.xlu0 %1009
  %1011 = vrot.lane.b32.xlu0 %v1002, 48
  %v1012 = vpop.permute.xlu0 %1011
  %1013 = vrot.lane.b32.xlu0 %v1003, 48
  %v1014 = vpop.permute.xlu0 %1013
  %1015 = vrot.lane.b32.xlu0 %v1004, 48
  %v1016 = vpop.permute.xlu0 %1015
  %1017 = vrot.lane.b32.xlu0 %v1005, 48
  %v1018 = vpop.permute.xlu0 %1017
  %1019 = vrot.lane.b32.xlu0 %v1006, 48
  %v1020 = vpop.permute.xlu0 %1019
  %1021 = vrot.lane.b32.xlu0 %v1007, 48
  %v1022 = vpop.permute.xlu0 %1021
  %1023 = vrot.lane.b32.xlu0 %v1008, 48
  %v1024 = vpop.permute.xlu0 %1023
  %v1041 = vunpack.c.l.b16 %v672
  %v1042 = vunpack.c.l.b16 %v673
  %v1043 = vunpack.c.l.b16 %v674
  %v1044 = vunpack.c.l.b16 %v675
  %v1045 = vunpack.c.l.b16 %v676
  %v1046 = vunpack.c.l.b16 %v677
  %v1047 = vunpack.c.l.b16 %v678
  %v1048 = vunpack.c.l.b16 %v679
  %v1049 = vunpack.c.l.b16 %v680
  %v1050 = vunpack.c.l.b16 %v681
  %v1051 = vunpack.c.l.b16 %v682
  %v1052 = vunpack.c.l.b16 %v683
  %v1053 = vunpack.c.l.b16 %v684
  %v1054 = vunpack.c.l.b16 %v685
  %v1055 = vunpack.c.l.b16 %v686
  %v1056 = vunpack.c.l.b16 %v687
  %v1057 = vpack.c.b16 %v1042, %v1041
  %v1058 = vpack.c.b16 %v1044, %v1043
  %v1059 = vpack.c.b16 %v1046, %v1045
  %v1060 = vpack.c.b16 %v1048, %v1047
  %v1061 = vpack.c.b16 %v1050, %v1049
  %v1062 = vpack.c.b16 %v1052, %v1051
  %v1063 = vpack.c.b16 %v1054, %v1053
  %v1064 = vpack.c.b16 %v1056, %v1055
  %1065 = vrot.lane.b32.xlu0 %v1057, 64
  %v1066 = vpop.permute.xlu0 %1065
  %1067 = vrot.lane.b32.xlu0 %v1058, 64
  %v1068 = vpop.permute.xlu0 %1067
  %1069 = vrot.lane.b32.xlu0 %v1059, 64
  %v1070 = vpop.permute.xlu0 %1069
  %1071 = vrot.lane.b32.xlu0 %v1060, 64
  %v1072 = vpop.permute.xlu0 %1071
  %1073 = vrot.lane.b32.xlu0 %v1061, 64
  %v1074 = vpop.permute.xlu0 %1073
  %1075 = vrot.lane.b32.xlu0 %v1062, 64
  %v1076 = vpop.permute.xlu0 %1075
  %1077 = vrot.lane.b32.xlu0 %v1063, 64
  %v1078 = vpop.permute.xlu0 %1077
  %1079 = vrot.lane.b32.xlu0 %v1064, 64
  %v1080 = vpop.permute.xlu0 %1079
  %v1097 = vunpack.c.l.b16 %v704
  %v1098 = vunpack.c.l.b16 %v705
  %v1099 = vunpack.c.l.b16 %v706
  %v1100 = vunpack.c.l.b16 %v707
  %v1101 = vunpack.c.l.b16 %v708
  %v1102 = vunpack.c.l.b16 %v709
  %v1103 = vunpack.c.l.b16 %v710
  %v1104 = vunpack.c.l.b16 %v711
  %v1105 = vunpack.c.l.b16 %v712
  %v1106 = vunpack.c.l.b16 %v713
  %v1107 = vunpack.c.l.b16 %v714
  %v1108 = vunpack.c.l.b16 %v715
  %v1109 = vunpack.c.l.b16 %v716
  %v1110 = vunpack.c.l.b16 %v717
  %v1111 = vunpack.c.l.b16 %v718
  %v1112 = vunpack.c.l.b16 %v719
  %v1113 = vpack.c.b16 %v1098, %v1097
  %v1114 = vpack.c.b16 %v1100, %v1099
  %v1115 = vpack.c.b16 %v1102, %v1101
  %v1116 = vpack.c.b16 %v1104, %v1103
  %v1117 = vpack.c.b16 %v1106, %v1105
  %v1118 = vpack.c.b16 %v1108, %v1107
  %v1119 = vpack.c.b16 %v1110, %v1109
  %v1120 = vpack.c.b16 %v1112, %v1111
  %1121 = vrot.lane.b32.xlu0 %v1113, 80
  %v1122 = vpop.permute.xlu0 %1121
  %1123 = vrot.lane.b32.xlu0 %v1114, 80
  %v1124 = vpop.permute.xlu0 %1123
  %1125 = vrot.lane.b32.xlu0 %v1115, 80
  %v1126 = vpop.permute.xlu0 %1125
  %1127 = vrot.lane.b32.xlu0 %v1116, 80
  %v1128 = vpop.permute.xlu0 %1127
  %1129 = vrot.lane.b32.xlu0 %v1117, 80
  %v1130 = vpop.permute.xlu0 %1129
  %1131 = vrot.lane.b32.xlu0 %v1118, 80
  %v1132 = vpop.permute.xlu0 %1131
  %1133 = vrot.lane.b32.xlu0 %v1119, 80
  %v1134 = vpop.permute.xlu0 %1133
  %1135 = vrot.lane.b32.xlu0 %v1120, 80
  %v1136 = vpop.permute.xlu0 %1135
  %v1153 = vunpack.c.l.b16 %v737
  %v1154 = vunpack.c.l.b16 %v738
  %v1155 = vunpack.c.l.b16 %v739
  %v1156 = vunpack.c.l.b16 %v740
  %v1157 = vunpack.c.l.b16 %v741
  %v1158 = vunpack.c.l.b16 %v742
  %v1159 = vunpack.c.l.b16 %v743
  %v1160 = vunpack.c.l.b16 %v744
  %v1161 = vunpack.c.l.b16 %v745
  %v1162 = vunpack.c.l.b16 %v746
  %v1163 = vunpack.c.l.b16 %v747
  %v1164 = vunpack.c.l.b16 %v748
  %v1165 = vunpack.c.l.b16 %v749
  %v1166 = vunpack.c.l.b16 %v750
  %v1167 = vunpack.c.l.b16 %v751
  %v1168 = vunpack.c.l.b16 %v752
  %v1169 = vpack.c.b16 %v1154, %v1153
  %v1170 = vpack.c.b16 %v1156, %v1155
  %v1171 = vpack.c.b16 %v1158, %v1157
  %v1172 = vpack.c.b16 %v1160, %v1159
  %v1173 = vpack.c.b16 %v1162, %v1161
  %v1174 = vpack.c.b16 %v1164, %v1163
  %v1175 = vpack.c.b16 %v1166, %v1165
  %v1176 = vpack.c.b16 %v1168, %v1167
  %1177 = vrot.lane.b32.xlu0 %v1169, 96
  %v1178 = vpop.permute.xlu0 %1177
  %1179 = vrot.lane.b32.xlu0 %v1170, 96
  %v1180 = vpop.permute.xlu0 %1179
  %1181 = vrot.lane.b32.xlu0 %v1171, 96
  %v1182 = vpop.permute.xlu0 %1181
  %1183 = vrot.lane.b32.xlu0 %v1172, 96
  %v1184 = vpop.permute.xlu0 %1183
  %1185 = vrot.lane.b32.xlu0 %v1173, 96
  %v1186 = vpop.permute.xlu0 %1185
  %1187 = vrot.lane.b32.xlu0 %v1174, 96
  %v1188 = vpop.permute.xlu0 %1187
  %1189 = vrot.lane.b32.xlu0 %v1175, 96
  %v1190 = vpop.permute.xlu0 %1189
  %1191 = vrot.lane.b32.xlu0 %v1176, 96
  %v1192 = vpop.permute.xlu0 %1191
  %v1209 = vunpack.c.l.b16 %v769
  %v1210 = vunpack.c.l.b16 %v770
  %v1211 = vunpack.c.l.b16 %v771
  %v1212 = vunpack.c.l.b16 %v772
  %v1213 = vunpack.c.l.b16 %v773
  %v1214 = vunpack.c.l.b16 %v774
  %v1215 = vunpack.c.l.b16 %v775
  %v1216 = vunpack.c.l.b16 %v776
  %v1217 = vunpack.c.l.b16 %v777
  %v1218 = vunpack.c.l.b16 %v778
  %v1219 = vunpack.c.l.b16 %v779
  %v1220 = vunpack.c.l.b16 %v780
  %v1221 = vunpack.c.l.b16 %v781
  %v1222 = vunpack.c.l.b16 %v782
  %v1223 = vunpack.c.l.b16 %v783
  %v1224 = vunpack.c.l.b16 %v784
  %v1225 = vpack.c.b16 %v1210, %v1209
  %v1226 = vpack.c.b16 %v1212, %v1211
  %v1227 = vpack.c.b16 %v1214, %v1213
  %v1228 = vpack.c.b16 %v1216, %v1215
  %v1229 = vpack.c.b16 %v1218, %v1217
  %v1230 = vpack.c.b16 %v1220, %v1219
  %v1231 = vpack.c.b16 %v1222, %v1221
  %v1232 = vpack.c.b16 %v1224, %v1223
  %1233 = vrot.lane.b32.xlu0 %v1225, 112
  %v1234 = vpop.permute.xlu0 %1233
  %1235 = vrot.lane.b32.xlu0 %v1226, 112
  %v1236 = vpop.permute.xlu0 %1235
  %1237 = vrot.lane.b32.xlu0 %v1227, 112
  %v1238 = vpop.permute.xlu0 %1237
  %1239 = vrot.lane.b32.xlu0 %v1228, 112
  %v1240 = vpop.permute.xlu0 %1239
  %1241 = vrot.lane.b32.xlu0 %v1229, 112
  %v1242 = vpop.permute.xlu0 %1241
  %1243 = vrot.lane.b32.xlu0 %v1230, 112
  %v1244 = vpop.permute.xlu0 %1243
  %1245 = vrot.lane.b32.xlu0 %v1231, 112
  %v1246 = vpop.permute.xlu0 %1245
  %1247 = vrot.lane.b32.xlu0 %v1232, 112
  %v1248 = vpop.permute.xlu0 %1247
  %v1265 = vunpack.c.l.b16 %v801
  %v1266 = vunpack.c.l.b16 %v802
  %v1267 = vunpack.c.l.b16 %v803
  %v1268 = vunpack.c.l.b16 %v804
  %v1269 = vunpack.c.l.b16 %v805
  %v1270 = vunpack.c.l.b16 %v806
  %v1271 = vunpack.c.l.b16 %v807
  %v1272 = vunpack.c.l.b16 %v808
  %v1273 = vunpack.c.l.b16 %v809
  %v1274 = vunpack.c.l.b16 %v810
  %v1275 = vunpack.c.l.b16 %v811
  %v1276 = vunpack.c.l.b16 %v812
  %v1277 = vunpack.c.l.b16 %v813
  %v1278 = vunpack.c.l.b16 %v814
  %v1279 = vunpack.c.l.b16 %v815
  %v1280 = vunpack.c.l.b16 %v816
  %v1281 = vpack.c.b16 %v1266, %v1265
  %v1282 = vpack.c.b16 %v1268, %v1267
  %v1283 = vpack.c.b16 %v1270, %v1269
  %v1284 = vpack.c.b16 %v1272, %v1271
  %v1285 = vpack.c.b16 %v1274, %v1273
  %v1286 = vpack.c.b16 %v1276, %v1275
  %v1287 = vpack.c.b16 %v1278, %v1277
  %v1288 = vpack.c.b16 %v1280, %v1279
  %v1291 = vsel %vm467, %v849, %v898
  %v1294 = vsel %vm467, %v850, %v900
  %v1297 = vsel %vm467, %v851, %v902
  %v1300 = vsel %vm467, %v852, %v904
  %v1303 = vsel %vm467, %v853, %v906
  %v1306 = vsel %vm467, %v854, %v908
  %v1309 = vsel %vm467, %v855, %v910
  %v1312 = vsel %vm467, %v856, %v912
  %vm1313 = vcmask 261120
  %v1315 = vsel %vm1313, %v1291, %v954
  %v1317 = vsel %vm1313, %v1294, %v956
  %v1319 = vsel %vm1313, %v1297, %v958
  %v1321 = vsel %vm1313, %v1300, %v960
  %v1323 = vsel %vm1313, %v1303, %v962
  %v1325 = vsel %vm1313, %v1306, %v964
  %v1327 = vsel %vm1313, %v1309, %v966
  %v1329 = vsel %vm1313, %v1312, %v968
  %vm1330 = vcmask 392192
  %v1332 = vsel %vm1330, %v1315, %v1010
  %v1334 = vsel %vm1330, %v1317, %v1012
  %v1336 = vsel %vm1330, %v1319, %v1014
  %v1338 = vsel %vm1330, %v1321, %v1016
  %v1340 = vsel %vm1330, %v1323, %v1018
  %v1342 = vsel %vm1330, %v1325, %v1020
  %v1344 = vsel %vm1330, %v1327, %v1022
  %v1346 = vsel %vm1330, %v1329, %v1024
  %vm1347 = vcmask 523264
  %v1349 = vsel %vm1347, %v1332, %v1066
  %v1351 = vsel %vm1347, %v1334, %v1068
  %v1353 = vsel %vm1347, %v1336, %v1070
  %v1355 = vsel %vm1347, %v1338, %v1072
  %v1357 = vsel %vm1347, %v1340, %v1074
  %v1359 = vsel %vm1347, %v1342, %v1076
  %v1361 = vsel %vm1347, %v1344, %v1078
  %v1363 = vsel %vm1347, %v1346, %v1080
  %vm1364 = vcmask 654336
  %v1366 = vsel %vm1364, %v1349, %v1122
  %v1368 = vsel %vm1364, %v1351, %v1124
  %v1370 = vsel %vm1364, %v1353, %v1126
  %v1372 = vsel %vm1364, %v1355, %v1128
  %v1374 = vsel %vm1364, %v1357, %v1130
  %v1376 = vsel %vm1364, %v1359, %v1132
  %v1378 = vsel %vm1364, %v1361, %v1134
  %v1380 = vsel %vm1364, %v1363, %v1136
  %vm1381 = vcmask 785408
  %v1383 = vsel %vm1381, %v1366, %v1178
  %v1385 = vsel %vm1381, %v1368, %v1180
  %v1387 = vsel %vm1381, %v1370, %v1182
  %v1389 = vsel %vm1381, %v1372, %v1184
  %v1391 = vsel %vm1381, %v1374, %v1186
  %v1393 = vsel %vm1381, %v1376, %v1188
  %v1395 = vsel %vm1381, %v1378, %v1190
  %v1397 = vsel %vm1381, %v1380, %v1192
  %vm1398 = vcmask 916480
  %v1400 = vsel %vm1398, %v1383, %v1234
  %v1403 = vsel %vm1398, %v1385, %v1236
  %v1406 = vsel %vm1398, %v1387, %v1238
  %v1409 = vsel %vm1398, %v1389, %v1240
  %v1412 = vsel %vm1398, %v1391, %v1242
  %v1415 = vsel %vm1398, %v1393, %v1244
  %v1418 = vsel %vm1398, %v1395, %v1246
  %v1421 = vsel %vm1398, %v1397, %v1248
  %v1423 = vld [vmem:[%s2] sm:$0xf]
  %v1424 = vld [vmem:[%s2 + $0x4] sm:$0xf]
  %v1425 = vld [vmem:[%s2 + $0x8] sm:$0xf]
  %v1426 = vld [vmem:[%s2 + $0xc] sm:$0xf]
  %v1427 = vld [vmem:[%s2 + $0x10] sm:$0xf]
  %v1428 = vld [vmem:[%s2 + $0x14] sm:$0xf]
  %v1429 = vld [vmem:[%s2 + $0x18] sm:$0xf]
  %v1430 = vld [vmem:[%s2 + $0x1c] sm:$0xf]
  %v1431 = vld [vmem:[%s2 + $0x20] sm:$0xf]
  %v1432 = vld [vmem:[%s2 + $0x24] sm:$0xf]
  %v1433 = vld [vmem:[%s2 + $0x28] sm:$0xf]
  %v1434 = vld [vmem:[%s2 + $0x2c] sm:$0xf]
  %v1435 = vld [vmem:[%s2 + $0x30] sm:$0xf]
  %v1436 = vld [vmem:[%s2 + $0x34] sm:$0xf]
  %v1437 = vld [vmem:[%s2 + $0x38] sm:$0xf]
  %v1438 = vld [vmem:[%s2 + $0x3c] sm:$0xf]
  %v1439 = vld [vmem:[%s2 + $0x40] sm:$0xf]
  %v1440 = vld [vmem:[%s2 + $0x44] sm:$0xf]
  %v1459 = vunpack.c.l.b16 %v1423
  %v1460 = vunpack.c.l.b16 %v1424
  %v1461 = vunpack.c.l.b16 %v1425
  %v1462 = vunpack.c.l.b16 %v1426
  %v1463 = vunpack.c.l.b16 %v1427
  %v1464 = vunpack.c.l.b16 %v1428
  %v1465 = vunpack.c.l.b16 %v1429
  %v1466 = vunpack.c.l.b16 %v1430
  %v1467 = vunpack.c.l.b16 %v1431
  %v1468 = vunpack.c.l.b16 %v1432
  %v1469 = vunpack.c.l.b16 %v1433
  %v1470 = vunpack.c.l.b16 %v1434
  %v1471 = vunpack.c.l.b16 %v1435
  %v1472 = vunpack.c.l.b16 %v1436
  %v1473 = vunpack.c.l.b16 %v1437
  %v1474 = vunpack.c.l.b16 %v1438
  %v1475 = vunpack.c.l.b16 %v1439
  %v1476 = vunpack.c.l.b16 %v1440
  %v1477 = vpack.c.b16 %v1460, %v1459
  %v1478 = vpack.c.b16 %v1462, %v1461
  %v1479 = vpack.c.b16 %v1464, %v1463
  %v1480 = vpack.c.b16 %v1466, %v1465
  %v1481 = vpack.c.b16 %v1468, %v1467
  %v1482 = vpack.c.b16 %v1470, %v1469
  %v1483 = vpack.c.b16 %v1472, %v1471
  %v1484 = vpack.c.b16 %v1474, %v1473
  %v1485 = vpack.c.b16 %v1476, %v1475
  %v1496 = vsel %vm467, %v1281, 0
  %v1499 = vsel %vm467, %v1282, 0
  %v1502 = vsel %vm467, %v1283, 0
  %v1505 = vsel %vm467, %v1284, 0
  %v1508 = vsel %vm467, %v1285, 0
  %v1511 = vsel %vm467, %v1286, 0
  %v1514 = vsel %vm467, %v1287, 0
  %v1517 = vsel %vm467, %v1288, 0
  %1519 = vmatpush.bf16.msra.mxu0 %v1484
  %1520 = vmatpush.bf16.msra.mxu0 %v1483
  %1521 = vmatpush.bf16.msra.mxu0 %v1482
  %1522 = vmatpush.bf16.msra.mxu0 %v1481
  %1523 = vmatpush.bf16.msra.mxu0 %v1480
  %1524 = vmatpush.bf16.msra.mxu0 %v1479
  %1525 = vmatpush.bf16.msra.mxu0 %v1478
  %1526 = vmatpush.bf16.msra.mxu0 %v1477
  %1527 = vmatmul.bf16.gmra.mxu0 %v1400
  %v1528 = vpop.f32.mrf.mxu0
  %v1529 = vadd.f32 0.0, %v1528
  %v1530 = vpop.f32.mrf.mxu0
  %v1531 = vadd.f32 0.0, %v1530
  %1532 = vmatmul.bf16.gmra.mxu0 %v1403
  %v1533 = vpop.f32.mrf.mxu0
  %v1534 = vadd.f32 0.0, %v1533
  %v1535 = vpop.f32.mrf.mxu0
  %v1536 = vadd.f32 0.0, %v1535
  %1537 = vmatmul.bf16.gmra.mxu0 %v1406
  %v1538 = vpop.f32.mrf.mxu0
  %v1539 = vadd.f32 0.0, %v1538
  %v1540 = vpop.f32.mrf.mxu0
  %v1541 = vadd.f32 0.0, %v1540
  %1542 = vmatmul.bf16.gmra.mxu0 %v1409
  %v1543 = vpop.f32.mrf.mxu0
  %v1544 = vadd.f32 0.0, %v1543
  %v1545 = vpop.f32.mrf.mxu0
  %v1546 = vadd.f32 0.0, %v1545
  %1547 = vmatmul.bf16.gmra.mxu0 %v1412
  %v1548 = vpop.f32.mrf.mxu0
  %v1549 = vadd.f32 0.0, %v1548
  %v1550 = vpop.f32.mrf.mxu0
  %v1551 = vadd.f32 0.0, %v1550
  %1552 = vmatmul.bf16.gmra.mxu0 %v1415
  %v1553 = vpop.f32.mrf.mxu0
  %v1554 = vadd.f32 0.0, %v1553
  %v1555 = vpop.f32.mrf.mxu0
  %v1556 = vadd.f32 0.0, %v1555
  %1557 = vmatmul.bf16.gmra.mxu0 %v1418
  %v1558 = vpop.f32.mrf.mxu0
  %v1559 = vadd.f32 0.0, %v1558
  %v1560 = vpop.f32.mrf.mxu0
  %v1561 = vadd.f32 0.0, %v1560
  %1562 = vmatmul.bf16.gmra.mxu0 %v1421
  %v1563 = vpop.f32.mrf.mxu0
  %v1564 = vadd.f32 0.0, %v1563
  %v1565 = vpop.f32.mrf.mxu0
  %v1566 = vadd.f32 0.0, %v1565
  %1567 = vdwg.mxu0
  %1568 = vmatpush.bf16.msra.mxu0 0
  %1569 = vmatpush.bf16.msra.mxu0 0
  %1570 = vmatpush.bf16.msra.mxu0 0
  %1571 = vmatpush.bf16.msra.mxu0 0
  %1572 = vmatpush.bf16.msra.mxu0 0
  %1573 = vmatpush.bf16.msra.mxu0 0
  %1574 = vmatpush.bf16.msra.mxu0 0
  %1575 = vmatpush.bf16.msra.mxu0 %v1485
  %1576 = vmatmul.bf16.gmra.mxu0 %v1496
  %v1577 = vpop.f32.mrf.mxu0
  %v1578 = vadd.f32 %v1529, %v1577
  %v1579 = vpop.f32.mrf.mxu0
  %v1580 = vadd.f32 %v1531, %v1579
  %1581 = vmatmul.bf16.gmra.mxu0 %v1499
  %v1582 = vpop.f32.mrf.mxu0
  %v1583 = vadd.f32 %v1534, %v1582
  %v1584 = vpop.f32.mrf.mxu0
  %v1585 = vadd.f32 %v1536, %v1584
  %1586 = vmatmul.bf16.gmra.mxu0 %v1502
  %v1587 = vpop.f32.mrf.mxu0
  %v1588 = vadd.f32 %v1539, %v1587
  %v1589 = vpop.f32.mrf.mxu0
  %v1590 = vadd.f32 %v1541, %v1589
  %1591 = vmatmul.bf16.gmra.mxu0 %v1505
  %v1592 = vpop.f32.mrf.mxu0
  %v1593 = vadd.f32 %v1544, %v1592
  %v1594 = vpop.f32.mrf.mxu0
  %v1595 = vadd.f32 %v1546, %v1594
  %1596 = vmatmul.bf16.gmra.mxu0 %v1508
  %v1597 = vpop.f32.mrf.mxu0
  %v1598 = vadd.f32 %v1549, %v1597
  %v1599 = vpop.f32.mrf.mxu0
  %v1600 = vadd.f32 %v1551, %v1599
  %1601 = vmatmul.bf16.gmra.mxu0 %v1511
  %v1602 = vpop.f32.mrf.mxu0
  %v1603 = vadd.f32 %v1554, %v1602
  %v1604 = vpop.f32.mrf.mxu0
  %v1605 = vadd.f32 %v1556, %v1604
  %1606 = vmatmul.bf16.gmra.mxu0 %v1514
  %v1607 = vpop.f32.mrf.mxu0
  %v1608 = vadd.f32 %v1559, %v1607
  %v1609 = vpop.f32.mrf.mxu0
  %v1610 = vadd.f32 %v1561, %v1609
  %1611 = vmatmul.bf16.gmra.mxu0 %v1517
  %v1612 = vpop.f32.mrf.mxu0
  %v1613 = vadd.f32 %v1564, %v1612
  %v1614 = vpop.f32.mrf.mxu0
  %v1615 = vadd.f32 %v1566, %v1614
  %1616 = vdwg.mxu0
  %v1617 = vsel %vm1313, %v1578, 0.0
  %v1618 = vsel %vm1313, %v1580, 0.0
  %v1619 = vadd.f32 %v1617, %v1618
  %v1620 = vsel %vm1313, %v1583, 0.0
  %v1621 = vadd.f32 %v1619, %v1620
  %v1622 = vsel %vm1313, %v1585, 0.0
  %v1623 = vadd.f32 %v1621, %v1622
  %v1624 = vsel %vm1313, %v1588, 0.0
  %v1625 = vadd.f32 %v1623, %v1624
  %v1626 = vsel %vm1313, %v1590, 0.0
  %v1627 = vadd.f32 %v1625, %v1626
  %v1628 = vsel %vm1313, %v1593, 0.0
  %v1629 = vadd.f32 %v1627, %v1628
  %v1630 = vsel %vm1313, %v1595, 0.0
  %v1631 = vadd.f32 %v1629, %v1630
  %v1632 = vsel %vm1313, %v1598, 0.0
  %v1633 = vadd.f32 %v1631, %v1632
  %v1634 = vsel %vm1313, %v1600, 0.0
  %v1635 = vadd.f32 %v1633, %v1634
  %v1636 = vsel %vm1313, %v1603, 0.0
  %v1637 = vadd.f32 %v1635, %v1636
  %v1638 = vsel %vm1313, %v1605, 0.0
  %v1639 = vadd.f32 %v1637, %v1638
  %v1640 = vsel %vm1313, %v1608, 0.0
  %v1641 = vadd.f32 %v1639, %v1640
  %v1642 = vsel %vm1313, %v1610, 0.0
  %v1643 = vadd.f32 %v1641, %v1642
  %v1644 = vsel %vm1313, %v1613, 0.0
  %v1645 = vadd.f32 %v1643, %v1644
  %v1646 = vsel %vm1313, %v1615, 0.0
  %v1647 = vadd.f32 %v1645, %v1646
  %v1648 = vrot.slane %v1647, 4
  %v1649 = vadd.f32 %v1647, %v1648
  %v1650 = vrot.slane %v1649, 2
  %v1651 = vadd.f32 %v1649, %v1650
  %v1652 = vrot.slane %v1651, 1
  %v1653 = vadd.f32 %v1651, %v1652
  %v1654 = vmul.f32 %v1578, %v1578
  %v1655 = vmul.f32 %v1580, %v1580
  %v1656 = vmul.f32 %v1583, %v1583
  %v1657 = vmul.f32 %v1585, %v1585
  %v1658 = vmul.f32 %v1588, %v1588
  %v1659 = vmul.f32 %v1590, %v1590
  %v1660 = vmul.f32 %v1593, %v1593
  %v1661 = vmul.f32 %v1595, %v1595
  %v1662 = vmul.f32 %v1598, %v1598
  %v1663 = vmul.f32 %v1600, %v1600
  %v1664 = vmul.f32 %v1603, %v1603
  %v1665 = vmul.f32 %v1605, %v1605
  %v1666 = vmul.f32 %v1608, %v1608
  %v1667 = vmul.f32 %v1610, %v1610
  %v1668 = vmul.f32 %v1613, %v1613
  %v1669 = vmul.f32 %v1615, %v1615
  %v1670 = vsel %vm1313, %v1654, 0.0
  %v1671 = vsel %vm1313, %v1655, 0.0
  %v1672 = vadd.f32 %v1670, %v1671
  %v1673 = vsel %vm1313, %v1656, 0.0
  %v1674 = vadd.f32 %v1672, %v1673
  %v1675 = vsel %vm1313, %v1657, 0.0
  %v1676 = vadd.f32 %v1674, %v1675
  %v1677 = vsel %vm1313, %v1658, 0.0
  %v1678 = vadd.f32 %v1676, %v1677
  %v1679 = vsel %vm1313, %v1659, 0.0
  %v1680 = vadd.f32 %v1678, %v1679
  %v1681 = vsel %vm1313, %v1660, 0.0
  %v1682 = vadd.f32 %v1680, %v1681
  %v1683 = vsel %vm1313, %v1661, 0.0
  %v1684 = vadd.f32 %v1682, %v1683
  %v1685 = vsel %vm1313, %v1662, 0.0
  %v1686 = vadd.f32 %v1684, %v1685
  %v1687 = vsel %vm1313, %v1663, 0.0
  %v1688 = vadd.f32 %v1686, %v1687
  %v1689 = vsel %vm1313, %v1664, 0.0
  %v1690 = vadd.f32 %v1688, %v1689
  %v1691 = vsel %vm1313, %v1665, 0.0
  %v1692 = vadd.f32 %v1690, %v1691
  %v1693 = vsel %vm1313, %v1666, 0.0
  %v1694 = vadd.f32 %v1692, %v1693
  %v1695 = vsel %vm1313, %v1667, 0.0
  %v1696 = vadd.f32 %v1694, %v1695
  %v1697 = vsel %vm1313, %v1668, 0.0
  %v1698 = vadd.f32 %v1696, %v1697
  %v1699 = vsel %vm1313, %v1669, 0.0
  %v1700 = vadd.f32 %v1698, %v1699
  %v1701 = vrot.slane %v1700, 4
  %v1702 = vadd.f32 %v1700, %v1701
  %v1703 = vrot.slane %v1702, 2
  %v1704 = vadd.f32 %v1702, %v1703
  %v1705 = vrot.slane %v1704, 1
  %v1706 = vadd.f32 %v1704, %v1705
  %1708 = vrot.lane.b32.xlu0 %v1653, 120
  %v1709 = vpop.permute.xlu0 %1708
  %v1711 = vadd.f32 %v1653, %v1709
  %1712 = vrot.lane.b32.xlu0 %v1653, 112
  %v1713 = vpop.permute.xlu0 %1712
  %v1715 = vadd.f32 %v1711, %v1713
  %1716 = vrot.lane.b32.xlu0 %v1653, 104
  %v1717 = vpop.permute.xlu0 %1716
  %v1719 = vadd.f32 %v1715, %v1717
  %v1720 = vmul.f32 %v1719, 0.001953125
  %1722 = vrot.lane.b32.xlu0 %v1706, 120
  %v1723 = vpop.permute.xlu0 %1722
  %v1725 = vadd.f32 %v1706, %v1723
  %1726 = vrot.lane.b32.xlu0 %v1706, 112
  %v1727 = vpop.permute.xlu0 %1726
  %v1729 = vadd.f32 %v1725, %v1727
  %1730 = vrot.lane.b32.xlu0 %v1706, 104
  %v1731 = vpop.permute.xlu0 %1730
  %v1733 = vadd.f32 %v1729, %v1731
  %v1734 = vmul.f32 %v1733, 0.001953125
  %v1735 = vmul.f32 %v1720, %v1720
  %v1736 = vsub.f32 %v1734, %v1735
  %v1737 = vmax.f32 %v1736, 0.0
  %v1738 = vadd.f32 %v1737, 1e-05
  %v1739 = vrsqrt.pop %v1738
  %v1740 = vmul.f32 %v1739, %v1738
  %v1741 = vmul.f32 %v1740, %v1739
  %v1742 = vmul.f32 0.5, %v1741
  %v1743 = vsub.f32 1.5, %v1742
  %v1744 = vmul.f32 %v1739, %v1743
  %vm1745 = vweird.f32 %v1738
  %vm1746 = vweird.f32 %v1739
  %vm1747 = vmor %vm1745, %vm1746
  %v1748 = vsel %vm1747, %v1739, %v1744
  %v1749 = vld [vmem:[%s3] sm:$0x1]
  %v1750 = vmul.f32 %v1748, %v1749
  %v1751 = vld [vmem:[%s4] sm:$0x1]
  %v1752 = vmul.f32 %v1720, %v1750
  %v1753 = vsub.f32 %v1751, %v1752
  %1755 = vrot.lane.b32.xlu0 %v1750, 8
  %v1756 = vpop.permute.xlu0 %1755
  %1758 = vrot.lane.b32.xlu0 %v1750, 16
  %v1759 = vpop.permute.xlu0 %1758
  %1761 = vrot.lane.b32.xlu0 %v1750, 24
  %v1762 = vpop.permute.xlu0 %1761
  %v1764 = vsel %vm433, %v1750, %v1756
  %v1765 = vsel %vm467, %v1764, %v1759
  %vm1766 = vcmask 195584
  %v1767 = vsel %vm1766, %v1765, %v1762
  %v1769 = vperm.slane %v1753, 0
  %1770 = vrot.lane.b32.xlu0 %v1769, 8
  %v1771 = vpop.permute.xlu0 %1770
  %1773 = vrot.lane.b32.xlu0 %v1769, 16
  %v1774 = vpop.permute.xlu0 %1773
  %1776 = vrot.lane.b32.xlu0 %v1769, 24
  %v1777 = vpop.permute.xlu0 %1776
  %v1779 = vsel %vm433, %v1753, %v1771
  %v1780 = vsel %vm467, %v1779, %v1774
  %v1781 = vsel %vm1766, %v1780, %v1777
  %v1782 = vperm.slane %v1767, 0
  %v1783 = vmul.f32 %v1578, %v1782
  %v1784 = vmul.f32 %v1580, %v1782
  %v1785 = vmul.f32 %v1583, %v1782
  %v1786 = vmul.f32 %v1585, %v1782
  %v1787 = vmul.f32 %v1588, %v1782
  %v1788 = vmul.f32 %v1590, %v1782
  %v1789 = vmul.f32 %v1593, %v1782
  %v1790 = vmul.f32 %v1595, %v1782
  %v1791 = vmul.f32 %v1598, %v1782
  %v1792 = vmul.f32 %v1600, %v1782
  %v1793 = vmul.f32 %v1603, %v1782
  %v1794 = vmul.f32 %v1605, %v1782
  %v1795 = vmul.f32 %v1608, %v1782
  %v1796 = vmul.f32 %v1610, %v1782
  %v1797 = vmul.f32 %v1613, %v1782
  %v1798 = vmul.f32 %v1615, %v1782
  %v1799 = vperm.slane %v1781, 0
  %v1800 = vadd.f32 %v1783, %v1799
  %v1801 = vadd.f32 %v1784, %v1799
  %v1802 = vadd.f32 %v1785, %v1799
  %v1803 = vadd.f32 %v1786, %v1799
  %v1804 = vadd.f32 %v1787, %v1799
  %v1805 = vadd.f32 %v1788, %v1799
  %v1806 = vadd.f32 %v1789, %v1799
  %v1807 = vadd.f32 %v1790, %v1799
  %v1808 = vadd.f32 %v1791, %v1799
  %v1809 = vadd.f32 %v1792, %v1799
  %v1810 = vadd.f32 %v1793, %v1799
  %v1811 = vadd.f32 %v1794, %v1799
  %v1812 = vadd.f32 %v1795, %v1799
  %v1813 = vadd.f32 %v1796, %v1799
  %v1814 = vadd.f32 %v1797, %v1799
  %v1815 = vadd.f32 %v1798, %v1799
  %v1816 = vmax.f32 %v1800, 0.0
  %v1817 = vmax.f32 %v1801, 0.0
  %v1818 = vmax.f32 %v1802, 0.0
  %v1819 = vmax.f32 %v1803, 0.0
  %v1820 = vmax.f32 %v1804, 0.0
  %v1821 = vmax.f32 %v1805, 0.0
  %v1822 = vmax.f32 %v1806, 0.0
  %v1823 = vmax.f32 %v1807, 0.0
  %v1824 = vmax.f32 %v1808, 0.0
  %v1825 = vmax.f32 %v1809, 0.0
  %v1826 = vmax.f32 %v1810, 0.0
  %v1827 = vmax.f32 %v1811, 0.0
  %v1828 = vmax.f32 %v1812, 0.0
  %v1829 = vmax.f32 %v1813, 0.0
  %v1830 = vmax.f32 %v1814, 0.0
  %v1831 = vmax.f32 %v1815, 0.0
  %1832 = vst.msk [vmem:[#allocation3 + $0x7] sm:$0xff] %vm1313, 0.0
  %vm1833 = vcmask 254976
  %1834 = vst.msk [vmem:[#allocation3 + $0xf] sm:$0x3] %vm1833, 0.0
  %1835 = vst.msk [vmem:[#allocation3 + $0xf7] sm:$0xff] %vm1313, 0.0
  %1836 = vst.msk [vmem:[#allocation3 + $0xff] sm:$0x3] %vm1833, 0.0
  %s1837 = scalar_lea.vmem [#allocation3], 216
  %1838 = vst.msk [vmem:[%s1837 + $0x7] sm:$0xff] %vm1313, 0.0
  %1839 = vst.msk [vmem:[%s1837 + $0xf] sm:$0x3] %vm1833, 0.0
  %1840 = vst.msk [vmem:[%s1837 + $0xf7] sm:$0xff] %vm1313, 0.0
  %1841 = vst.msk [vmem:[%s1837 + $0xff] sm:$0x3] %vm1833, 0.0
  %s1842 = scalar_lea.vmem [#allocation3], 24
  %vm1843 = vcmask 253952
  %1844 = vst.msk [vmem:[%s1842 + $0x7] sm:$0x1] %vm1843, 0.0
  %1845 = vst.msk [vmem:[%s1842 + $0x1f] sm:$0x1] %vm1843, 0.0
  %1846 = vst.msk [vmem:[%s1842 + $0x37] sm:$0x1] %vm1843, 0.0
  %1847 = vst.msk [vmem:[%s1842 + $0x4f] sm:$0x1] %vm1843, 0.0
  %1848 = vst.msk [vmem:[%s1842 + $0x67] sm:$0x1] %vm1843, 0.0
  %1849 = vst.msk [vmem:[%s1842 + $0x7f] sm:$0x1] %vm1843, 0.0
  %1850 = vst.msk [vmem:[%s1842 + $0x97] sm:$0x1] %vm1843, 0.0
  %1851 = vst.msk [vmem:[%s1842 + $0xaf] sm:$0x1] %vm1843, 0.0
  %1852 = vst.msk [vmem:[%s1842 + $0xf7] sm:$0x1] %vm1843, 0.0
  %1853 = vst.msk [vmem:[%s1842 + $0x10f] sm:$0x1] %vm1843, 0.0
  %1854 = vst.msk [vmem:[%s1842 + $0x127] sm:$0x1] %vm1843, 0.0
  %1855 = vst.msk [vmem:[%s1842 + $0x13f] sm:$0x1] %vm1843, 0.0
  %1856 = vst.msk [vmem:[%s1842 + $0x157] sm:$0x1] %vm1843, 0.0
  %1857 = vst.msk [vmem:[%s1842 + $0x16f] sm:$0x1] %vm1843, 0.0
  %1858 = vst.msk [vmem:[%s1842 + $0x187] sm:$0x1] %vm1843, 0.0
  %1859 = vst.msk [vmem:[%s1842 + $0x19f] sm:$0x1] %vm1843, 0.0
  %1860 = vst.msk [vmem:[%s1842 + $0x10] sm:$0x1] %vm1843, 0.0
  %1861 = vst.msk [vmem:[%s1842 + $0x28] sm:$0x1] %vm1843, 0.0
  %1862 = vst.msk [vmem:[%s1842 + $0x40] sm:$0x1] %vm1843, 0.0
  %1863 = vst.msk [vmem:[%s1842 + $0x58] sm:$0x1] %vm1843, 0.0
  %1864 = vst.msk [vmem:[%s1842 + $0x70] sm:$0x1] %vm1843, 0.0
  %1865 = vst.msk [vmem:[%s1842 + $0x88] sm:$0x1] %vm1843, 0.0
  %1866 = vst.msk [vmem:[%s1842 + $0xa0] sm:$0x1] %vm1843, 0.0
  %1867 = vst.msk [vmem:[%s1842 + $0xb8] sm:$0x1] %vm1843, 0.0
  %1868 = vst.msk [vmem:[%s1842 + $0x100] sm:$0x1] %vm1843, 0.0
  %1869 = vst.msk [vmem:[%s1842 + $0x118] sm:$0x1] %vm1843, 0.0
  %1870 = vst.msk [vmem:[%s1842 + $0x130] sm:$0x1] %vm1843, 0.0
  %1871 = vst.msk [vmem:[%s1842 + $0x148] sm:$0x1] %vm1843, 0.0
  %1872 = vst.msk [vmem:[%s1842 + $0x160] sm:$0x1] %vm1843, 0.0
  %1873 = vst.msk [vmem:[%s1842 + $0x178] sm:$0x1] %vm1843, 0.0
  %1874 = vst.msk [vmem:[%s1842 + $0x190] sm:$0x1] %vm1843, 0.0
  %1875 = vst.msk [vmem:[%s1842 + $0x1a8] sm:$0x1] %vm1843, 0.0
  %1876 = vst.msk [vmem:[%s1842 + $0x8] sm:$0xff] %vm1313, %v1816
  %1877 = vst.msk [vmem:[%s1842 + $0x20] sm:$0xff] %vm1313, %v1817
  %1878 = vst.msk [vmem:[%s1842 + $0x38] sm:$0xff] %vm1313, %v1818
  %1879 = vst.msk [vmem:[%s1842 + $0x50] sm:$0xff] %vm1313, %v1819
  %1880 = vst.msk [vmem:[%s1842 + $0x68] sm:$0xff] %vm1313, %v1820
  %1881 = vst.msk [vmem:[%s1842 + $0x80] sm:$0xff] %vm1313, %v1821
  %1882 = vst.msk [vmem:[%s1842 + $0x98] sm:$0xff] %vm1313, %v1822
  %1883 = vst.msk [vmem:[%s1842 + $0xb0] sm:$0xff] %vm1313, %v1823
  %1884 = vst.msk [vmem:[%s1842 + $0xf8] sm:$0xff] %vm1313, %v1824
  %1885 = vst.msk [vmem:[%s1842 + $0x110] sm:$0xff] %vm1313, %v1825
  %1886 = vst.msk [vmem:[%s1842 + $0x128] sm:$0xff] %vm1313, %v1826
  %1887 = vst.msk [vmem:[%s1842 + $0x140] sm:$0xff] %vm1313, %v1827
  %1888 = vst.msk [vmem:[%s1842 + $0x158] sm:$0xff] %vm1313, %v1828
  %1889 = vst.msk [vmem:[%s1842 + $0x170] sm:$0xff] %vm1313, %v1829
  %1890 = vst.msk [vmem:[%s1842 + $0x188] sm:$0xff] %vm1313, %v1830
  %1891 = vst.msk [vmem:[%s1842 + $0x1a0] sm:$0xff] %vm1313, %v1831
  %v1892 = vld [vmem:[#allocation3 + $0x7] sm:$0xff]
  %v1893 = vld [vmem:[#allocation3 + $0x1f] sm:$0xff]
  %v1894 = vld [vmem:[#allocation3 + $0x37] sm:$0xff]
  %v1895 = vld [vmem:[#allocation3 + $0x4f] sm:$0xff]
  %v1896 = vld [vmem:[#allocation3 + $0x67] sm:$0xff]
  %v1897 = vld [vmem:[#allocation3 + $0x7f] sm:$0xff]
  %v1898 = vld [vmem:[#allocation3 + $0x97] sm:$0xff]
  %v1899 = vld [vmem:[#allocation3 + $0xaf] sm:$0xff]
  %v1900 = vld [vmem:[#allocation3 + $0xf7] sm:$0xff]
  %v1901 = vld [vmem:[#allocation3 + $0x10f] sm:$0xff]
  %v1902 = vld [vmem:[#allocation3 + $0x127] sm:$0xff]
  %v1903 = vld [vmem:[#allocation3 + $0x13f] sm:$0xff]
  %v1904 = vld [vmem:[#allocation3 + $0x157] sm:$0xff]
  %v1905 = vld [vmem:[#allocation3 + $0x16f] sm:$0xff]
  %v1906 = vld [vmem:[#allocation3 + $0x187] sm:$0xff]
  %v1907 = vld [vmem:[#allocation3 + $0x19f] sm:$0xff]
  %v1908 = vpack.c.bf16 %v1892, %v1892
  %v1909 = vpack.c.bf16 %v1893, %v1893
  %v1910 = vpack.c.bf16 %v1894, %v1894
  %v1911 = vpack.c.bf16 %v1895, %v1895
  %v1912 = vpack.c.bf16 %v1896, %v1896
  %v1913 = vpack.c.bf16 %v1897, %v1897
  %v1914 = vpack.c.bf16 %v1898, %v1898
  %v1915 = vpack.c.bf16 %v1899, %v1899
  %v1916 = vpack.c.bf16 %v1900, %v1900
  %v1917 = vpack.c.bf16 %v1901, %v1901
  %v1918 = vpack.c.bf16 %v1902, %v1902
  %v1919 = vpack.c.bf16 %v1903, %v1903
  %v1920 = vpack.c.bf16 %v1904, %v1904
  %v1921 = vpack.c.bf16 %v1905, %v1905
  %v1922 = vpack.c.bf16 %v1906, %v1906
  %v1923 = vpack.c.bf16 %v1907, %v1907
  %v1924 = vld [vmem:[#allocation3 + $0x8] sm:$0xff]
  %v1925 = vld [vmem:[#allocation3 + $0x20] sm:$0xff]
  %v1926 = vld [vmem:[#allocation3 + $0x38] sm:$0xff]
  %v1927 = vld [vmem:[#allocation3 + $0x50] sm:$0xff]
  %v1928 = vld [vmem:[#allocation3 + $0x68] sm:$0xff]
  %v1929 = vld [vmem:[#allocation3 + $0x80] sm:$0xff]
  %v1930 = vld [vmem:[#allocation3 + $0x98] sm:$0xff]
  %v1931 = vld [vmem:[#allocation3 + $0xb0] sm:$0xff]
  %v1932 = vld [vmem:[#allocation3 + $0xf8] sm:$0xff]
  %v1933 = vld [vmem:[#allocation3 + $0x110] sm:$0xff]
  %v1934 = vld [vmem:[#allocation3 + $0x128] sm:$0xff]
  %v1935 = vld [vmem:[#allocation3 + $0x140] sm:$0xff]
  %v1936 = vld [vmem:[#allocation3 + $0x158] sm:$0xff]
  %v1937 = vld [vmem:[#allocation3 + $0x170] sm:$0xff]
  %v1938 = vld [vmem:[#allocation3 + $0x188] sm:$0xff]
  %v1939 = vld [vmem:[#allocation3 + $0x1a0] sm:$0xff]
  %v1940 = vpack.c.bf16 %v1924, %v1924
  %v1941 = vpack.c.bf16 %v1925, %v1925
  %v1942 = vpack.c.bf16 %v1926, %v1926
  %v1943 = vpack.c.bf16 %v1927, %v1927
  %v1944 = vpack.c.bf16 %v1928, %v1928
  %v1945 = vpack.c.bf16 %v1929, %v1929
  %v1946 = vpack.c.bf16 %v1930, %v1930
  %v1947 = vpack.c.bf16 %v1931, %v1931
  %v1948 = vpack.c.bf16 %v1932, %v1932
  %v1949 = vpack.c.bf16 %v1933, %v1933
  %v1950 = vpack.c.bf16 %v1934, %v1934
  %v1951 = vpack.c.bf16 %v1935, %v1935
  %v1952 = vpack.c.bf16 %v1936, %v1936
  %v1953 = vpack.c.bf16 %v1937, %v1937
  %v1954 = vpack.c.bf16 %v1938, %v1938
  %v1955 = vpack.c.bf16 %v1939, %v1939
  %v1956 = vld [vmem:[#allocation3 + $0x9] sm:$0xff]
  %v1957 = vld [vmem:[#allocation3 + $0x21] sm:$0xff]
  %v1958 = vld [vmem:[#allocation3 + $0x39] sm:$0xff]
  %v1959 = vld [vmem:[#allocation3 + $0x51] sm:$0xff]
  %v1960 = vld [vmem:[#allocation3 + $0x69] sm:$0xff]
  %v1961 = vld [vmem:[#allocation3 + $0x81] sm:$0xff]
  %v1962 = vld [vmem:[#allocation3 + $0x99] sm:$0xff]
  %v1963 = vld [vmem:[#allocation3 + $0xb1] sm:$0xff]
  %v1964 = vld [vmem:[#allocation3 + $0xf9] sm:$0xff]
  %v1965 = vld [vmem:[#allocation3 + $0x111] sm:$0xff]
  %v1966 = vld [vmem:[#allocation3 + $0x129] sm:$0xff]
  %v1967 = vld [vmem:[#allocation3 + $0x141] sm:$0xff]
  %v1968 = vld [vmem:[#allocation3 + $0x159] sm:$0xff]
  %v1969 = vld [vmem:[#allocation3 + $0x171] sm:$0xff]
  %v1970 = vld [vmem:[#allocation3 + $0x189] sm:$0xff]
  %v1971 = vld [vmem:[#allocation3 + $0x1a1] sm:$0xff]
  %v1972 = vpack.c.bf16 %v1956, %v1956
  %v1973 = vpack.c.bf16 %v1957, %v1957
  %v1974 = vpack.c.bf16 %v1958, %v1958
  %v1975 = vpack.c.bf16 %v1959, %v1959
  %v1976 = vpack.c.bf16 %v1960, %v1960
  %v1977 = vpack.c.bf16 %v1961, %v1961
  %v1978 = vpack.c.bf16 %v1962, %v1962
  %v1979 = vpack.c.bf16 %v1963, %v1963
  %v1980 = vpack.c.bf16 %v1964, %v1964
  %v1981 = vpack.c.bf16 %v1965, %v1965
  %v1982 = vpack.c.bf16 %v1966, %v1966
  %v1983 = vpack.c.bf16 %v1967, %v1967
  %v1984 = vpack.c.bf16 %v1968, %v1968
  %v1985 = vpack.c.bf16 %v1969, %v1969
  %v1986 = vpack.c.bf16 %v1970, %v1970
  %v1987 = vpack.c.bf16 %v1971, %v1971
  %v1988 = vld [vmem:[%s1842 + $0x7] sm:$0xff]
  %v1989 = vld [vmem:[%s1842 + $0x1f] sm:$0xff]
  %v1990 = vld [vmem:[%s1842 + $0x37] sm:$0xff]
  %v1991 = vld [vmem:[%s1842 + $0x4f] sm:$0xff]
  %v1992 = vld [vmem:[%s1842 + $0x67] sm:$0xff]
  %v1993 = vld [vmem:[%s1842 + $0x7f] sm:$0xff]
  %v1994 = vld [vmem:[%s1842 + $0x97] sm:$0xff]
  %v1995 = vld [vmem:[%s1842 + $0xaf] sm:$0xff]
  %v1996 = vld [vmem:[%s1842 + $0xf7] sm:$0xff]
  %v1997 = vld [vmem:[%s1842 + $0x10f] sm:$0xff]
  %v1998 = vld [vmem:[%s1842 + $0x127] sm:$0xff]
  %v1999 = vld [vmem:[%s1842 + $0x13f] sm:$0xff]
  %v2000 = vld [vmem:[%s1842 + $0x157] sm:$0xff]
  %v2001 = vld [vmem:[%s1842 + $0x16f] sm:$0xff]
  %v2002 = vld [vmem:[%s1842 + $0x187] sm:$0xff]
  %v2003 = vld [vmem:[%s1842 + $0x19f] sm:$0xff]
  %v2004 = vpack.c.bf16 %v1988, %v1988
  %v2005 = vpack.c.bf16 %v1989, %v1989
  %v2006 = vpack.c.bf16 %v1990, %v1990
  %v2007 = vpack.c.bf16 %v1991, %v1991
  %v2008 = vpack.c.bf16 %v1992, %v1992
  %v2009 = vpack.c.bf16 %v1993, %v1993
  %v2010 = vpack.c.bf16 %v1994, %v1994
  %v2011 = vpack.c.bf16 %v1995, %v1995
  %v2012 = vpack.c.bf16 %v1996, %v1996
  %v2013 = vpack.c.bf16 %v1997, %v1997
  %v2014 = vpack.c.bf16 %v1998, %v1998
  %v2015 = vpack.c.bf16 %v1999, %v1999
  %v2016 = vpack.c.bf16 %v2000, %v2000
  %v2017 = vpack.c.bf16 %v2001, %v2001
  %v2018 = vpack.c.bf16 %v2002, %v2002
  %v2019 = vpack.c.bf16 %v2003, %v2003
  %v2020 = vld [vmem:[%s1842 + $0x8] sm:$0xff]
  %v2021 = vld [vmem:[%s1842 + $0x20] sm:$0xff]
  %v2022 = vld [vmem:[%s1842 + $0x38] sm:$0xff]
  %v2023 = vld [vmem:[%s1842 + $0x50] sm:$0xff]
  %v2024 = vld [vmem:[%s1842 + $0x68] sm:$0xff]
  %v2025 = vld [vmem:[%s1842 + $0x80] sm:$0xff]
  %v2026 = vld [vmem:[%s1842 + $0x98] sm:$0xff]
  %v2027 = vld [vmem:[%s1842 + $0xb0] sm:$0xff]
  %v2028 = vld [vmem:[%s1842 + $0xf8] sm:$0xff]
  %v2029 = vld [vmem:[%s1842 + $0x110] sm:$0xff]
  %v2030 = vld [vmem:[%s1842 + $0x128] sm:$0xff]
  %v2031 = vld [vmem:[%s1842 + $0x140] sm:$0xff]
  %v2032 = vld [vmem:[%s1842 + $0x158] sm:$0xff]
  %v2033 = vld [vmem:[%s1842 + $0x170] sm:$0xff]
  %v2034 = vld [vmem:[%s1842 + $0x188] sm:$0xff]
  %v2035 = vld [vmem:[%s1842 + $0x1a0] sm:$0xff]
  %v2036 = vpack.c.bf16 %v2020, %v2020
  %v2037 = vpack.c.bf16 %v2021, %v2021
  %v2038 = vpack.c.bf16 %v2022, %v2022
  %v2039 = vpack.c.bf16 %v2023, %v2023
  %v2040 = vpack.c.bf16 %v2024, %v2024
  %v2041 = vpack.c.bf16 %v2025, %v2025
  %v2042 = vpack.c.bf16 %v2026, %v2026
  %v2043 = vpack.c.bf16 %v2027, %v2027
  %v2044 = vpack.c.bf16 %v2028, %v2028
  %v2045 = vpack.c.bf16 %v2029, %v2029
  %v2046 = vpack.c.bf16 %v2030, %v2030
  %v2047 = vpack.c.bf16 %v2031, %v2031
  %v2048 = vpack.c.bf16 %v2032, %v2032
  %v2049 = vpack.c.bf16 %v2033, %v2033
  %v2050 = vpack.c.bf16 %v2034, %v2034
  %v2051 = vpack.c.bf16 %v2035, %v2035
  %v2052 = vld [vmem:[%s1842 + $0x9] sm:$0xff]
  %v2053 = vld [vmem:[%s1842 + $0x21] sm:$0xff]
  %v2054 = vld [vmem:[%s1842 + $0x39] sm:$0xff]
  %v2055 = vld [vmem:[%s1842 + $0x51] sm:$0xff]
  %v2056 = vld [vmem:[%s1842 + $0x69] sm:$0xff]
  %v2057 = vld [vmem:[%s1842 + $0x81] sm:$0xff]
  %v2058 = vld [vmem:[%s1842 + $0x99] sm:$0xff]
  %v2059 = vld [vmem:[%s1842 + $0xb1] sm:$0xff]
  %v2060 = vld [vmem:[%s1842 + $0xf9] sm:$0xff]
  %v2061 = vld [vmem:[%s1842 + $0x111] sm:$0xff]
  %v2062 = vld [vmem:[%s1842 + $0x129] sm:$0xff]
  %v2063 = vld [vmem:[%s1842 + $0x141] sm:$0xff]
  %v2064 = vld [vmem:[%s1842 + $0x159] sm:$0xff]
  %v2065 = vld [vmem:[%s1842 + $0x171] sm:$0xff]
  %v2066 = vld [vmem:[%s1842 + $0x189] sm:$0xff]
  %v2067 = vld [vmem:[%s1842 + $0x1a1] sm:$0xff]
  %v2068 = vpack.c.bf16 %v2052, %v2052
  %v2069 = vpack.c.bf16 %v2053, %v2053
  %v2070 = vpack.c.bf16 %v2054, %v2054
  %v2071 = vpack.c.bf16 %v2055, %v2055
  %v2072 = vpack.c.bf16 %v2056, %v2056
  %v2073 = vpack.c.bf16 %v2057, %v2057
  %v2074 = vpack.c.bf16 %v2058, %v2058
  %v2075 = vpack.c.bf16 %v2059, %v2059
  %v2076 = vpack.c.bf16 %v2060, %v2060
  %v2077 = vpack.c.bf16 %v2061, %v2061
  %v2078 = vpack.c.bf16 %v2062, %v2062
  %v2079 = vpack.c.bf16 %v2063, %v2063
  %v2080 = vpack.c.bf16 %v2064, %v2064
  %v2081 = vpack.c.bf16 %v2065, %v2065
  %v2082 = vpack.c.bf16 %v2066, %v2066
  %v2083 = vpack.c.bf16 %v2067, %v2067
  %s2084 = scalar_lea.vmem [#allocation3], 48
  %v2085 = vld [vmem:[%s2084 + $0x7] sm:$0xff]
  %v2086 = vld [vmem:[%s2084 + $0x1f] sm:$0xff]
  %v2087 = vld [vmem:[%s2084 + $0x37] sm:$0xff]
  %v2088 = vld [vmem:[%s2084 + $0x4f] sm:$0xff]
  %v2089 = vld [vmem:[%s2084 + $0x67] sm:$0xff]
  %v2090 = vld [vmem:[%s2084 + $0x7f] sm:$0xff]
  %v2091 = vld [vmem:[%s2084 + $0x97] sm:$0xff]
  %v2092 = vld [vmem:[%s2084 + $0xaf] sm:$0xff]
  %v2093 = vld [vmem:[%s2084 + $0xf7] sm:$0xff]
  %v2094 = vld [vmem:[%s2084 + $0x10f] sm:$0xff]
  %v2095 = vld [vmem:[%s2084 + $0x127] sm:$0xff]
  %v2096 = vld [vmem:[%s2084 + $0x13f] sm:$0xff]
  %v2097 = vld [vmem:[%s2084 + $0x157] sm:$0xff]
  %v2098 = vld [vmem:[%s2084 + $0x16f] sm:$0xff]
  %v2099 = vld [vmem:[%s2084 + $0x187] sm:$0xff]
  %v2100 = vld [vmem:[%s2084 + $0x19f] sm:$0xff]
  %v2101 = vpack.c.bf16 %v2085, %v2085
  %v2102 = vpack.c.bf16 %v2086, %v2086
  %v2103 = vpack.c.bf16 %v2087, %v2087
  %v2104 = vpack.c.bf16 %v2088, %v2088
  %v2105 = vpack.c.bf16 %v2089, %v2089
  %v2106 = vpack.c.bf16 %v2090, %v2090
  %v2107 = vpack.c.bf16 %v2091, %v2091
  %v2108 = vpack.c.bf16 %v2092, %v2092
  %v2109 = vpack.c.bf16 %v2093, %v2093
  %v2110 = vpack.c.bf16 %v2094, %v2094
  %v2111 = vpack.c.bf16 %v2095, %v2095
  %v2112 = vpack.c.bf16 %v2096, %v2096
  %v2113 = vpack.c.bf16 %v2097, %v2097
  %v2114 = vpack.c.bf16 %v2098, %v2098
  %v2115 = vpack.c.bf16 %v2099, %v2099
  %v2116 = vpack.c.bf16 %v2100, %v2100
  %v2117 = vld [vmem:[%s2084 + $0x8] sm:$0xff]
  %v2118 = vld [vmem:[%s2084 + $0x20] sm:$0xff]
  %v2119 = vld [vmem:[%s2084 + $0x38] sm:$0xff]
  %v2120 = vld [vmem:[%s2084 + $0x50] sm:$0xff]
  %v2121 = vld [vmem:[%s2084 + $0x68] sm:$0xff]
  %v2122 = vld [vmem:[%s2084 + $0x80] sm:$0xff]
  %v2123 = vld [vmem:[%s2084 + $0x98] sm:$0xff]
  %v2124 = vld [vmem:[%s2084 + $0xb0] sm:$0xff]
  %v2125 = vld [vmem:[%s2084 + $0xf8] sm:$0xff]
  %v2126 = vld [vmem:[%s2084 + $0x110] sm:$0xff]
  %v2127 = vld [vmem:[%s2084 + $0x128] sm:$0xff]
  %v2128 = vld [vmem:[%s2084 + $0x140] sm:$0xff]
  %v2129 = vld [vmem:[%s2084 + $0x158] sm:$0xff]
  %v2130 = vld [vmem:[%s2084 + $0x170] sm:$0xff]
  %v2131 = vld [vmem:[%s2084 + $0x188] sm:$0xff]
  %v2132 = vld [vmem:[%s2084 + $0x1a0] sm:$0xff]
  %v2133 = vpack.c.bf16 %v2117, %v2117
  %v2134 = vpack.c.bf16 %v2118, %v2118
  %v2135 = vpack.c.bf16 %v2119, %v2119
  %v2136 = vpack.c.bf16 %v2120, %v2120
  %v2137 = vpack.c.bf16 %v2121, %v2121
  %v2138 = vpack.c.bf16 %v2122, %v2122
  %v2139 = vpack.c.bf16 %v2123, %v2123
  %v2140 = vpack.c.bf16 %v2124, %v2124
  %v2141 = vpack.c.bf16 %v2125, %v2125
  %v2142 = vpack.c.bf16 %v2126, %v2126
  %v2143 = vpack.c.bf16 %v2127, %v2127
  %v2144 = vpack.c.bf16 %v2128, %v2128
  %v2145 = vpack.c.bf16 %v2129, %v2129
  %v2146 = vpack.c.bf16 %v2130, %v2130
  %v2147 = vpack.c.bf16 %v2131, %v2131
  %v2148 = vpack.c.bf16 %v2132, %v2132
  %v2149 = vld [vmem:[%s2084 + $0x9] sm:$0xff]
  %v2150 = vld [vmem:[%s2084 + $0x21] sm:$0xff]
  %v2151 = vld [vmem:[%s2084 + $0x39] sm:$0xff]
  %v2152 = vld [vmem:[%s2084 + $0x51] sm:$0xff]
  %v2153 = vld [vmem:[%s2084 + $0x69] sm:$0xff]
  %v2154 = vld [vmem:[%s2084 + $0x81] sm:$0xff]
  %v2155 = vld [vmem:[%s2084 + $0x99] sm:$0xff]
  %v2156 = vld [vmem:[%s2084 + $0xb1] sm:$0xff]
  %v2157 = vld [vmem:[%s2084 + $0xf9] sm:$0xff]
  %v2158 = vld [vmem:[%s2084 + $0x111] sm:$0xff]
  %v2159 = vld [vmem:[%s2084 + $0x129] sm:$0xff]
  %v2160 = vld [vmem:[%s2084 + $0x141] sm:$0xff]
  %v2161 = vld [vmem:[%s2084 + $0x159] sm:$0xff]
  %v2162 = vld [vmem:[%s2084 + $0x171] sm:$0xff]
  %v2163 = vld [vmem:[%s2084 + $0x189] sm:$0xff]
  %v2164 = vld [vmem:[%s2084 + $0x1a1] sm:$0xff]
  %v2165 = vpack.c.bf16 %v2149, %v2149
  %v2166 = vpack.c.bf16 %v2150, %v2150
  %v2167 = vpack.c.bf16 %v2151, %v2151
  %v2168 = vpack.c.bf16 %v2152, %v2152
  %v2169 = vpack.c.bf16 %v2153, %v2153
  %v2170 = vpack.c.bf16 %v2154, %v2154
  %v2171 = vpack.c.bf16 %v2155, %v2155
  %v2172 = vpack.c.bf16 %v2156, %v2156
  %v2173 = vpack.c.bf16 %v2157, %v2157
  %v2174 = vpack.c.bf16 %v2158, %v2158
  %v2175 = vpack.c.bf16 %v2159, %v2159
  %v2176 = vpack.c.bf16 %v2160, %v2160
  %v2177 = vpack.c.bf16 %v2161, %v2161
  %v2178 = vpack.c.bf16 %v2162, %v2162
  %v2179 = vpack.c.bf16 %v2163, %v2163
  %v2180 = vpack.c.bf16 %v2164, %v2164
  %v2197 = vunpack.c.l.b16 %v1908
  %v2198 = vunpack.c.l.b16 %v1909
  %v2199 = vunpack.c.l.b16 %v1910
  %v2200 = vunpack.c.l.b16 %v1911
  %v2201 = vunpack.c.l.b16 %v1912
  %v2202 = vunpack.c.l.b16 %v1913
  %v2203 = vunpack.c.l.b16 %v1914
  %v2204 = vunpack.c.l.b16 %v1915
  %v2205 = vunpack.c.l.b16 %v1916
  %v2206 = vunpack.c.l.b16 %v1917
  %v2207 = vunpack.c.l.b16 %v1918
  %v2208 = vunpack.c.l.b16 %v1919
  %v2209 = vunpack.c.l.b16 %v1920
  %v2210 = vunpack.c.l.b16 %v1921
  %v2211 = vunpack.c.l.b16 %v1922
  %v2212 = vunpack.c.l.b16 %v1923
  %v2213 = vpack.c.b16 %v2198, %v2197
  %v2214 = vpack.c.b16 %v2200, %v2199
  %v2215 = vpack.c.b16 %v2202, %v2201
  %v2216 = vpack.c.b16 %v2204, %v2203
  %v2217 = vpack.c.b16 %v2206, %v2205
  %v2218 = vpack.c.b16 %v2208, %v2207
  %v2219 = vpack.c.b16 %v2210, %v2209
  %v2220 = vpack.c.b16 %v2212, %v2211
  %v2237 = vunpack.c.l.b16 %v1940
  %v2238 = vunpack.c.l.b16 %v1941
  %v2239 = vunpack.c.l.b16 %v1942
  %v2240 = vunpack.c.l.b16 %v1943
  %v2241 = vunpack.c.l.b16 %v1944
  %v2242 = vunpack.c.l.b16 %v1945
  %v2243 = vunpack.c.l.b16 %v1946
  %v2244 = vunpack.c.l.b16 %v1947
  %v2245 = vunpack.c.l.b16 %v1948
  %v2246 = vunpack.c.l.b16 %v1949
  %v2247 = vunpack.c.l.b16 %v1950
  %v2248 = vunpack.c.l.b16 %v1951
  %v2249 = vunpack.c.l.b16 %v1952
  %v2250 = vunpack.c.l.b16 %v1953
  %v2251 = vunpack.c.l.b16 %v1954
  %v2252 = vunpack.c.l.b16 %v1955
  %v2253 = vpack.c.b16 %v2238, %v2237
  %v2254 = vpack.c.b16 %v2240, %v2239
  %v2255 = vpack.c.b16 %v2242, %v2241
  %v2256 = vpack.c.b16 %v2244, %v2243
  %v2257 = vpack.c.b16 %v2246, %v2245
  %v2258 = vpack.c.b16 %v2248, %v2247
  %v2259 = vpack.c.b16 %v2250, %v2249
  %v2260 = vpack.c.b16 %v2252, %v2251
  %2261 = vrot.lane.b32.xlu0 %v2253, 32
  %v2262 = vpop.permute.xlu0 %2261
  %2263 = vrot.lane.b32.xlu0 %v2254, 32
  %v2264 = vpop.permute.xlu0 %2263
  %2265 = vrot.lane.b32.xlu0 %v2255, 32
  %v2266 = vpop.permute.xlu0 %2265
  %2267 = vrot.lane.b32.xlu0 %v2256, 32
  %v2268 = vpop.permute.xlu0 %2267
  %2269 = vrot.lane.b32.xlu0 %v2257, 32
  %v2270 = vpop.permute.xlu0 %2269
  %2271 = vrot.lane.b32.xlu0 %v2258, 32
  %v2272 = vpop.permute.xlu0 %2271
  %2273 = vrot.lane.b32.xlu0 %v2259, 32
  %v2274 = vpop.permute.xlu0 %2273
  %2275 = vrot.lane.b32.xlu0 %v2260, 32
  %v2276 = vpop.permute.xlu0 %2275
  %v2293 = vunpack.c.l.b16 %v1972
  %v2294 = vunpack.c.l.b16 %v1973
  %v2295 = vunpack.c.l.b16 %v1974
  %v2296 = vunpack.c.l.b16 %v1975
  %v2297 = vunpack.c.l.b16 %v1976
  %v2298 = vunpack.c.l.b16 %v1977
  %v2299 = vunpack.c.l.b16 %v1978
  %v2300 = vunpack.c.l.b16 %v1979
  %v2301 = vunpack.c.l.b16 %v1980
  %v2302 = vunpack.c.l.b16 %v1981
  %v2303 = vunpack.c.l.b16 %v1982
  %v2304 = vunpack.c.l.b16 %v1983
  %v2305 = vunpack.c.l.b16 %v1984
  %v2306 = vunpack.c.l.b16 %v1985
  %v2307 = vunpack.c.l.b16 %v1986
  %v2308 = vunpack.c.l.b16 %v1987
  %v2309 = vpack.c.b16 %v2294, %v2293
  %v2310 = vpack.c.b16 %v2296, %v2295
  %v2311 = vpack.c.b16 %v2298, %v2297
  %v2312 = vpack.c.b16 %v2300, %v2299
  %v2313 = vpack.c.b16 %v2302, %v2301
  %v2314 = vpack.c.b16 %v2304, %v2303
  %v2315 = vpack.c.b16 %v2306, %v2305
  %v2316 = vpack.c.b16 %v2308, %v2307
  %2317 = vrot.lane.b32.xlu0 %v2309, 64
  %v2318 = vpop.permute.xlu0 %2317
  %2319 = vrot.lane.b32.xlu0 %v2310, 64
  %v2320 = vpop.permute.xlu0 %2319
  %2321 = vrot.lane.b32.xlu0 %v2311, 64
  %v2322 = vpop.permute.xlu0 %2321
  %2323 = vrot.lane.b32.xlu0 %v2312, 64
  %v2324 = vpop.permute.xlu0 %2323
  %2325 = vrot.lane.b32.xlu0 %v2313, 64
  %v2326 = vpop.permute.xlu0 %2325
  %2327 = vrot.lane.b32.xlu0 %v2314, 64
  %v2328 = vpop.permute.xlu0 %2327
  %2329 = vrot.lane.b32.xlu0 %v2315, 64
  %v2330 = vpop.permute.xlu0 %2329
  %2331 = vrot.lane.b32.xlu0 %v2316, 64
  %v2332 = vpop.permute.xlu0 %2331
  %v2349 = vunpack.c.l.b16 %v2004
  %v2350 = vunpack.c.l.b16 %v2005
  %v2351 = vunpack.c.l.b16 %v2006
  %v2352 = vunpack.c.l.b16 %v2007
  %v2353 = vunpack.c.l.b16 %v2008
  %v2354 = vunpack.c.l.b16 %v2009
  %v2355 = vunpack.c.l.b16 %v2010
  %v2356 = vunpack.c.l.b16 %v2011
  %v2357 = vunpack.c.l.b16 %v2012
  %v2358 = vunpack.c.l.b16 %v2013
  %v2359 = vunpack.c.l.b16 %v2014
  %v2360 = vunpack.c.l.b16 %v2015
  %v2361 = vunpack.c.l.b16 %v2016
  %v2362 = vunpack.c.l.b16 %v2017
  %v2363 = vunpack.c.l.b16 %v2018
  %v2364 = vunpack.c.l.b16 %v2019
  %v2365 = vpack.c.b16 %v2350, %v2349
  %v2366 = vpack.c.b16 %v2352, %v2351
  %v2367 = vpack.c.b16 %v2354, %v2353
  %v2368 = vpack.c.b16 %v2356, %v2355
  %v2369 = vpack.c.b16 %v2358, %v2357
  %v2370 = vpack.c.b16 %v2360, %v2359
  %v2371 = vpack.c.b16 %v2362, %v2361
  %v2372 = vpack.c.b16 %v2364, %v2363
  %2373 = vrot.lane.b32.xlu0 %v2365, 96
  %v2374 = vpop.permute.xlu0 %2373
  %2375 = vrot.lane.b32.xlu0 %v2366, 96
  %v2376 = vpop.permute.xlu0 %2375
  %2377 = vrot.lane.b32.xlu0 %v2367, 96
  %v2378 = vpop.permute.xlu0 %2377
  %2379 = vrot.lane.b32.xlu0 %v2368, 96
  %v2380 = vpop.permute.xlu0 %2379
  %2381 = vrot.lane.b32.xlu0 %v2369, 96
  %v2382 = vpop.permute.xlu0 %2381
  %2383 = vrot.lane.b32.xlu0 %v2370, 96
  %v2384 = vpop.permute.xlu0 %2383
  %2385 = vrot.lane.b32.xlu0 %v2371, 96
  %v2386 = vpop.permute.xlu0 %2385
  %2387 = vrot.lane.b32.xlu0 %v2372, 96
  %v2388 = vpop.permute.xlu0 %2387
  %v2405 = vunpack.c.l.b16 %v2036
  %v2406 = vunpack.c.l.b16 %v2037
  %v2407 = vunpack.c.l.b16 %v2038
  %v2408 = vunpack.c.l.b16 %v2039
  %v2409 = vunpack.c.l.b16 %v2040
  %v2410 = vunpack.c.l.b16 %v2041
  %v2411 = vunpack.c.l.b16 %v2042
  %v2412 = vunpack.c.l.b16 %v2043
  %v2413 = vunpack.c.l.b16 %v2044
  %v2414 = vunpack.c.l.b16 %v2045
  %v2415 = vunpack.c.l.b16 %v2046
  %v2416 = vunpack.c.l.b16 %v2047
  %v2417 = vunpack.c.l.b16 %v2048
  %v2418 = vunpack.c.l.b16 %v2049
  %v2419 = vunpack.c.l.b16 %v2050
  %v2420 = vunpack.c.l.b16 %v2051
  %v2421 = vpack.c.b16 %v2406, %v2405
  %v2422 = vpack.c.b16 %v2408, %v2407
  %v2423 = vpack.c.b16 %v2410, %v2409
  %v2424 = vpack.c.b16 %v2412, %v2411
  %v2425 = vpack.c.b16 %v2414, %v2413
  %v2426 = vpack.c.b16 %v2416, %v2415
  %v2427 = vpack.c.b16 %v2418, %v2417
  %v2428 = vpack.c.b16 %v2420, %v2419
  %v2445 = vunpack.c.l.b16 %v2068
  %v2446 = vunpack.c.l.b16 %v2069
  %v2447 = vunpack.c.l.b16 %v2070
  %v2448 = vunpack.c.l.b16 %v2071
  %v2449 = vunpack.c.l.b16 %v2072
  %v2450 = vunpack.c.l.b16 %v2073
  %v2451 = vunpack.c.l.b16 %v2074
  %v2452 = vunpack.c.l.b16 %v2075
  %v2453 = vunpack.c.l.b16 %v2076
  %v2454 = vunpack.c.l.b16 %v2077
  %v2455 = vunpack.c.l.b16 %v2078
  %v2456 = vunpack.c.l.b16 %v2079
  %v2457 = vunpack.c.l.b16 %v2080
  %v2458 = vunpack.c.l.b16 %v2081
  %v2459 = vunpack.c.l.b16 %v2082
  %v2460 = vunpack.c.l.b16 %v2083
  %v2461 = vpack.c.b16 %v2446, %v2445
  %v2462 = vpack.c.b16 %v2448, %v2447
  %v2463 = vpack.c.b16 %v2450, %v2449
  %v2464 = vpack.c.b16 %v2452, %v2451
  %v2465 = vpack.c.b16 %v2454, %v2453
  %v2466 = vpack.c.b16 %v2456, %v2455
  %v2467 = vpack.c.b16 %v2458, %v2457
  %v2468 = vpack.c.b16 %v2460, %v2459
  %2469 = vrot.lane.b32.xlu0 %v2461, 32
  %v2470 = vpop.permute.xlu0 %2469
  %2471 = vrot.lane.b32.xlu0 %v2462, 32
  %v2472 = vpop.permute.xlu0 %2471
  %2473 = vrot.lane.b32.xlu0 %v2463, 32
  %v2474 = vpop.permute.xlu0 %2473
  %2475 = vrot.lane.b32.xlu0 %v2464, 32
  %v2476 = vpop.permute.xlu0 %2475
  %2477 = vrot.lane.b32.xlu0 %v2465, 32
  %v2478 = vpop.permute.xlu0 %2477
  %2479 = vrot.lane.b32.xlu0 %v2466, 32
  %v2480 = vpop.permute.xlu0 %2479
  %2481 = vrot.lane.b32.xlu0 %v2467, 32
  %v2482 = vpop.permute.xlu0 %2481
  %2483 = vrot.lane.b32.xlu0 %v2468, 32
  %v2484 = vpop.permute.xlu0 %2483
  %v2501 = vunpack.c.l.b16 %v2101
  %v2502 = vunpack.c.l.b16 %v2102
  %v2503 = vunpack.c.l.b16 %v2103
  %v2504 = vunpack.c.l.b16 %v2104
  %v2505 = vunpack.c.l.b16 %v2105
  %v2506 = vunpack.c.l.b16 %v2106
  %v2507 = vunpack.c.l.b16 %v2107
  %v2508 = vunpack.c.l.b16 %v2108
  %v2509 = vunpack.c.l.b16 %v2109
  %v2510 = vunpack.c.l.b16 %v2110
  %v2511 = vunpack.c.l.b16 %v2111
  %v2512 = vunpack.c.l.b16 %v2112
  %v2513 = vunpack.c.l.b16 %v2113
  %v2514 = vunpack.c.l.b16 %v2114
  %v2515 = vunpack.c.l.b16 %v2115
  %v2516 = vunpack.c.l.b16 %v2116
  %v2517 = vpack.c.b16 %v2502, %v2501
  %v2518 = vpack.c.b16 %v2504, %v2503
  %v2519 = vpack.c.b16 %v2506, %v2505
  %v2520 = vpack.c.b16 %v2508, %v2507
  %v2521 = vpack.c.b16 %v2510, %v2509
  %v2522 = vpack.c.b16 %v2512, %v2511
  %v2523 = vpack.c.b16 %v2514, %v2513
  %v2524 = vpack.c.b16 %v2516, %v2515
  %2525 = vrot.lane.b32.xlu0 %v2517, 64
  %v2526 = vpop.permute.xlu0 %2525
  %2527 = vrot.lane.b32.xlu0 %v2518, 64
  %v2528 = vpop.permute.xlu0 %2527
  %2529 = vrot.lane.b32.xlu0 %v2519, 64
  %v2530 = vpop.permute.xlu0 %2529
  %2531 = vrot.lane.b32.xlu0 %v2520, 64
  %v2532 = vpop.permute.xlu0 %2531
  %2533 = vrot.lane.b32.xlu0 %v2521, 64
  %v2534 = vpop.permute.xlu0 %2533
  %2535 = vrot.lane.b32.xlu0 %v2522, 64
  %v2536 = vpop.permute.xlu0 %2535
  %2537 = vrot.lane.b32.xlu0 %v2523, 64
  %v2538 = vpop.permute.xlu0 %2537
  %2539 = vrot.lane.b32.xlu0 %v2524, 64
  %v2540 = vpop.permute.xlu0 %2539
  %v2557 = vunpack.c.l.b16 %v2133
  %v2558 = vunpack.c.l.b16 %v2134
  %v2559 = vunpack.c.l.b16 %v2135
  %v2560 = vunpack.c.l.b16 %v2136
  %v2561 = vunpack.c.l.b16 %v2137
  %v2562 = vunpack.c.l.b16 %v2138
  %v2563 = vunpack.c.l.b16 %v2139
  %v2564 = vunpack.c.l.b16 %v2140
  %v2565 = vunpack.c.l.b16 %v2141
  %v2566 = vunpack.c.l.b16 %v2142
  %v2567 = vunpack.c.l.b16 %v2143
  %v2568 = vunpack.c.l.b16 %v2144
  %v2569 = vunpack.c.l.b16 %v2145
  %v2570 = vunpack.c.l.b16 %v2146
  %v2571 = vunpack.c.l.b16 %v2147
  %v2572 = vunpack.c.l.b16 %v2148
  %v2573 = vpack.c.b16 %v2558, %v2557
  %v2574 = vpack.c.b16 %v2560, %v2559
  %v2575 = vpack.c.b16 %v2562, %v2561
  %v2576 = vpack.c.b16 %v2564, %v2563
  %v2577 = vpack.c.b16 %v2566, %v2565
  %v2578 = vpack.c.b16 %v2568, %v2567
  %v2579 = vpack.c.b16 %v2570, %v2569
  %v2580 = vpack.c.b16 %v2572, %v2571
  %2581 = vrot.lane.b32.xlu0 %v2573, 96
  %v2582 = vpop.permute.xlu0 %2581
  %2583 = vrot.lane.b32.xlu0 %v2574, 96
  %v2584 = vpop.permute.xlu0 %2583
  %2585 = vrot.lane.b32.xlu0 %v2575, 96
  %v2586 = vpop.permute.xlu0 %2585
  %2587 = vrot.lane.b32.xlu0 %v2576, 96
  %v2588 = vpop.permute.xlu0 %2587
  %2589 = vrot.lane.b32.xlu0 %v2577, 96
  %v2590 = vpop.permute.xlu0 %2589
  %2591 = vrot.lane.b32.xlu0 %v2578, 96
  %v2592 = vpop.permute.xlu0 %2591
  %2593 = vrot.lane.b32.xlu0 %v2579, 96
  %v2594 = vpop.permute.xlu0 %2593
  %2595 = vrot.lane.b32.xlu0 %v2580, 96
  %v2596 = vpop.permute.xlu0 %2595
  %v2613 = vunpack.c.l.b16 %v2165
  %v2614 = vunpack.c.l.b16 %v2166
  %v2615 = vunpack.c.l.b16 %v2167
  %v2616 = vunpack.c.l.b16 %v2168
  %v2617 = vunpack.c.l.b16 %v2169
  %v2618 = vunpack.c.l.b16 %v2170
  %v2619 = vunpack.c.l.b16 %v2171
  %v2620 = vunpack.c.l.b16 %v2172
  %v2621 = vunpack.c.l.b16 %v2173
  %v2622 = vunpack.c.l.b16 %v2174
  %v2623 = vunpack.c.l.b16 %v2175
  %v2624 = vunpack.c.l.b16 %v2176
  %v2625 = vunpack.c.l.b16 %v2177
  %v2626 = vunpack.c.l.b16 %v2178
  %v2627 = vunpack.c.l.b16 %v2179
  %v2628 = vunpack.c.l.b16 %v2180
  %v2629 = vpack.c.b16 %v2614, %v2613
  %v2630 = vpack.c.b16 %v2616, %v2615
  %v2631 = vpack.c.b16 %v2618, %v2617
  %v2632 = vpack.c.b16 %v2620, %v2619
  %v2633 = vpack.c.b16 %v2622, %v2621
  %v2634 = vpack.c.b16 %v2624, %v2623
  %v2635 = vpack.c.b16 %v2626, %v2625
  %v2636 = vpack.c.b16 %v2628, %v2627
  %v2639 = vsel %vm1313, %v2213, %v2262
  %v2642 = vsel %vm1313, %v2214, %v2264
  %v2645 = vsel %vm1313, %v2215, %v2266
  %v2648 = vsel %vm1313, %v2216, %v2268
  %v2651 = vsel %vm1313, %v2217, %v2270
  %v2654 = vsel %vm1313, %v2218, %v2272
  %v2657 = vsel %vm1313, %v2219, %v2274
  %v2660 = vsel %vm1313, %v2220, %v2276
  %v2662 = vsel %vm1347, %v2639, %v2318
  %v2664 = vsel %vm1347, %v2642, %v2320
  %v2666 = vsel %vm1347, %v2645, %v2322
  %v2668 = vsel %vm1347, %v2648, %v2324
  %v2670 = vsel %vm1347, %v2651, %v2326
  %v2672 = vsel %vm1347, %v2654, %v2328
  %v2674 = vsel %vm1347, %v2657, %v2330
  %v2676 = vsel %vm1347, %v2660, %v2332
  %v2678 = vsel %vm1381, %v2662, %v2374
  %v2681 = vsel %vm1381, %v2664, %v2376
  %v2684 = vsel %vm1381, %v2666, %v2378
  %v2687 = vsel %vm1381, %v2668, %v2380
  %v2690 = vsel %vm1381, %v2670, %v2382
  %v2693 = vsel %vm1381, %v2672, %v2384
  %v2696 = vsel %vm1381, %v2674, %v2386
  %v2699 = vsel %vm1381, %v2676, %v2388
  %v2703 = vsel %vm1313, %v2421, %v2470
  %v2706 = vsel %vm1313, %v2422, %v2472
  %v2709 = vsel %vm1313, %v2423, %v2474
  %v2712 = vsel %vm1313, %v2424, %v2476
  %v2715 = vsel %vm1313, %v2425, %v2478
  %v2718 = vsel %vm1313, %v2426, %v2480
  %v2721 = vsel %vm1313, %v2427, %v2482
  %v2724 = vsel %vm1313, %v2428, %v2484
  %v2726 = vsel %vm1347, %v2703, %v2526
  %v2728 = vsel %vm1347, %v2706, %v2528
  %v2730 = vsel %vm1347, %v2709, %v2530
  %v2732 = vsel %vm1347, %v2712, %v2532
  %v2734 = vsel %vm1347, %v2715, %v2534
  %v2736 = vsel %vm1347, %v2718, %v2536
  %v2738 = vsel %vm1347, %v2721, %v2538
  %v2740 = vsel %vm1347, %v2724, %v2540
  %v2742 = vsel %vm1381, %v2726, %v2582
  %v2745 = vsel %vm1381, %v2728, %v2584
  %v2748 = vsel %vm1381, %v2730, %v2586
  %v2751 = vsel %vm1381, %v2732, %v2588
  %v2754 = vsel %vm1381, %v2734, %v2590
  %v2757 = vsel %vm1381, %v2736, %v2592
  %v2760 = vsel %vm1381, %v2738, %v2594
  %v2763 = vsel %vm1381, %v2740, %v2596
  %v2765 = vld [vmem:[%s5] sm:$0xf]
  %v2766 = vld [vmem:[%s5 + $0x4] sm:$0xf]
  %v2767 = vld [vmem:[%s5 + $0x8] sm:$0xf]
  %v2768 = vld [vmem:[%s5 + $0xc] sm:$0xf]
  %v2769 = vld [vmem:[%s5 + $0x10] sm:$0xf]
  %v2770 = vld [vmem:[%s5 + $0x14] sm:$0xf]
  %v2771 = vld [vmem:[%s5 + $0x18] sm:$0xf]
  %v2772 = vld [vmem:[%s5 + $0x1c] sm:$0xf]
  %v2773 = vld [vmem:[%s5 + $0x20] sm:$0xf]
  %v2774 = vld [vmem:[%s5 + $0x24] sm:$0xf]
  %v2775 = vld [vmem:[%s5 + $0x28] sm:$0xf]
  %v2776 = vld [vmem:[%s5 + $0x2c] sm:$0xf]
  %v2777 = vld [vmem:[%s5 + $0x30] sm:$0xf]
  %v2778 = vld [vmem:[%s5 + $0x34] sm:$0xf]
  %v2779 = vld [vmem:[%s5 + $0x38] sm:$0xf]
  %v2780 = vld [vmem:[%s5 + $0x3c] sm:$0xf]
  %v2781 = vld [vmem:[%s5 + $0x40] sm:$0xf]
  %v2782 = vld [vmem:[%s5 + $0x44] sm:$0xf]
  %v2783 = vld [vmem:[%s5 + $0x48] sm:$0xf]
  %v2784 = vld [vmem:[%s5 + $0x4c] sm:$0xf]
  %v2785 = vld [vmem:[%s5 + $0x50] sm:$0xf]
  %v2786 = vld [vmem:[%s5 + $0x54] sm:$0xf]
  %v2787 = vld [vmem:[%s5 + $0x58] sm:$0xf]
  %v2788 = vld [vmem:[%s5 + $0x5c] sm:$0xf]
  %v2789 = vld [vmem:[%s5 + $0x60] sm:$0xf]
  %v2790 = vld [vmem:[%s5 + $0x64] sm:$0xf]
  %v2791 = vld [vmem:[%s5 + $0x68] sm:$0xf]
  %v2792 = vld [vmem:[%s5 + $0x6c] sm:$0xf]
  %v2793 = vld [vmem:[%s5 + $0x70] sm:$0xf]
  %v2794 = vld [vmem:[%s5 + $0x74] sm:$0xf]
  %v2795 = vld [vmem:[%s5 + $0x78] sm:$0xf]
  %v2796 = vld [vmem:[%s5 + $0x7c] sm:$0xf]
  %v2797 = vld [vmem:[%s5 + $0x80] sm:$0xf]
  %v2798 = vld [vmem:[%s5 + $0x84] sm:$0xf]
  %v2799 = vld [vmem:[%s5 + $0x88] sm:$0xf]
  %v2800 = vld [vmem:[%s5 + $0x8c] sm:$0xf]
  %v2837 = vunpack.c.l.b16 %v2765
  %v2838 = vunpack.c.l.b16 %v2766
  %v2839 = vunpack.c.l.b16 %v2767
  %v2840 = vunpack.c.l.b16 %v2768
  %v2841 = vunpack.c.l.b16 %v2769
  %v2842 = vunpack.c.l.b16 %v2770
  %v2843 = vunpack.c.l.b16 %v2771
  %v2844 = vunpack.c.l.b16 %v2772
  %v2845 = vunpack.c.l.b16 %v2773
  %v2846 = vunpack.c.l.b16 %v2774
  %v2847 = vunpack.c.l.b16 %v2775
  %v2848 = vunpack.c.l.b16 %v2776
  %v2849 = vunpack.c.l.b16 %v2777
  %v2850 = vunpack.c.l.b16 %v2778
  %v2851 = vunpack.c.l.b16 %v2779
  %v2852 = vunpack.c.l.b16 %v2780
  %v2853 = vunpack.c.l.b16 %v2781
  %v2854 = vunpack.c.l.b16 %v2782
  %v2855 = vunpack.c.l.b16 %v2783
  %v2856 = vunpack.c.l.b16 %v2784
  %v2857 = vunpack.c.l.b16 %v2785
  %v2858 = vunpack.c.l.b16 %v2786
  %v2859 = vunpack.c.l.b16 %v2787
  %v2860 = vunpack.c.l.b16 %v2788
  %v2861 = vunpack.c.l.b16 %v2789
  %v2862 = vunpack.c.l.b16 %v2790
  %v2863 = vunpack.c.l.b16 %v2791
  %v2864 = vunpack.c.l.b16 %v2792
  %v2865 = vunpack.c.l.b16 %v2793
  %v2866 = vunpack.c.l.b16 %v2794
  %v2867 = vunpack.c.l.b16 %v2795
  %v2868 = vunpack.c.l.b16 %v2796
  %v2869 = vunpack.c.l.b16 %v2797
  %v2870 = vunpack.c.l.b16 %v2798
  %v2871 = vunpack.c.l.b16 %v2799
  %v2872 = vunpack.c.l.b16 %v2800
  %v2873 = vpack.c.b16 %v2838, %v2837
  %v2874 = vpack.c.b16 %v2840, %v2839
  %v2875 = vpack.c.b16 %v2842, %v2841
  %v2876 = vpack.c.b16 %v2844, %v2843
  %v2877 = vpack.c.b16 %v2846, %v2845
  %v2878 = vpack.c.b16 %v2848, %v2847
  %v2879 = vpack.c.b16 %v2850, %v2849
  %v2880 = vpack.c.b16 %v2852, %v2851
  %v2881 = vpack.c.b16 %v2854, %v2853
  %v2882 = vpack.c.b16 %v2856, %v2855
  %v2883 = vpack.c.b16 %v2858, %v2857
  %v2884 = vpack.c.b16 %v2860, %v2859
  %v2885 = vpack.c.b16 %v2862, %v2861
  %v2886 = vpack.c.b16 %v2864, %v2863
  %v2887 = vpack.c.b16 %v2866, %v2865
  %v2888 = vpack.c.b16 %v2868, %v2867
  %v2889 = vpack.c.b16 %v2870, %v2869
  %v2890 = vpack.c.b16 %v2872, %v2871
  %v2910 = vsel %vm1313, %v2629, 0
  %v2913 = vsel %vm1313, %v2630, 0
  %v2916 = vsel %vm1313, %v2631, 0
  %v2919 = vsel %vm1313, %v2632, 0
  %v2922 = vsel %vm1313, %v2633, 0
  %v2925 = vsel %vm1313, %v2634, 0
  %v2928 = vsel %vm1313, %v2635, 0
  %v2931 = vsel %vm1313, %v2636, 0
  %2933 = vmatpush.bf16.msra.mxu0 %v2880
  %2934 = vmatpush.bf16.msra.mxu0 %v2879
  %2935 = vmatpush.bf16.msra.mxu0 %v2878
  %2936 = vmatpush.bf16.msra.mxu0 %v2877
  %2937 = vmatpush.bf16.msra.mxu0 %v2876
  %2938 = vmatpush.bf16.msra.mxu0 %v2875
  %2939 = vmatpush.bf16.msra.mxu0 %v2874
  %2940 = vmatpush.bf16.msra.mxu0 %v2873
  %2941 = vmatmul.bf16.gmra.mxu0 %v2678
  %v2942 = vpop.f32.mrf.mxu0
  %v2943 = vadd.f32 0.0, %v2942
  %v2944 = vpop.f32.mrf.mxu0
  %v2945 = vadd.f32 0.0, %v2944
  %2946 = vmatmul.bf16.gmra.mxu0 %v2681
  %v2947 = vpop.f32.mrf.mxu0
  %v2948 = vadd.f32 0.0, %v2947
  %v2949 = vpop.f32.mrf.mxu0
  %v2950 = vadd.f32 0.0, %v2949
  %2951 = vmatmul.bf16.gmra.mxu0 %v2684
  %v2952 = vpop.f32.mrf.mxu0
  %v2953 = vadd.f32 0.0, %v2952
  %v2954 = vpop.f32.mrf.mxu0
  %v2955 = vadd.f32 0.0, %v2954
  %2956 = vmatmul.bf16.gmra.mxu0 %v2687
  %v2957 = vpop.f32.mrf.mxu0
  %v2958 = vadd.f32 0.0, %v2957
  %v2959 = vpop.f32.mrf.mxu0
  %v2960 = vadd.f32 0.0, %v2959
  %2961 = vmatmul.bf16.gmra.mxu0 %v2690
  %v2962 = vpop.f32.mrf.mxu0
  %v2963 = vadd.f32 0.0, %v2962
  %v2964 = vpop.f32.mrf.mxu0
  %v2965 = vadd.f32 0.0, %v2964
  %2966 = vmatmul.bf16.gmra.mxu0 %v2693
  %v2967 = vpop.f32.mrf.mxu0
  %v2968 = vadd.f32 0.0, %v2967
  %v2969 = vpop.f32.mrf.mxu0
  %v2970 = vadd.f32 0.0, %v2969
  %2971 = vmatmul.bf16.gmra.mxu0 %v2696
  %v2972 = vpop.f32.mrf.mxu0
  %v2973 = vadd.f32 0.0, %v2972
  %v2974 = vpop.f32.mrf.mxu0
  %v2975 = vadd.f32 0.0, %v2974
  %2976 = vmatmul.bf16.gmra.mxu0 %v2699
  %v2977 = vpop.f32.mrf.mxu0
  %v2978 = vadd.f32 0.0, %v2977
  %v2979 = vpop.f32.mrf.mxu0
  %v2980 = vadd.f32 0.0, %v2979
  %2981 = vdwg.mxu0
  %2982 = vmatpush.bf16.msra.mxu0 %v2888
  %2983 = vmatpush.bf16.msra.mxu0 %v2887
  %2984 = vmatpush.bf16.msra.mxu0 %v2886
  %2985 = vmatpush.bf16.msra.mxu0 %v2885
  %2986 = vmatpush.bf16.msra.mxu0 %v2884
  %2987 = vmatpush.bf16.msra.mxu0 %v2883
  %2988 = vmatpush.bf16.msra.mxu0 %v2882
  %2989 = vmatpush.bf16.msra.mxu0 %v2881
  %2990 = vmatmul.bf16.gmra.mxu0 %v2742
  %v2991 = vpop.f32.mrf.mxu0
  %v2992 = vadd.f32 %v2943, %v2991
  %v2993 = vpop.f32.mrf.mxu0
  %v2994 = vadd.f32 %v2945, %v2993
  %2995 = vmatmul.bf16.gmra.mxu0 %v2745
  %v2996 = vpop.f32.mrf.mxu0
  %v2997 = vadd.f32 %v2948, %v2996
  %v2998 = vpop.f32.mrf.mxu0
  %v2999 = vadd.f32 %v2950, %v2998
  %3000 = vmatmul.bf16.gmra.mxu0 %v2748
  %v3001 = vpop.f32.mrf.mxu0
  %v3002 = vadd.f32 %v2953, %v3001
  %v3003 = vpop.f32.mrf.mxu0
  %v3004 = vadd.f32 %v2955, %v3003
  %3005 = vmatmul.bf16.gmra.mxu0 %v2751
  %v3006 = vpop.f32.mrf.mxu0
  %v3007 = vadd.f32 %v2958, %v3006
  %v3008 = vpop.f32.mrf.mxu0
  %v3009 = vadd.f32 %v2960, %v3008
  %3010 = vmatmul.bf16.gmra.mxu0 %v2754
  %v3011 = vpop.f32.mrf.mxu0
  %v3012 = vadd.f32 %v2963, %v3011
  %v3013 = vpop.f32.mrf.mxu0
  %v3014 = vadd.f32 %v2965, %v3013
  %3015 = vmatmul.bf16.gmra.mxu0 %v2757
  %v3016 = vpop.f32.mrf.mxu0
  %v3017 = vadd.f32 %v2968, %v3016
  %v3018 = vpop.f32.mrf.mxu0
  %v3019 = vadd.f32 %v2970, %v3018
  %3020 = vmatmul.bf16.gmra.mxu0 %v2760
  %v3021 = vpop.f32.mrf.mxu0
  %v3022 = vadd.f32 %v2973, %v3021
  %v3023 = vpop.f32.mrf.mxu0
  %v3024 = vadd.f32 %v2975, %v3023
  %3025 = vmatmul.bf16.gmra.mxu0 %v2763
  %v3026 = vpop.f32.mrf.mxu0
  %v3027 = vadd.f32 %v2978, %v3026
  %v3028 = vpop.f32.mrf.mxu0
  %v3029 = vadd.f32 %v2980, %v3028
  %3030 = vdwg.mxu0
  %3031 = vmatpush.bf16.msra.mxu0 0
  %3032 = vmatpush.bf16.msra.mxu0 0
  %3033 = vmatpush.bf16.msra.mxu0 0
  %3034 = vmatpush.bf16.msra.mxu0 0
  %3035 = vmatpush.bf16.msra.mxu0 0
  %3036 = vmatpush.bf16.msra.mxu0 0
  %3037 = vmatpush.bf16.msra.mxu0 %v2890
  %3038 = vmatpush.bf16.msra.mxu0 %v2889
  %3039 = vmatmul.bf16.gmra.mxu0 %v2910
  %v3040 = vpop.f32.mrf.mxu0
  %v3041 = vadd.f32 %v2992, %v3040
  %v3042 = vpop.f32.mrf.mxu0
  %v3043 = vadd.f32 %v2994, %v3042
  %3044 = vmatmul.bf16.gmra.mxu0 %v2913
  %v3045 = vpop.f32.mrf.mxu0
  %v3046 = vadd.f32 %v2997, %v3045
  %v3047 = vpop.f32.mrf.mxu0
  %v3048 = vadd.f32 %v2999, %v3047
  %3049 = vmatmul.bf16.gmra.mxu0 %v2916
  %v3050 = vpop.f32.mrf.mxu0
  %v3051 = vadd.f32 %v3002, %v3050
  %v3052 = vpop.f32.mrf.mxu0
  %v3053 = vadd.f32 %v3004, %v3052
  %3054 = vmatmul.bf16.gmra.mxu0 %v2919
  %v3055 = vpop.f32.mrf.mxu0
  %v3056 = vadd.f32 %v3007, %v3055
  %v3057 = vpop.f32.mrf.mxu0
  %v3058 = vadd.f32 %v3009, %v3057
  %3059 = vmatmul.bf16.gmra.mxu0 %v2922
  %v3060 = vpop.f32.mrf.mxu0
  %v3061 = vadd.f32 %v3012, %v3060
  %v3062 = vpop.f32.mrf.mxu0
  %v3063 = vadd.f32 %v3014, %v3062
  %3064 = vmatmul.bf16.gmra.mxu0 %v2925
  %v3065 = vpop.f32.mrf.mxu0
  %v3066 = vadd.f32 %v3017, %v3065
  %v3067 = vpop.f32.mrf.mxu0
  %v3068 = vadd.f32 %v3019, %v3067
  %3069 = vmatmul.bf16.gmra.mxu0 %v2928
  %v3070 = vpop.f32.mrf.mxu0
  %v3071 = vadd.f32 %v3022, %v3070
  %v3072 = vpop.f32.mrf.mxu0
  %v3073 = vadd.f32 %v3024, %v3072
  %3074 = vmatmul.bf16.gmra.mxu0 %v2931
  %v3075 = vpop.f32.mrf.mxu0
  %v3076 = vadd.f32 %v3027, %v3075
  %v3077 = vpop.f32.mrf.mxu0
  %v3078 = vadd.f32 %v3029, %v3077
  %3079 = vdwg.mxu0
  %v3080 = vsel %vm467, %v3041, 0.0
  %v3081 = vsel %vm467, %v3043, 0.0
  %v3082 = vadd.f32 %v3080, %v3081
  %v3083 = vsel %vm467, %v3046, 0.0
  %v3084 = vadd.f32 %v3082, %v3083
  %v3085 = vsel %vm467, %v3048, 0.0
  %v3086 = vadd.f32 %v3084, %v3085
  %v3087 = vsel %vm467, %v3051, 0.0
  %v3088 = vadd.f32 %v3086, %v3087
  %v3089 = vsel %vm467, %v3053, 0.0
  %v3090 = vadd.f32 %v3088, %v3089
  %v3091 = vsel %vm467, %v3056, 0.0
  %v3092 = vadd.f32 %v3090, %v3091
  %v3093 = vsel %vm467, %v3058, 0.0
  %v3094 = vadd.f32 %v3092, %v3093
  %v3095 = vsel %vm467, %v3061, 0.0
  %v3096 = vadd.f32 %v3094, %v3095
  %v3097 = vsel %vm467, %v3063, 0.0
  %v3098 = vadd.f32 %v3096, %v3097
  %v3099 = vsel %vm467, %v3066, 0.0
  %v3100 = vadd.f32 %v3098, %v3099
  %v3101 = vsel %vm467, %v3068, 0.0
  %v3102 = vadd.f32 %v3100, %v3101
  %v3103 = vsel %vm467, %v3071, 0.0
  %v3104 = vadd.f32 %v3102, %v3103
  %v3105 = vsel %vm467, %v3073, 0.0
  %v3106 = vadd.f32 %v3104, %v3105
  %v3107 = vsel %vm467, %v3076, 0.0
  %v3108 = vadd.f32 %v3106, %v3107
  %v3109 = vsel %vm467, %v3078, 0.0
  %v3110 = vadd.f32 %v3108, %v3109
  %v3111 = vrot.slane %v3110, 4
  %v3112 = vadd.f32 %v3110, %v3111
  %v3113 = vrot.slane %v3112, 2
  %v3114 = vadd.f32 %v3112, %v3113
  %v3115 = vrot.slane %v3114, 1
  %v3116 = vadd.f32 %v3114, %v3115
  %v3117 = vmul.f32 %v3041, %v3041
  %v3118 = vmul.f32 %v3043, %v3043
  %v3119 = vmul.f32 %v3046, %v3046
  %v3120 = vmul.f32 %v3048, %v3048
  %v3121 = vmul.f32 %v3051, %v3051
  %v3122 = vmul.f32 %v3053, %v3053
  %v3123 = vmul.f32 %v3056, %v3056
  %v3124 = vmul.f32 %v3058, %v3058
  %v3125 = vmul.f32 %v3061, %v3061
  %v3126 = vmul.f32 %v3063, %v3063
  %v3127 = vmul.f32 %v3066, %v3066
  %v3128 = vmul.f32 %v3068, %v3068
  %v3129 = vmul.f32 %v3071, %v3071
  %v3130 = vmul.f32 %v3073, %v3073
  %v3131 = vmul.f32 %v3076, %v3076
  %v3132 = vmul.f32 %v3078, %v3078
  %v3133 = vsel %vm467, %v3117, 0.0
  %v3134 = vsel %vm467, %v3118, 0.0
  %v3135 = vadd.f32 %v3133, %v3134
  %v3136 = vsel %vm467, %v3119, 0.0
  %v3137 = vadd.f32 %v3135, %v3136
  %v3138 = vsel %vm467, %v3120, 0.0
  %v3139 = vadd.f32 %v3137, %v3138
  %v3140 = vsel %vm467, %v3121, 0.0
  %v3141 = vadd.f32 %v3139, %v3140
  %v3142 = vsel %vm467, %v3122, 0.0
  %v3143 = vadd.f32 %v3141, %v3142
  %v3144 = vsel %vm467, %v3123, 0.0
  %v3145 = vadd.f32 %v3143, %v3144
  %v3146 = vsel %vm467, %v3124, 0.0
  %v3147 = vadd.f32 %v3145, %v3146
  %v3148 = vsel %vm467, %v3125, 0.0
  %v3149 = vadd.f32 %v3147, %v3148
  %v3150 = vsel %vm467, %v3126, 0.0
  %v3151 = vadd.f32 %v3149, %v3150
  %v3152 = vsel %vm467, %v3127, 0.0
  %v3153 = vadd.f32 %v3151, %v3152
  %v3154 = vsel %vm467, %v3128, 0.0
  %v3155 = vadd.f32 %v3153, %v3154
  %v3156 = vsel %vm467, %v3129, 0.0
  %v3157 = vadd.f32 %v3155, %v3156
  %v3158 = vsel %vm467, %v3130, 0.0
  %v3159 = vadd.f32 %v3157, %v3158
  %v3160 = vsel %vm467, %v3131, 0.0
  %v3161 = vadd.f32 %v3159, %v3160
  %v3162 = vsel %vm467, %v3132, 0.0
  %v3163 = vadd.f32 %v3161, %v3162
  %v3164 = vrot.slane %v3163, 4
  %v3165 = vadd.f32 %v3163, %v3164
  %v3166 = vrot.slane %v3165, 2
  %v3167 = vadd.f32 %v3165, %v3166
  %v3168 = vrot.slane %v3167, 1
  %v3169 = vadd.f32 %v3167, %v3168
  %3171 = vrot.lane.b32.xlu0 %v3116, 124
  %v3172 = vpop.permute.xlu0 %3171
  %v3174 = vadd.f32 %v3116, %v3172
  %3175 = vrot.lane.b32.xlu0 %v3116, 120
  %v3176 = vpop.permute.xlu0 %3175
  %v3178 = vadd.f32 %v3174, %v3176
  %3179 = vrot.lane.b32.xlu0 %v3116, 116
  %v3180 = vpop.permute.xlu0 %3179
  %v3182 = vadd.f32 %v3178, %v3180
  %v3183 = vmul.f32 %v3182, 0.001953125
  %3185 = vrot.lane.b32.xlu0 %v3169, 124
  %v3186 = vpop.permute.xlu0 %3185
  %v3188 = vadd.f32 %v3169, %v3186
  %3189 = vrot.lane.b32.xlu0 %v3169, 120
  %v3190 = vpop.permute.xlu0 %3189
  %v3192 = vadd.f32 %v3188, %v3190
  %3193 = vrot.lane.b32.xlu0 %v3169, 116
  %v3194 = vpop.permute.xlu0 %3193
  %v3196 = vadd.f32 %v3192, %v3194
  %v3197 = vmul.f32 %v3196, 0.001953125
  %v3198 = vmul.f32 %v3183, %v3183
  %v3199 = vsub.f32 %v3197, %v3198
  %v3200 = vmax.f32 %v3199, 0.0
  %v3201 = vadd.f32 %v3200, 1e-05
  %v3202 = vrsqrt.pop %v3201
  %v3203 = vmul.f32 %v3202, %v3201
  %v3204 = vmul.f32 %v3203, %v3202
  %v3205 = vmul.f32 0.5, %v3204
  %v3206 = vsub.f32 1.5, %v3205
  %v3207 = vmul.f32 %v3202, %v3206
  %vm3208 = vweird.f32 %v3201
  %vm3209 = vweird.f32 %v3202
  %vm3210 = vmor %vm3208, %vm3209
  %v3211 = vsel %vm3210, %v3202, %v3207
  %v3212 = vld [vmem:[%s6] sm:$0x1]
  %v3213 = vmul.f32 %v3211, %v3212
  %v3214 = vld [vmem:[%s7] sm:$0x1]
  %v3215 = vmul.f32 %v3183, %v3213
  %v3216 = vsub.f32 %v3214, %v3215
  %3218 = vrot.lane.b32.xlu0 %v3213, 4
  %v3219 = vpop.permute.xlu0 %3218
  %3221 = vrot.lane.b32.xlu0 %v3213, 8
  %v3222 = vpop.permute.xlu0 %3221
  %3224 = vrot.lane.b32.xlu0 %v3213, 12
  %v3225 = vpop.permute.xlu0 %3224
  %v3227 = vsel %vm416, %v3213, %v3219
  %v3228 = vsel %vm433, %v3227, %v3222
  %v3229 = vsel %vm450, %v3228, %v3225
  %v3231 = vperm.slane %v3216, 0
  %3232 = vrot.lane.b32.xlu0 %v3231, 4
  %v3233 = vpop.permute.xlu0 %3232
  %3235 = vrot.lane.b32.xlu0 %v3231, 8
  %v3236 = vpop.permute.xlu0 %3235
  %3238 = vrot.lane.b32.xlu0 %v3231, 12
  %v3239 = vpop.permute.xlu0 %3238
  %v3241 = vsel %vm416, %v3216, %v3233
  %v3242 = vsel %vm433, %v3241, %v3236
  %v3243 = vsel %vm450, %v3242, %v3239
  %v3244 = vperm.slane %v3229, 0
  %v3245 = vmul.f32 %v3041, %v3244
  %v3246 = vmul.f32 %v3043, %v3244
  %v3247 = vmul.f32 %v3046, %v3244
  %v3248 = vmul.f32 %v3048, %v3244
  %v3249 = vmul.f32 %v3051, %v3244
  %v3250 = vmul.f32 %v3053, %v3244
  %v3251 = vmul.f32 %v3056, %v3244
  %v3252 = vmul.f32 %v3058, %v3244
  %v3253 = vmul.f32 %v3061, %v3244
  %v3254 = vmul.f32 %v3063, %v3244
  %v3255 = vmul.f32 %v3066, %v3244
  %v3256 = vmul.f32 %v3068, %v3244
  %v3257 = vmul.f32 %v3071, %v3244
  %v3258 = vmul.f32 %v3073, %v3244
  %v3259 = vmul.f32 %v3076, %v3244
  %v3260 = vmul.f32 %v3078, %v3244
  %v3261 = vperm.slane %v3243, 0
  %v3262 = vadd.f32 %v3245, %v3261
  %v3263 = vadd.f32 %v3246, %v3261
  %v3264 = vadd.f32 %v3247, %v3261
  %v3265 = vadd.f32 %v3248, %v3261
  %v3266 = vadd.f32 %v3249, %v3261
  %v3267 = vadd.f32 %v3250, %v3261
  %v3268 = vadd.f32 %v3251, %v3261
  %v3269 = vadd.f32 %v3252, %v3261
  %v3270 = vadd.f32 %v3253, %v3261
  %v3271 = vadd.f32 %v3254, %v3261
  %v3272 = vadd.f32 %v3255, %v3261
  %v3273 = vadd.f32 %v3256, %v3261
  %v3274 = vadd.f32 %v3257, %v3261
  %v3275 = vadd.f32 %v3258, %v3261
  %v3276 = vadd.f32 %v3259, %v3261
  %v3277 = vadd.f32 %v3260, %v3261
  %v3278 = vmax.f32 %v3262, 0.0
  %v3279 = vmax.f32 %v3263, 0.0
  %v3280 = vmax.f32 %v3264, 0.0
  %v3281 = vmax.f32 %v3265, 0.0
  %v3282 = vmax.f32 %v3266, 0.0
  %v3283 = vmax.f32 %v3267, 0.0
  %v3284 = vmax.f32 %v3268, 0.0
  %v3285 = vmax.f32 %v3269, 0.0
  %v3286 = vmax.f32 %v3270, 0.0
  %v3287 = vmax.f32 %v3271, 0.0
  %v3288 = vmax.f32 %v3272, 0.0
  %v3289 = vmax.f32 %v3273, 0.0
  %v3290 = vmax.f32 %v3274, 0.0
  %v3291 = vmax.f32 %v3275, 0.0
  %v3292 = vmax.f32 %v3276, 0.0
  %v3293 = vmax.f32 %v3277, 0.0
  %3294 = vst.msk [vmem:[%s8] sm:$0xff] %vm467, %v3278
  %3295 = vst.msk [vmem:[%s8 + $0x8] sm:$0xff] %vm467, %v3279
  %3296 = vst.msk [vmem:[%s8 + $0x10] sm:$0xff] %vm467, %v3280
  %3297 = vst.msk [vmem:[%s8 + $0x18] sm:$0xff] %vm467, %v3281
  %3298 = vst.msk [vmem:[%s8 + $0x20] sm:$0xff] %vm467, %v3282
  %3299 = vst.msk [vmem:[%s8 + $0x28] sm:$0xff] %vm467, %v3283
  %3300 = vst.msk [vmem:[%s8 + $0x30] sm:$0xff] %vm467, %v3284
  %3301 = vst.msk [vmem:[%s8 + $0x38] sm:$0xff] %vm467, %v3285
  %3302 = vst.msk [vmem:[%s8 + $0x40] sm:$0xff] %vm467, %v3286
  %3303 = vst.msk [vmem:[%s8 + $0x48] sm:$0xff] %vm467, %v3287
  %3304 = vst.msk [vmem:[%s8 + $0x50] sm:$0xff] %vm467, %v3288
  %3305 = vst.msk [vmem:[%s8 + $0x58] sm:$0xff] %vm467, %v3289
  %3306 = vst.msk [vmem:[%s8 + $0x60] sm:$0xff] %vm467, %v3290
  %3307 = vst.msk [vmem:[%s8 + $0x68] sm:$0xff] %vm467, %v3291
  %3308 = vst.msk [vmem:[%s8 + $0x70] sm:$0xff] %vm467, %v3292
  %3309 = vst.msk [vmem:[%s8 + $0x78] sm:$0xff] %vm467, %v3293
  // Predicated region
  $region34: #{tpu_custom_call.1} parent=0 // pred_check
    _
  $region35: #{tpu_custom_call.1} parent=0 // pred_check_branch
    %3311 = sbr.rel (0) target = $region37
  $region36: #{tpu_custom_call.1} parent=0 // pred_region
    _
  $region37: #{tpu_custom_call.1} parent=0 // pred_fallthru
    _
  // Predicated region
  $region38: #{tpu_custom_call.1} parent=0 // pred_check
    _
  $region39: #{tpu_custom_call.1} parent=0 // pred_check_branch
    %3313 = sbr.rel (0) target = $region41
  $region40: #{tpu_custom_call.1} parent=0 // pred_region
    _
  $region41: #{tpu_custom_call.1} parent=0 // pred_fallthru
    _

</llo_original>
